<compile_context>
chip_gen: v7x
topology: tpu7x:2x2x1
jax: 0.10.0
libtpu: 0.0.40
codegen_flags: <defaults>
</compile_context>

<pallas_src>
import functools
import math

import jax
import jax.numpy as jnp
from jax.experimental import pallas as pl
from jax.experimental.pallas import tpu as pltpu


VMEM_LIMIT_BYTES = 48 * 1024 * 1024  # fits v5e/v6e (128 MiB) and v7x (64 MiB) physical VMEM


# ----------------------------------------------------------------------------
# helpers
# ----------------------------------------------------------------------------
def _round_up(x, m):
    return (x + m - 1) // m * m


_SQRT_2_OVER_PI = 0.7978845608028654


def _gelu_tanh(y):
    # tanh-approximate GELU: the transcendental goes to the EUP slot instead of
    # a long erf VALU polynomial (which binds on v6e/v7x).  ~1e-3 abs deviation
    # from torch's exact erf GELU.
    return 0.5 * y * (1.0 + jnp.tanh(_SQRT_2_OVER_PI * (y + 0.044715 * y * y * y)))


# ----------------------------------------------------------------------------
# One-time probe: does this JAX accept pipeline_mode=pl.Buffered(1)?
# (Run eagerly, outside jit, so fused_linear can single-buffer invariant
#  operands; falls back to the default double-buffering if unsupported.)
# ----------------------------------------------------------------------------
_BUFFERED_SUPPORTED = None


def _probe_kernel(x_ref, o_ref):
    o_ref[...] = x_ref[...]


def _buffered_supported():
    global _BUFFERED_SUPPORTED
    if _BUFFERED_SUPPORTED is None:
        try:
            out = pl.pallas_call(
                _probe_kernel,
                out_shape=jax.ShapeDtypeStruct((16, 128), jnp.float32),
                grid=(2,),
                in_specs=[pl.BlockSpec((8, 128), lambda i: (0, 0),
                                       pipeline_mode=pl.Buffered(1))],
                out_specs=pl.BlockSpec((8, 128), lambda i: (i, 0)),
            )(jnp.zeros((8, 128), jnp.float32))
            jax.block_until_ready(out)
            _BUFFERED_SUPPORTED = True
        except Exception:
            _BUFFERED_SUPPORTED = False
    return _BUFFERED_SUPPORTED


def _invariant_spec(block_shape, index_map):
    """BlockSpec for a grid-invariant operand: single-buffered when supported."""
    if _buffered_supported():
        return pl.BlockSpec(block_shape, index_map, pipeline_mode=pl.Buffered(1))
    return pl.BlockSpec(block_shape, index_map)


def _pick_tm(M, tm):
    """Row-tile size: exact divisor of M (no pad), >=2 steps when possible so
    both v7x TensorCores get work."""
    if M <= tm:
        if M >= 16 and M % 16 == 0:
            return M // 2
        return M
    t = tm - (tm % 8)
    while t >= 8:
        if M % t == 0:
            return t
        t -= 8
    return tm  # rare fallback -> wrapper pads


# ----------------------------------------------------------------------------
# Fused [LayerNorm ->] [pre-activation ->] matmul -> bias [-> activation]
# [-> residual add] kernel, tiled over rows.
# ----------------------------------------------------------------------------
def _fused_linear_kernel(*refs, has_ln, ln_eps, ln_activation, activation,
                         has_residual):
    idx = 0
    x_ref = refs[idx]; idx += 1
    if has_ln:
        g_ref = refs[idx]; idx += 1
        bln_ref = refs[idx]; idx += 1
    w_ref = refs[idx]; idx += 1
    b_ref = refs[idx]; idx += 1
    if has_residual:
        r_ref = refs[idx]; idx += 1
    o_ref = refs[idx]

    x = x_ref[...]
    if has_ln:
        xf = x.astype(jnp.float32)
        mean = jnp.mean(xf, axis=-1, keepdims=True)
        xc = xf - mean
        var = jnp.mean(xc * xc, axis=-1, keepdims=True)
        xf = xc * jax.lax.rsqrt(var + ln_eps)
        xf = xf * g_ref[...].astype(jnp.float32) + bln_ref[...].astype(jnp.float32)
        if ln_activation == "gelu":
            xf = _gelu_tanh(xf)
        xm = xf.astype(jnp.bfloat16)
    else:
        xm = x.astype(jnp.bfloat16)

    # bf16 MXU inputs, f32 accumulation.
    y = jnp.dot(xm, w_ref[...], preferred_element_type=jnp.float32)
    y = y + b_ref[...].astype(jnp.float32)
    if activation == "gelu":
        y = _gelu_tanh(y)
    elif activation == "tanh":
        y = jnp.tanh(y)
    if has_residual:
        y = y + r_ref[...].astype(jnp.float32)
    o_ref[...] = y.astype(o_ref.dtype)


def fused_linear(x, w, b, *, ln=None, ln_activation=None, activation=None,
                 residual=None, out_dtype=jnp.float32, tm=256):
    """out = act( (LN(x) optionally pre-activated) @ w + b ) [+ residual].

    x: (..., K); w: (K, N) (expected pre-cast to bf16); b: (N,);
    ln: optional (gamma, beta, eps); residual: optional (..., N).
    Row-tiled parallel grid; weight/bias/LN params single-buffered.
    """
    orig = x.shape
    K = orig[-1]
    M = math.prod(orig[:-1])
    N = w.shape[1]

    x2 = x.reshape(M, K)
    res2 = residual.reshape(M, N) if residual is not None else None

    # lane-dense output (avoid masked partial stores on thin last dims).
    # Weights are pre-padded at prepare_params time for real shapes; this only
    # triggers for tiny demo widths.
    Np = N
    if residual is None and N % 128 != 0:
        Np = _round_up(N, 128)
        w = jnp.pad(w, ((0, 0), (0, Np - N)))
        b = jnp.pad(b, (0, Np - N))

    TM = _pick_tm(M, tm)
    Mp = _round_up(M, TM)
    if Mp != M:  # rare fallback; the forward pads the token axis up front
        x2 = jnp.pad(x2, ((0, Mp - M), (0, 0)))
        if res2 is not None:
            res2 = jnp.pad(res2, ((0, Mp - M), (0, 0)))

    w_bf = w if w.dtype == jnp.bfloat16 else w.astype(jnp.bfloat16)
    b2 = b.reshape(1, Np).astype(jnp.float32)

    in_specs = [pl.BlockSpec((TM, K), lambda i: (i, 0))]
    args = [x2]
    if ln is not None:
        g, bb, _ = ln
        in_specs += [_invariant_spec((1, K), lambda i: (0, 0)),
                     _invariant_spec((1, K), lambda i: (0, 0))]
        args += [g.reshape(1, K).astype(jnp.float32),
                 bb.reshape(1, K).astype(jnp.float32)]
    in_specs += [_invariant_spec((K, Np), lambda i: (0, 0)),
                 _invariant_spec((1, Np), lambda i: (0, 0))]
    args += [w_bf, b2]
    if res2 is not None:
        in_specs.append(pl.BlockSpec((TM, Np), lambda i: (i, 0)))
        args.append(res2)

    kernel = functools.partial(
        _fused_linear_kernel,
        has_ln=ln is not None,
        ln_eps=(float(ln[2]) if ln is not None else 0.0),
        ln_activation=ln_activation,
        activation=activation,
        has_residual=res2 is not None,
    )
    out = pl.pallas_call(
        kernel,
        out_shape=jax.ShapeDtypeStruct((Mp, Np), out_dtype),
        grid=(Mp // TM,),
        in_specs=in_specs,
        out_specs=pl.BlockSpec((TM, Np), lambda i: (i, 0)),
        compiler_params=pltpu.CompilerParams(
            dimension_semantics=("parallel",),
            vmem_limit_bytes=VMEM_LIMIT_BYTES),
    )(*args)

    if Mp != M or Np != N:
        out = out[:M, :N]
    return out.reshape(*orig[:-1], N)


# ----------------------------------------------------------------------------
# Standalone LayerNorm (only used for the text-embedding LN)
# ----------------------------------------------------------------------------
def _layernorm_kernel(x_ref, g_ref, b_ref, o_ref, *, eps):
    x = x_ref[...].astype(jnp.float32)
    mean = jnp.mean(x, axis=-1, keepdims=True)
    xc = x - mean
    var = jnp.mean(xc * xc, axis=-1, keepdims=True)
    y = xc * jax.lax.rsqrt(var + eps)
    y = y * g_ref[...].astype(jnp.float32) + b_ref[...].astype(jnp.float32)
    o_ref[...] = y.astype(o_ref.dtype)


def layer_norm(x, g, b, eps, *, tm=256):
    orig = x.shape
    K = orig[-1]
    M = math.prod(orig[:-1])
    x2 = x.reshape(M, K)
    TM = _pick_tm(M, tm)
    Mp = _round_up(M, TM)
    if Mp != M:
        x2 = jnp.pad(x2, ((0, Mp - M), (0, 0)))
    out = pl.pallas_call(
        functools.partial(_layernorm_kernel, eps=float(eps)),
        out_shape=jax.ShapeDtypeStruct((Mp, K), jnp.float32),
        grid=(Mp // TM,),
        in_specs=[pl.BlockSpec((TM, K), lambda i: (i, 0)),
                  _invariant_spec((1, K), lambda i: (0, 0)),
                  _invariant_spec((1, K), lambda i: (0, 0))],
        out_specs=pl.BlockSpec((TM, K), lambda i: (i, 0)),
        compiler_params=pltpu.CompilerParams(
            dimension_semantics=("parallel",),
            vmem_limit_bytes=VMEM_LIMIT_BYTES),
    )(x2, g.reshape(1, K).astype(jnp.float32), b.reshape(1, K).astype(jnp.float32))
    if Mp != M:
        out = out[:M]
    return out.reshape(orig)


# ----------------------------------------------------------------------------
# Attention: one batch element per grid step; Q/K/V column split and head
# split happen in-kernel, heads processed sequentially (bounds live VMEM),
# output written head-merged and lane-dense as (1, S, H).
# ----------------------------------------------------------------------------
def _attention_kernel(qkv_ref, bias_ref, o_ref, *, num_heads, scale):
    qkv = qkv_ref[0]                                   # (S, 3H) bf16
    H = qkv.shape[-1] // 3
    dh = H // num_heads
    bias = bias_ref[0].astype(jnp.float32)             # (1, S) additive mask
    for h in range(num_heads):
        q = qkv[:, h * dh:(h + 1) * dh]
        k = qkv[:, H + h * dh:H + (h + 1) * dh]
        v = qkv[:, 2 * H + h * dh:2 * H + (h + 1) * dh]
        # QK^T without an explicit transpose (contract last dims), f32 accumulate.
        s = jax.lax.dot_general(q, k, (((1,), (1,)), ((), ())),
                                preferred_element_type=jnp.float32)    # (S, S)
        s = s * scale + bias
        s = s - jnp.max(s, axis=-1, keepdims=True)
        p = jnp.exp(s)
        p = p / jnp.sum(p, axis=-1, keepdims=True)
        ctx = jnp.dot(p.astype(qkv.dtype), v,
                      preferred_element_type=jnp.float32)              # (S, dh)
        o_ref[0, :, h * dh:(h + 1) * dh] = ctx.astype(o_ref.dtype)


def multi_head_attention(qkv, bias, num_heads, scale):
    """qkv: (B, S, 3H) bf16 (fused Q|K|V); bias: (B, 1, S) f32 additive mask.
    Returns head-merged context (B, S, H) bf16."""
    B, S, threeH = qkv.shape
    H = threeH // 3
    # TODO(synk): for v7x with B == 1, add a head-group grid axis so both
    # TensorCores get work; at typical VQA batch sizes grid=(B,) suffices.
    return pl.pallas_call(
        functools.partial(_attention_kernel, num_heads=num_heads, scale=scale),
        out_shape=jax.ShapeDtypeStruct((B, S, H), jnp.bfloat16),
        grid=(B,),
        in_specs=[pl.BlockSpec((1, S, threeH), lambda b: (b, 0, 0)),
                  pl.BlockSpec((1, 1, S), lambda b: (b, 0, 0))],
        out_specs=pl.BlockSpec((1, S, H), lambda b: (b, 0, 0)),
        compiler_params=pltpu.CompilerParams(
            dimension_semantics=("parallel",),
            vmem_limit_bytes=VMEM_LIMIT_BYTES),
    )(qkv, bias)


# ----------------------------------------------------------------------------
# Deterministic synthetic parameters (shapes follow ViltModel + VQA head),
# laid out as the torch module stores them; prepare_params() packs them once.
# ----------------------------------------------------------------------------
def _normal(key, shape, scale=0.02):
    return (scale * jax.random.normal(key, shape)).astype(jnp.float32)


def init_params(key, cfg):
    H, I = cfg["hidden"], cfg["intermediate"]
    keys = iter(jax.random.split(key, 256))
    nk = lambda: next(keys)
    p = {}
    # text embeddings (ViltTextEmbeddings)
    p["word_emb"] = _normal(nk(), (cfg["vocab"], H))
    p["pos_emb"] = _normal(nk(), (cfg["max_pos"], H))
    p["tok_type_emb"] = _normal(nk(), (2, H))
    p["text_ln_g"] = jnp.ones((H,), jnp.float32)
    p["text_ln_b"] = jnp.zeros((H,), jnp.float32)
    # modality token-type embeddings (text=0, image=1)
    p["modality_emb"] = _normal(nk(), (2, H))
    # patch embedding (Conv2d(C, H, kernel=P, stride=P) flattened to a matmul)
    C, P = cfg["channels"], cfg["patch"]
    p["patch_w"] = _normal(nk(), (C * P * P, H))
    p["patch_b"] = jnp.zeros((H,), jnp.float32)
    p["cls_token"] = _normal(nk(), (1, 1, H))
    p["img_pos_emb"] = _normal(nk(), (1, cfg["num_patches"] + 1, H))
    # encoder layers (ViT-style pre-LN blocks)
    layers = []
    for _ in range(cfg["layers"]):
        layers.append(dict(
            ln1_g=jnp.ones((H,), jnp.float32), ln1_b=jnp.zeros((H,), jnp.float32),
            wq=_normal(nk(), (H, H)), bq=jnp.zeros((H,), jnp.float32),
            wk=_normal(nk(), (H, H)), bk=jnp.zeros((H,), jnp.float32),
            wv=_normal(nk(), (H, H)), bv=jnp.zeros((H,), jnp.float32),
            wo=_normal(nk(), (H, H)), bo=jnp.zeros((H,), jnp.float32),
            ln2_g=jnp.ones((H,), jnp.float32), ln2_b=jnp.zeros((H,), jnp.float32),
            wi=_normal(nk(), (H, I)), bi=jnp.zeros((I,), jnp.float32),
            wo2=_normal(nk(), (I, H)), bo2=jnp.zeros((H,), jnp.float32),
        ))
    p["layers"] = layers
    # final layernorm + pooler
    p["final_ln_g"] = jnp.ones((H,), jnp.float32)
    p["final_ln_b"] = jnp.zeros((H,), jnp.float32)
    p["pool_w"] = _normal(nk(), (H, H))
    p["pool_b"] = jnp.zeros((H,), jnp.float32)
    # VQA classifier head: Linear(H, 2H) -> LayerNorm(2H, eps=1e-5) -> GELU -> Linear(2H, L)
    p["cls_w1"] = _normal(nk(), (H, 2 * H))
    p["cls_b1"] = jnp.zeros((2 * H,), jnp.float32)
    p["cls_ln_g"] = jnp.ones((2 * H,), jnp.float32)
    p["cls_ln_b"] = jnp.zeros((2 * H,), jnp.float32)
    p["cls_w2"] = _normal(nk(), (2 * H, cfg["num_labels"]))
    p["cls_b2"] = jnp.zeros((cfg["num_labels"],), jnp.float32)
    return p


def prepare_params(p, cfg):
    """One-time parameter prep (run eagerly, outside the per-call forward):
    concat Q/K/V into a fused (H, 3H) weight, cast every matmul weight to
    bf16, and lane-pad the thin classifier output to a multiple of 128."""
    _buffered_supported()  # probe eagerly (outside jit) so fused_linear can single-buffer
    bf = lambda w: w.astype(jnp.bfloat16)
    q = dict(p)
    q["patch_w"] = bf(p["patch_w"])
    q["pool_w"] = bf(p["pool_w"])
    q["cls_w1"] = bf(p["cls_w1"])
    L = cfg["num_labels"]
    Lp = _round_up(L, 128)
    q["cls_w2"] = bf(jnp.pad(p["cls_w2"], ((0, 0), (0, Lp - L))))
    q["cls_b2"] = jnp.pad(p["cls_b2"], (0, Lp - L))
    layers = []
    for lyr in p["layers"]:
        nl = dict(lyr)
        nl["wqkv"] = bf(jnp.concatenate([lyr["wq"], lyr["wk"], lyr["wv"]], axis=1))
        nl["bqkv"] = jnp.concatenate([lyr["bq"], lyr["bk"], lyr["bv"]], axis=0)
        nl["wo"] = bf(lyr["wo"])
        nl["wi"] = bf(lyr["wi"])
        nl["wo2"] = bf(lyr["wo2"])
        for k in ("wq", "bq", "wk", "bk", "wv", "bv"):
            nl.pop(k)
        layers.append(nl)
    q["layers"] = layers
    return q


# ----------------------------------------------------------------------------
# Forward pass (== ViltForVQA.forward with labels=None)
# ----------------------------------------------------------------------------
def vilt_vqa_forward(params, pixel_values, input_ids, attention_mask,
                     token_type_ids, cfg):
    B, St = input_ids.shape
    H = cfg["hidden"]
    eps = 1e-12  # ViLT layer_norm_eps

    # --- text embeddings (word + pos + token_type, LayerNorm; dropout is eval identity) ---
    pos_ids = jnp.arange(St)
    we = params["word_emb"][input_ids]                      # (B, St, H)
    pe = params["pos_emb"][pos_ids][None]                   # (1, St, H)
    tte = params["tok_type_emb"][token_type_ids]            # (B, St, H)
    text = layer_norm(we + pe + tte, params["text_ln_g"], params["text_ln_b"], eps)
    text = text + params["modality_emb"][0]                 # modality type 0 (text)

    # --- image embeddings: patch conv as Pallas matmul, cls token, position embeddings ---
    C, P = cfg["channels"], cfg["patch"]
    Himg, Wimg = pixel_values.shape[2], pixel_values.shape[3]
    nh, nw = Himg // P, Wimg // P
    nP = nh * nw
    patches = pixel_values.reshape(B, C, nh, P, nw, P)
    patches = patches.transpose(0, 2, 4, 1, 3, 5).reshape(B, nP, C * P * P)
    img = fused_linear(patches, params["patch_w"], params["patch_b"])    # (B, nP, H)
    cls = jnp.broadcast_to(params["cls_token"], (B, 1, H))
    img = jnp.concatenate([cls, img], axis=1)                            # (B, nP+1, H)
    # TODO(synk): ViltEmbeddings.visual_embed interpolates position embeddings for
    # variable-resolution inputs; image matches the patch grid here so this is identity.
    img = img + params["img_pos_emb"][:, : nP + 1]
    img = img + params["modality_emb"][1]                                # modality type 1 (image)
    img_mask = jnp.ones((B, nP + 1), dtype=attention_mask.dtype)

    # --- concat text + image streams, pad token axis ONCE (padded tokens masked) ---
    x = jnp.concatenate([text, img], axis=1)                             # (B, S, H) f32 residual stream
    mask = jnp.concatenate([attention_mask, img_mask], axis=1).astype(jnp.float32)
    S = x.shape[1]
    S_pad = _round_up(S, 8)
    if S_pad != S:
        x = jnp.pad(x, ((0, 0), (0, S_pad - S), (0, 0)))
        mask = jnp.pad(mask, ((0, 0), (0, S_pad - S)))
    bias = (1.0 - mask)[:, None, :] * jnp.float32(-10000.0)              # (B, 1, S_pad)

    nHd = cfg["heads"]
    dh = H // nHd
    scale = 1.0 / math.sqrt(dh)

    # --- transformer encoder (pre-LN ViT blocks, as in ViltLayer) ---
    for lyr in params["layers"]:
        # fused LN1 + QKV projection (bf16 activations for attention)
        qkv = fused_linear(x, lyr["wqkv"], lyr["bqkv"],
                           ln=(lyr["ln1_g"], lyr["ln1_b"], eps),
                           out_dtype=jnp.bfloat16)                       # (B, S_pad, 3H)
        # attention consumes the fused QKV directly; head split/merge in-kernel
        ctx = multi_head_attention(qkv, bias, nHd, scale)                # (B, S_pad, H) bf16
        # output projection with fused first residual
        x = fused_linear(ctx, lyr["wo"], lyr["bo"], residual=x,
                         out_dtype=jnp.float32)
        # fused LN2 + MLP up-projection + GELU (tanh approx -> EUP)
        mlp = fused_linear(x, lyr["wi"], lyr["bi"],
                           ln=(lyr["ln2_g"], lyr["ln2_b"], eps),
                           activation="gelu", out_dtype=jnp.bfloat16)
        # MLP down-projection with fused second residual
        x = fused_linear(mlp, lyr["wo2"], lyr["bo2"], residual=x,
                         out_dtype=jnp.float32)

    # --- final layernorm fused into the pooler (Linear + tanh on first token only) ---
    pooled = fused_linear(x[:, 0], params["pool_w"], params["pool_b"],
                          ln=(params["final_ln_g"], params["final_ln_b"], eps),
                          activation="tanh")

    # --- VQA classifier head: Linear -> (LayerNorm -> GELU fused into) Linear ---
    h = fused_linear(pooled, params["cls_w1"], params["cls_b1"])
    logits = fused_linear(h, params["cls_w2"], params["cls_b2"],
                          ln=(params["cls_ln_g"], params["cls_ln_b"], 1e-5),
                          ln_activation="gelu")
    # classifier weights were lane-padded once at prep time; slice back here
    logits = logits[:, : cfg["num_labels"]]
    # TODO(synk): CrossEntropyLoss branch omitted (labels=None path); loss would be plain JAX.
    return logits


# ----------------------------------------------------------------------------
if __name__ == "__main__":
    cfg = dict(
        vocab=100, hidden=32, heads=4, layers=2, intermediate=64,
        max_pos=16, channels=3, patch=16, image=32, num_labels=10,
    )
    cfg["num_patches"] = (cfg["image"] // cfg["patch"]) ** 2

    key = jax.random.PRNGKey(0)
    pkey, k_ids, k_pix = jax.random.split(key, 3)
    params = prepare_params(init_params(pkey, cfg), cfg)

    B, St = 2, 8
    input_ids = jax.random.randint(k_ids, (B, St), 0, cfg["vocab"], dtype=jnp.int32)
    attention_mask = jnp.ones((B, St), jnp.int32).at[1, 6:].set(0)
    token_type_ids = jnp.zeros((B, St), jnp.int32)
    pixel_values = jax.random.normal(
        k_pix, (B, cfg["channels"], cfg["image"], cfg["image"]), jnp.float32)

    forward = jax.jit(functools.partial(vilt_vqa_forward, cfg=cfg))
    logits = forward(params, pixel_values, input_ids, attention_mask, token_type_ids)
    logits = jax.block_until_ready(logits)
    assert logits.shape == (B, cfg["num_labels"]) and logits.dtype == jnp.float32
    print("KERNEL_OK")
</pallas_src>

<mosaic_0001>
module attributes {stable_mosaic.version = 11 : i64} {
  func.func @_probe_kernel(%arg0: i32, %arg1: memref<8x128xf32, #tpu.memory_space<vmem>>, %arg2: memref<8x128xf32, #tpu.memory_space<vmem>>) attributes {dimension_semantics = [#tpu.dimension_semantics<arbitrary>], iteration_bounds = array<i64: 2>, scalar_prefetch = 0 : i64, scratch_operands = 0 : i64, tpu.core_type = #tpu.core_type<tc>, window_params = [{pipeline_mode = #tpu.pipeline_mode<synchronous>, transform_indices = @transform_0, window_bounds = array<i64: 8, 128>}, {transform_indices = @transform_1, window_bounds = array<i64: 8, 128>}]} {
    %c0 = arith.constant 0 : index
    %c0_0 = arith.constant 0 : index
    %0 = vector.load %arg1[%c0, %c0_0] : memref<8x128xf32, #tpu.memory_space<vmem>>, vector<8x128xf32>
    %c0_1 = arith.constant 0 : index
    %c0_2 = arith.constant 0 : index
    %1 = vector.load %arg2[%c0_1, %c0_2] : memref<8x128xf32, #tpu.memory_space<vmem>>, vector<8x128xf32>
    tpu.vector_store %arg2[%c0_1, %c0_2], %0 {strides = array<i32>} : memref<8x128xf32, #tpu.memory_space<vmem>>, vector<8x128xf32>,
    return
  }
  func.func @transform_0(%arg0: i32) -> (i32, i32) {
    %c0_i32 = arith.constant 0 : i32
    %c0_i32_0 = arith.constant 0 : i32
    %c0_i32_1 = arith.constant 0 : i32
    return %c0_i32, %c0_i32_0 : i32, i32
  }
  func.func @transform_1(%arg0: i32) -> (i32, i32) {
    %c0_i32 = arith.constant 0 : i32
    %c0_i32_0 = arith.constant 0 : i32
    return %arg0, %c0_i32 : i32, i32
  }
}

module attributes {stable_mosaic.version = 11 : i64} {
  func.func @_fused_linear_kernel(%arg0: i32, %arg1: memref<8x768xf32, #tpu.memory_space<vmem>>, %arg2: memref<768x128xbf16, #tpu.memory_space<vmem>>, %arg3: memref<1x128xf32, #tpu.memory_space<vmem>>, %arg4: memref<8x128xf32, #tpu.memory_space<vmem>>) attributes {dimension_semantics = [#tpu.dimension_semantics<parallel>], iteration_bounds = array<i64: 1>, scalar_prefetch = 0 : i64, scratch_operands = 0 : i64, tpu.core_type = #tpu.core_type<tc>, window_params = [{transform_indices = @transform_0, window_bounds = array<i64: 8, 768>}, {pipeline_mode = #tpu.pipeline_mode<synchronous>, transform_indices = @transform_1, window_bounds = array<i64: 768, 128>}, {pipeline_mode = #tpu.pipeline_mode<synchronous>, transform_indices = @transform_2, window_bounds = array<i64: 1, 128>}, {transform_indices = @transform_3, window_bounds = array<i64: 8, 128>}]} {
    %c0 = arith.constant 0 : index
    %c0_0 = arith.constant 0 : index
    %0 = vector.load %arg1[%c0, %c0_0] : memref<8x768xf32, #tpu.memory_space<vmem>>, vector<8x768xf32>
    %1 = arith.truncf %0 : vector<8x768xf32> to vector<8x768xbf16>
    %c0_1 = arith.constant 0 : index
    %c0_2 = arith.constant 0 : index
    %2 = vector.load %arg2[%c0_1, %c0_2] : memref<768x128xbf16, #tpu.memory_space<vmem>>, vector<768x128xbf16>
    %cst = arith.constant dense<0.000000e+00> : vector<8x128xf32>
    %3 = tpu.matmul %1, %2, %cst {dimension_numbers = #tpu.dot_dimension_numbers<[1], [0], [0], [1], [0, 0, 1, 1], [], []>} : vector<8x768xbf16>, vector<768x128xbf16>, vector<8x128xf32> -> vector<8x128xf32>
    %c0_3 = arith.constant 0 : index
    %c0_4 = arith.constant 0 : index
    %4 = vector.load %arg3[%c0_3, %c0_4] : memref<1x128xf32, #tpu.memory_space<vmem>>, vector<1x128xf32>
    %5 = vector.broadcast %4 : vector<1x128xf32> to vector<8x128xf32>
    %6 = arith.addf %3, %5 : vector<8x128xf32>
    %c0_5 = arith.constant 0 : index
    %c0_6 = arith.constant 0 : index
    %7 = vector.load %arg4[%c0_5, %c0_6] : memref<8x128xf32, #tpu.memory_space<vmem>>, vector<8x128xf32>
    tpu.vector_store %arg4[%c0_5, %c0_6], %6 {strides = array<i32>} : memref<8x128xf32, #tpu.memory_space<vmem>>, vector<8x128xf32>,
    return
  }
  func.func @transform_0(%arg0: i32) -> (i32, i32) {
    %c0_i32 = arith.constant 0 : i32
    %c0_i32_0 = arith.constant 0 : i32
    return %arg0, %c0_i32 : i32, i32
  }
  func.func @transform_1(%arg0: i32) -> (i32, i32) {
    %c0_i32 = arith.constant 0 : i32
    %c0_i32_0 = arith.constant 0 : i32
    %c0_i32_1 = arith.constant 0 : i32
    return %c0_i32, %c0_i32_0 : i32, i32
  }
  func.func @transform_2(%arg0: i32) -> (i32, i32) {
    %c0_i32 = arith.constant 0 : i32
    %c0_i32_0 = arith.constant 0 : i32
    %c0_i32_1 = arith.constant 0 : i32
    return %c0_i32, %c0_i32_0 : i32, i32
  }
  func.func @transform_3(%arg0: i32) -> (i32, i32) {
    %c0_i32 = arith.constant 0 : i32
    %c0_i32_0 = arith.constant 0 : i32
    return %arg0, %c0_i32 : i32, i32
  }
}

module attributes {stable_mosaic.version = 11 : i64} {
  func.func @_fused_linear_kernel(%arg0: i32, %arg1: memref<16x32xf32, #tpu.memory_space<vmem>>, %arg2: memref<1x32xf32, #tpu.memory_space<vmem>>, %arg3: memref<1x32xf32, #tpu.memory_space<vmem>>, %arg4: memref<32x128xbf16, #tpu.memory_space<vmem>>, %arg5: memref<1x128xf32, #tpu.memory_space<vmem>>, %arg6: memref<16x128xbf16, #tpu.memory_space<vmem>>) attributes {dimension_semantics = [#tpu.dimension_semantics<parallel>], iteration_bounds = array<i64: 2>, scalar_prefetch = 0 : i64, scratch_operands = 0 : i64, tpu.core_type = #tpu.core_type<tc>, window_params = [{transform_indices = @transform_0, window_bounds = array<i64: 16, 32>}, {pipeline_mode = #tpu.pipeline_mode<synchronous>, transform_indices = @transform_1, window_bounds = array<i64: 1, 32>}, {pipeline_mode = #tpu.pipeline_mode<synchronous>, transform_indices = @transform_2, window_bounds = array<i64: 1, 32>}, {pipeline_mode = #tpu.pipeline_mode<synchronous>, transform_indices = @transform_3, window_bounds = array<i64: 32, 128>}, {pipeline_mode = #tpu.pipeline_mode<synchronous>, transform_indices = @transform_4, window_bounds = array<i64: 1, 128>}, {transform_indices = @transform_5, window_bounds = array<i64: 16, 128>}]} {
    %c0 = arith.constant 0 : index
    %c0_0 = arith.constant 0 : index
    %0 = vector.load %arg1[%c0, %c0_0] : memref<16x32xf32, #tpu.memory_space<vmem>>, vector<16x32xf32>
    %cst = arith.constant dense<0.000000e+00> : vector<16xf32>
    %1 = vector.multi_reduction <add>, %0, %cst [1] : vector<16x32xf32> to vector<16xf32>
    %2 = vector.shape_cast %1 : vector<16xf32> to vector<16x1xf32>
    %cst_1 = arith.constant 3.200000e+01 : f32
    %3 = vector.broadcast %cst_1 : f32 to vector<16x1xf32>
    %4 = arith.divf %2, %3 : vector<16x1xf32>
    %5 = vector.broadcast %4 : vector<16x1xf32> to vector<16x32xf32>
    %6 = arith.subf %0, %5 : vector<16x32xf32>
    %7 = arith.mulf %6, %6 : vector<16x32xf32>
    %cst_2 = arith.constant dense<0.000000e+00> : vector<16xf32>
    %8 = vector.multi_reduction <add>, %7, %cst_2 [1] : vector<16x32xf32> to vector<16xf32>
    %9 = vector.shape_cast %8 : vector<16xf32> to vector<16x1xf32>
    %cst_3 = arith.constant 3.200000e+01 : f32
    %10 = vector.broadcast %cst_3 : f32 to vector<16x1xf32>
    %11 = arith.divf %9, %10 : vector<16x1xf32>
    %cst_4 = arith.constant 9.99999996E-13 : f32
    %12 = vector.broadcast %cst_4 : f32 to vector<16x1xf32>
    %13 = arith.addf %11, %12 : vector<16x1xf32>
    %14 = math.rsqrt %13 : vector<16x1xf32>
    %15 = vector.broadcast %14 : vector<16x1xf32> to vector<16x32xf32>
    %16 = arith.mulf %6, %15 : vector<16x32xf32>
    %c0_5 = arith.constant 0 : index
    %c0_6 = arith.constant 0 : index
    %17 = vector.load %arg2[%c0_5, %c0_6] : memref<1x32xf32, #tpu.memory_space<vmem>>, vector<1x32xf32>
    %18 = vector.broadcast %17 : vector<1x32xf32> to vector<16x32xf32>
    %19 = arith.mulf %16, %18 : vector<16x32xf32>
    %c0_7 = arith.constant 0 : index
    %c0_8 = arith.constant 0 : index
    %20 = vector.load %arg3[%c0_7, %c0_8] : memref<1x32xf32, #tpu.memory_space<vmem>>, vector<1x32xf32>
    %21 = vector.broadcast %20 : vector<1x32xf32> to vector<16x32xf32>
    %22 = arith.addf %19, %21 : vector<16x32xf32>
    %23 = arith.truncf %22 : vector<16x32xf32> to vector<16x32xbf16>
    %c0_9 = arith.constant 0 : index
    %c0_10 = arith.constant 0 : index
    %24 = vector.load %arg4[%c0_9, %c0_10] : memref<32x128xbf16, #tpu.memory_space<vmem>>, vector<32x128xbf16>
    %cst_11 = arith.constant dense<0.000000e+00> : vector<16x128xf32>
    %25 = tpu.matmul %23, %24, %cst_11 {dimension_numbers = #tpu.dot_dimension_numbers<[1], [0], [0], [1], [0, 0, 1, 1], [], []>} : vector<16x32xbf16>, vector<32x128xbf16>, vector<16x128xf32> -> vector<16x128xf32>
    %c0_12 = arith.constant 0 : index
    %c0_13 = arith.constant 0 : index
    %26 = vector.load %arg5[%c0_12, %c0_13] : memref<1x128xf32, #tpu.memory_space<vmem>>, vector<1x128xf32>
    %27 = vector.broadcast %26 : vector<1x128xf32> to vector<16x128xf32>
    %28 = arith.addf %25, %27 : vector<16x128xf32>
    %29 = arith.truncf %28 : vector<16x128xf32> to vector<16x128xbf16>
    %c0_14 = arith.constant 0 : index
    %c0_15 = arith.constant 0 : index
    %30 = vector.load %arg6[%c0_14, %c0_15] : memref<16x128xbf16, #tpu.memory_space<vmem>>, vector<16x128xbf16>
    tpu.vector_store %arg6[%c0_14, %c0_15], %29 {strides = array<i32>} : memref<16x128xbf16, #tpu.memory_space<vmem>>, vector<16x128xbf16>,
    return
  }
  func.func @transform_0(%arg0: i32) -> (i32, i32) {
    %c0_i32 = arith.constant 0 : i32
    %c0_i32_0 = arith.constant 0 : i32
    return %arg0, %c0_i32 : i32, i32
  }
  func.func @transform_1(%arg0: i32) -> (i32, i32) {
    %c0_i32 = arith.constant 0 : i32
    %c0_i32_0 = arith.constant 0 : i32
    %c0_i32_1 = arith.constant 0 : i32
    return %c0_i32, %c0_i32_0 : i32, i32
  }
  func.func @transform_2(%arg0: i32) -> (i32, i32) {
    %c0_i32 = arith.constant 0 : i32
    %c0_i32_0 = arith.constant 0 : i32
    %c0_i32_1 = arith.constant 0 : i32
    return %c0_i32, %c0_i32_0 : i32, i32
  }
  func.func @transform_3(%arg0: i32) -> (i32, i32) {
    %c0_i32 = arith.constant 0 : i32
    %c0_i32_0 = arith.constant 0 : i32
    %c0_i32_1 = arith.constant 0 : i32
    return %c0_i32, %c0_i32_0 : i32, i32
  }
  func.func @transform_4(%arg0: i32) -> (i32, i32) {
    %c0_i32 = arith.constant 0 : i32
    %c0_i32_0 = arith.constant 0 : i32
    %c0_i32_1 = arith.constant 0 : i32
    return %c0_i32, %c0_i32_0 : i32, i32
  }
  func.func @transform_5(%arg0: i32) -> (i32, i32) {
    %c0_i32 = arith.constant 0 : i32
    %c0_i32_0 = arith.constant 0 : i32
    return %arg0, %c0_i32 : i32, i32
  }
}

module attributes {stable_mosaic.version = 11 : i64} {
  func.func @_layernorm_kernel(%arg0: i32, %arg1: memref<8x32xf32, #tpu.memory_space<vmem>>, %arg2: memref<1x32xf32, #tpu.memory_space<vmem>>, %arg3: memref<1x32xf32, #tpu.memory_space<vmem>>, %arg4: memref<8x32xf32, #tpu.memory_space<vmem>>) attributes {dimension_semantics = [#tpu.dimension_semantics<parallel>], iteration_bounds = array<i64: 2>, scalar_prefetch = 0 : i64, scratch_operands = 0 : i64, tpu.core_type = #tpu.core_type<tc>, window_params = [{transform_indices = @transform_0, window_bounds = array<i64: 8, 32>}, {pipeline_mode = #tpu.pipeline_mode<synchronous>, transform_indices = @transform_1, window_bounds = array<i64: 1, 32>}, {pipeline_mode = #tpu.pipeline_mode<synchronous>, transform_indices = @transform_2, window_bounds = array<i64: 1, 32>}, {transform_indices = @transform_3, window_bounds = array<i64: 8, 32>}]} {
    %c0 = arith.constant 0 : index
    %c0_0 = arith.constant 0 : index
    %0 = vector.load %arg1[%c0, %c0_0] : memref<8x32xf32, #tpu.memory_space<vmem>>, vector<8x32xf32>
    %cst = arith.constant dense<0.000000e+00> : vector<8xf32>
    %1 = vector.multi_reduction <add>, %0, %cst [1] : vector<8x32xf32> to vector<8xf32>
    %2 = vector.shape_cast %1 : vector<8xf32> to vector<8x1xf32>
    %cst_1 = arith.constant 3.200000e+01 : f32
    %3 = vector.broadcast %cst_1 : f32 to vector<8x1xf32>
    %4 = arith.divf %2, %3 : vector<8x1xf32>
    %5 = vector.broadcast %4 : vector<8x1xf32> to vector<8x32xf32>
    %6 = arith.subf %0, %5 : vector<8x32xf32>
    %7 = arith.mulf %6, %6 : vector<8x32xf32>
    %cst_2 = arith.constant dense<0.000000e+00> : vector<8xf32>
    %8 = vector.multi_reduction <add>, %7, %cst_2 [1] : vector<8x32xf32> to vector<8xf32>
    %9 = vector.shape_cast %8 : vector<8xf32> to vector<8x1xf32>
    %cst_3 = arith.constant 3.200000e+01 : f32
    %10 = vector.broadcast %cst_3 : f32 to vector<8x1xf32>
    %11 = arith.divf %9, %10 : vector<8x1xf32>
    %cst_4 = arith.constant 9.99999996E-13 : f32
    %12 = vector.broadcast %cst_4 : f32 to vector<8x1xf32>
    %13 = arith.addf %11, %12 : vector<8x1xf32>
    %14 = math.rsqrt %13 : vector<8x1xf32>
    %15 = vector.broadcast %14 : vector<8x1xf32> to vector<8x32xf32>
    %16 = arith.mulf %6, %15 : vector<8x32xf32>
    %c0_5 = arith.constant 0 : index
    %c0_6 = arith.constant 0 : index
    %17 = vector.load %arg2[%c0_5, %c0_6] : memref<1x32xf32, #tpu.memory_space<vmem>>, vector<1x32xf32>
    %18 = vector.broadcast %17 : vector<1x32xf32> to vector<8x32xf32>
    %19 = arith.mulf %16, %18 : vector<8x32xf32>
    %c0_7 = arith.constant 0 : index
    %c0_8 = arith.constant 0 : index
    %20 = vector.load %arg3[%c0_7, %c0_8] : memref<1x32xf32, #tpu.memory_space<vmem>>, vector<1x32xf32>
    %21 = vector.broadcast %20 : vector<1x32xf32> to vector<8x32xf32>
    %22 = arith.addf %19, %21 : vector<8x32xf32>
    %c0_9 = arith.constant 0 : index
    %c0_10 = arith.constant 0 : index
    %23 = vector.load %arg4[%c0_9, %c0_10] : memref<8x32xf32, #tpu.memory_space<vmem>>, vector<8x32xf32>
    tpu.vector_store %arg4[%c0_9, %c0_10], %22 {strides = array<i32>} : memref<8x32xf32, #tpu.memory_space<vmem>>, vector<8x32xf32>,
    return
  }
  func.func @transform_0(%arg0: i32) -> (i32, i32) {
    %c0_i32 = arith.constant 0 : i32
    %c0_i32_0 = arith.constant 0 : i32
    return %arg0, %c0_i32 : i32, i32
  }
  func.func @transform_1(%arg0: i32) -> (i32, i32) {
    %c0_i32 = arith.constant 0 : i32
    %c0_i32_0 = arith.constant 0 : i32
    %c0_i32_1 = arith.constant 0 : i32
    return %c0_i32, %c0_i32_0 : i32, i32
  }
  func.func @transform_2(%arg0: i32) -> (i32, i32) {
    %c0_i32 = arith.constant 0 : i32
    %c0_i32_0 = arith.constant 0 : i32
    %c0_i32_1 = arith.constant 0 : i32
    return %c0_i32, %c0_i32_0 : i32, i32
  }
  func.func @transform_3(%arg0: i32) -> (i32, i32) {
    %c0_i32 = arith.constant 0 : i32
    %c0_i32_0 = arith.constant 0 : i32
    return %arg0, %c0_i32 : i32, i32
  }
}

module attributes {stable_mosaic.version = 11 : i64} {
  func.func @_attention_kernel(%arg0: i32, %arg1: memref<1x16x96xbf16, #tpu.memory_space<vmem>>, %arg2: memref<1x1x16xf32, #tpu.memory_space<vmem>>, %arg3: memref<1x16x32xbf16, #tpu.memory_space<vmem>>) attributes {dimension_semantics = [#tpu.dimension_semantics<parallel>], iteration_bounds = array<i64: 2>, scalar_prefetch = 0 : i64, scratch_operands = 0 : i64, tpu.core_type = #tpu.core_type<tc>, window_params = [{transform_indices = @transform_0, window_bounds = array<i64: 1, 16, 96>}, {transform_indices = @transform_1, window_bounds = array<i64: 1, 1, 16>}, {transform_indices = @transform_2, window_bounds = array<i64: 1, 16, 32>}]} {
    %c0 = arith.constant 0 : index
    %c0_0 = arith.constant 0 : index
    %c0_1 = arith.constant 0 : index
    %0 = vector.load %arg1[%c0, %c0_0, %c0_1] : memref<1x16x96xbf16, #tpu.memory_space<vmem>>, vector<1x16x96xbf16>
    %1 = vector.shape_cast %0 : vector<1x16x96xbf16> to vector<16x96xbf16>
    %c0_2 = arith.constant 0 : index
    %c0_3 = arith.constant 0 : index
    %c0_4 = arith.constant 0 : index
    %2 = vector.load %arg2[%c0_2, %c0_3, %c0_4] : memref<1x1x16xf32, #tpu.memory_space<vmem>>, vector<1x1x16xf32>
    %3 = vector.shape_cast %2 : vector<1x1x16xf32> to vector<1x16xf32>
    %4 = vector.extract_strided_slice %1 {offsets = [0, 0], sizes = [16, 8], strides = [1, 1]} : vector<16x96xbf16> to vector<16x8xbf16>
    %5 = vector.extract_strided_slice %1 {offsets = [0, 32], sizes = [16, 8], strides = [1, 1]} : vector<16x96xbf16> to vector<16x8xbf16>
    %6 = vector.extract_strided_slice %1 {offsets = [0, 64], sizes = [16, 8], strides = [1, 1]} : vector<16x96xbf16> to vector<16x8xbf16>
    %cst = arith.constant dense<0.000000e+00> : vector<16x16xf32>
    %7 = tpu.matmul %4, %5, %cst {dimension_numbers = #tpu.dot_dimension_numbers<[1], [1], [0], [0], [0, 0, 1, 0], [], []>} : vector<16x8xbf16>, vector<16x8xbf16>, vector<16x16xf32> -> vector<16x16xf32>
    %cst_5 = arith.constant 0.353553385 : f32
    %8 = vector.broadcast %cst_5 : f32 to vector<16x16xf32>
    %9 = arith.mulf %7, %8 : vector<16x16xf32>
    %10 = vector.broadcast %3 : vector<1x16xf32> to vector<16x16xf32>
    %11 = arith.addf %9, %10 : vector<16x16xf32>
    %cst_6 = arith.constant dense<0xFF800000> : vector<16xf32>
    %12 = vector.multi_reduction <maximumf>, %11, %cst_6 [1] : vector<16x16xf32> to vector<16xf32>
    %13 = vector.shape_cast %12 : vector<16xf32> to vector<16x1xf32>
    %14 = vector.broadcast %13 : vector<16x1xf32> to vector<16x16xf32>
    %15 = arith.subf %11, %14 : vector<16x16xf32>
    %16 = math.exp %15 : vector<16x16xf32>
    %cst_7 = arith.constant dense<0.000000e+00> : vector<16xf32>
    %17 = vector.multi_reduction <add>, %16, %cst_7 [1] : vector<16x16xf32> to vector<16xf32>
    %18 = vector.shape_cast %17 : vector<16xf32> to vector<16x1xf32>
    %19 = vector.broadcast %18 : vector<16x1xf32> to vector<16x16xf32>
    %20 = arith.divf %16, %19 : vector<16x16xf32>
    %21 = arith.truncf %20 : vector<16x16xf32> to vector<16x16xbf16>
    %cst_8 = arith.constant dense<0.000000e+00> : vector<16x8xf32>
    %22 = tpu.matmul %21, %6, %cst_8 {dimension_numbers = #tpu.dot_dimension_numbers<[1], [0], [0], [1], [0, 0, 1, 1], [], []>} : vector<16x16xbf16>, vector<16x8xbf16>, vector<16x8xf32> -> vector<16x8xf32>
    %23 = arith.truncf %22 : vector<16x8xf32> to vector<16x8xbf16>
    %c0_9 = arith.constant 0 : index
    %c0_10 = arith.constant 0 : index
    %c0_11 = arith.constant 0 : index
    %24 = vector.load %arg3[%c0_9, %c0_10, %c0_11] : memref<1x16x32xbf16, #tpu.memory_space<vmem>>, vector<1x16x8xbf16>
    %25 = vector.shape_cast %24 : vector<1x16x8xbf16> to vector<16x8xbf16>
    %26 = vector.shape_cast %23 : vector<16x8xbf16> to vector<1x16x8xbf16>
    tpu.vector_store %arg3[%c0_9, %c0_10, %c0_11], %26 {strides = array<i32>} : memref<1x16x32xbf16, #tpu.memory_space<vmem>>, vector<1x16x8xbf16>,
    %27 = vector.extract_strided_slice %1 {offsets = [0, 8], sizes = [16, 8], strides = [1, 1]} : vector<16x96xbf16> to vector<16x8xbf16>
    %28 = vector.extract_strided_slice %1 {offsets = [0, 40], sizes = [16, 8], strides = [1, 1]} : vector<16x96xbf16> to vector<16x8xbf16>
    %29 = vector.extract_strided_slice %1 {offsets = [0, 72], sizes = [16, 8], strides = [1, 1]} : vector<16x96xbf16> to vector<16x8xbf16>
    %cst_12 = arith.constant dense<0.000000e+00> : vector<16x16xf32>
    %30 = tpu.matmul %27, %28, %cst_12 {dimension_numbers = #tpu.dot_dimension_numbers<[1], [1], [0], [0], [0, 0, 1, 0], [], []>} : vector<16x8xbf16>, vector<16x8xbf16>, vector<16x16xf32> -> vector<16x16xf32>
    %cst_13 = arith.constant 0.353553385 : f32
    %31 = vector.broadcast %cst_13 : f32 to vector<16x16xf32>
    %32 = arith.mulf %30, %31 : vector<16x16xf32>
    %33 = vector.broadcast %3 : vector<1x16xf32> to vector<16x16xf32>
    %34 = arith.addf %32, %33 : vector<16x16xf32>
    %cst_14 = arith.constant dense<0xFF800000> : vector<16xf32>
    %35 = vector.multi_reduction <maximumf>, %34, %cst_14 [1] : vector<16x16xf32> to vector<16xf32>
    %36 = vector.shape_cast %35 : vector<16xf32> to vector<16x1xf32>
    %37 = vector.broadcast %36 : vector<16x1xf32> to vector<16x16xf32>
    %38 = arith.subf %34, %37 : vector<16x16xf32>
    %39 = math.exp %38 : vector<16x16xf32>
    %cst_15 = arith.constant dense<0.000000e+00> : vector<16xf32>
    %40 = vector.multi_reduction <add>, %39, %cst_15 [1] : vector<16x16xf32> to vector<16xf32>
    %41 = vector.shape_cast %40 : vector<16xf32> to vector<16x1xf32>
    %42 = vector.broadcast %41 : vector<16x1xf32> to vector<16x16xf32>
    %43 = arith.divf %39, %42 : vector<16x16xf32>
    %44 = arith.truncf %43 : vector<16x16xf32> to vector<16x16xbf16>
    %cst_16 = arith.constant dense<0.000000e+00> : vector<16x8xf32>
    %45 = tpu.matmul %44, %29, %cst_16 {dimension_numbers = #tpu.dot_dimension_numbers<[1], [0], [0], [1], [0, 0, 1, 1], [], []>} : vector<16x16xbf16>, vector<16x8xbf16>, vector<16x8xf32> -> vector<16x8xf32>
    %46 = arith.truncf %45 : vector<16x8xf32> to vector<16x8xbf16>
    %c0_17 = arith.constant 0 : index
    %c0_18 = arith.constant 0 : index
    %c8 = arith.constant 8 : index
    %47 = vector.load %arg3[%c0_17, %c0_18, %c8] : memref<1x16x32xbf16, #tpu.memory_space<vmem>>, vector<1x16x8xbf16>
    %48 = vector.shape_cast %47 : vector<1x16x8xbf16> to vector<16x8xbf16>
    %49 = vector.shape_cast %46 : vector<16x8xbf16> to vector<1x16x8xbf16>
    tpu.vector_store %arg3[%c0_17, %c0_18, %c8], %49 {strides = array<i32>} : memref<1x16x32xbf16, #tpu.memory_space<vmem>>, vector<1x16x8xbf16>,
    %50 = vector.extract_strided_slice %1 {offsets = [0, 16], sizes = [16, 8], strides = [1, 1]} : vector<16x96xbf16> to vector<16x8xbf16>
    %51 = vector.extract_strided_slice %1 {offsets = [0, 48], sizes = [16, 8], strides = [1, 1]} : vector<16x96xbf16> to vector<16x8xbf16>
    %52 = vector.extract_strided_slice %1 {offsets = [0, 80], sizes = [16, 8], strides = [1, 1]} : vector<16x96xbf16> to vector<16x8xbf16>
    %cst_19 = arith.constant dense<0.000000e+00> : vector<16x16xf32>
    %53 = tpu.matmul %50, %51, %cst_19 {dimension_numbers = #tpu.dot_dimension_numbers<[1], [1], [0], [0], [0, 0, 1, 0], [], []>} : vector<16x8xbf16>, vector<16x8xbf16>, vector<16x16xf32> -> vector<16x16xf32>
    %cst_20 = arith.constant 0.353553385 : f32
    %54 = vector.broadcast %cst_20 : f32 to vector<16x16xf32>
    %55 = arith.mulf %53, %54 : vector<16x16xf32>
    %56 = vector.broadcast %3 : vector<1x16xf32> to vector<16x16xf32>
    %57 = arith.addf %55, %56 : vector<16x16xf32>
    %cst_21 = arith.constant dense<0xFF800000> : vector<16xf32>
    %58 = vector.multi_reduction <maximumf>, %57, %cst_21 [1] : vector<16x16xf32> to vector<16xf32>
    %59 = vector.shape_cast %58 : vector<16xf32> to vector<16x1xf32>
    %60 = vector.broadcast %59 : vector<16x1xf32> to vector<16x16xf32>
    %61 = arith.subf %57, %60 : vector<16x16xf32>
    %62 = math.exp %61 : vector<16x16xf32>
    %cst_22 = arith.constant dense<0.000000e+00> : vector<16xf32>
    %63 = vector.multi_reduction <add>, %62, %cst_22 [1] : vector<16x16xf32> to vector<16xf32>
    %64 = vector.shape_cast %63 : vector<16xf32> to vector<16x1xf32>
    %65 = vector.broadcast %64 : vector<16x1xf32> to vector<16x16xf32>
    %66 = arith.divf %62, %65 : vector<16x16xf32>
    %67 = arith.truncf %66 : vector<16x16xf32> to vector<16x16xbf16>
    %cst_23 = arith.constant dense<0.000000e+00> : vector<16x8xf32>
    %68 = tpu.matmul %67, %52, %cst_23 {dimension_numbers = #tpu.dot_dimension_numbers<[1], [0], [0], [1], [0, 0, 1, 1], [], []>} : vector<16x16xbf16>, vector<16x8xbf16>, vector<16x8xf32> -> vector<16x8xf32>
    %69 = arith.truncf %68 : vector<16x8xf32> to vector<16x8xbf16>
    %c0_24 = arith.constant 0 : index
    %c0_25 = arith.constant 0 : index
    %c16 = arith.constant 16 : index
    %70 = vector.load %arg3[%c0_24, %c0_25, %c16] : memref<1x16x32xbf16, #tpu.memory_space<vmem>>, vector<1x16x8xbf16>
    %71 = vector.shape_cast %70 : vector<1x16x8xbf16> to vector<16x8xbf16>
    %72 = vector.shape_cast %69 : vector<16x8xbf16> to vector<1x16x8xbf16>
    tpu.vector_store %arg3[%c0_24, %c0_25, %c16], %72 {strides = array<i32>} : memref<1x16x32xbf16, #tpu.memory_space<vmem>>, vector<1x16x8xbf16>,
    %73 = vector.extract_strided_slice %1 {offsets = [0, 24], sizes = [16, 8], strides = [1, 1]} : vector<16x96xbf16> to vector<16x8xbf16>
    %74 = vector.extract_strided_slice %1 {offsets = [0, 56], sizes = [16, 8], strides = [1, 1]} : vector<16x96xbf16> to vector<16x8xbf16>
    %75 = vector.extract_strided_slice %1 {offsets = [0, 88], sizes = [16, 8], strides = [1, 1]} : vector<16x96xbf16> to vector<16x8xbf16>
    %cst_26 = arith.constant dense<0.000000e+00> : vector<16x16xf32>
    %76 = tpu.matmul %73, %74, %cst_26 {dimension_numbers = #tpu.dot_dimension_numbers<[1], [1], [0], [0], [0, 0, 1, 0], [], []>} : vector<16x8xbf16>, vector<16x8xbf16>, vector<16x16xf32> -> vector<16x16xf32>
    %cst_27 = arith.constant 0.353553385 : f32
    %77 = vector.broadcast %cst_27 : f32 to vector<16x16xf32>
    %78 = arith.mulf %76, %77 : vector<16x16xf32>
    %79 = vector.broadcast %3 : vector<1x16xf32> to vector<16x16xf32>
    %80 = arith.addf %78, %79 : vector<16x16xf32>
    %cst_28 = arith.constant dense<0xFF800000> : vector<16xf32>
    %81 = vector.multi_reduction <maximumf>, %80, %cst_28 [1] : vector<16x16xf32> to vector<16xf32>
    %82 = vector.shape_cast %81 : vector<16xf32> to vector<16x1xf32>
    %83 = vector.broadcast %82 : vector<16x1xf32> to vector<16x16xf32>
    %84 = arith.subf %80, %83 : vector<16x16xf32>
    %85 = math.exp %84 : vector<16x16xf32>
    %cst_29 = arith.constant dense<0.000000e+00> : vector<16xf32>
    %86 = vector.multi_reduction <add>, %85, %cst_29 [1] : vector<16x16xf32> to vector<16xf32>
    %87 = vector.shape_cast %86 : vector<16xf32> to vector<16x1xf32>
    %88 = vector.broadcast %87 : vector<16x1xf32> to vector<16x16xf32>
    %89 = arith.divf %85, %88 : vector<16x16xf32>
    %90 = arith.truncf %89 : vector<16x16xf32> to vector<16x16xbf16>
    %cst_30 = arith.constant dense<0.000000e+00> : vector<16x8xf32>
    %91 = tpu.matmul %90, %75, %cst_30 {dimension_numbers = #tpu.dot_dimension_numbers<[1], [0], [0], [1], [0, 0, 1, 1], [], []>} : vector<16x16xbf16>, vector<16x8xbf16>, vector<16x8xf32> -> vector<16x8xf32>
    %92 = arith.truncf %91 : vector<16x8xf32> to vector<16x8xbf16>
    %c0_31 = arith.constant 0 : index
    %c0_32 = arith.constant 0 : index
    %c24 = arith.constant 24 : index
    %93 = vector.load %arg3[%c0_31, %c0_32, %c24] : memref<1x16x32xbf16, #tpu.memory_space<vmem>>, vector<1x16x8xbf16>
    %94 = vector.shape_cast %93 : vector<1x16x8xbf16> to vector<16x8xbf16>
    %95 = vector.shape_cast %92 : vector<16x8xbf16> to vector<1x16x8xbf16>
    tpu.vector_store %arg3[%c0_31, %c0_32, %c24], %95 {strides = array<i32>} : memref<1x16x32xbf16, #tpu.memory_space<vmem>>, vector<1x16x8xbf16>,
    return
  }
  func.func @transform_0(%arg0: i32) -> (i32, i32, i32) {
    %c0_i32 = arith.constant 0 : i32
    %c0_i32_0 = arith.constant 0 : i32
    %c0_i32_1 = arith.constant 0 : i32
    return %arg0, %c0_i32, %c0_i32_0 : i32, i32, i32
  }
  func.func @transform_1(%arg0: i32) -> (i32, i32, i32) {
    %c0_i32 = arith.constant 0 : i32
    %c0_i32_0 = arith.constant 0 : i32
    %c0_i32_1 = arith.constant 0 : i32
    return %arg0, %c0_i32, %c0_i32_0 : i32, i32, i32
  }
  func.func @transform_2(%arg0: i32) -> (i32, i32, i32) {
    %c0_i32 = arith.constant 0 : i32
    %c0_i32_0 = arith.constant 0 : i32
    %c0_i32_1 = arith.constant 0 : i32
    return %arg0, %c0_i32, %c0_i32_0 : i32, i32, i32
  }
}

module attributes {stable_mosaic.version = 11 : i64} {
  func.func @_fused_linear_kernel(%arg0: i32, %arg1: memref<16x32xbf16, #tpu.memory_space<vmem>>, %arg2: memref<32x32xbf16, #tpu.memory_space<vmem>>, %arg3: memref<1x32xf32, #tpu.memory_space<vmem>>, %arg4: memref<16x32xf32, #tpu.memory_space<vmem>>, %arg5: memref<16x32xf32, #tpu.memory_space<vmem>>) attributes {dimension_semantics = [#tpu.dimension_semantics<parallel>], iteration_bounds = array<i64: 2>, scalar_prefetch = 0 : i64, scratch_operands = 0 : i64, tpu.core_type = #tpu.core_type<tc>, window_params = [{transform_indices = @transform_0, window_bounds = array<i64: 16, 32>}, {pipeline_mode = #tpu.pipeline_mode<synchronous>, transform_indices = @transform_1, window_bounds = array<i64: 32, 32>}, {pipeline_mode = #tpu.pipeline_mode<synchronous>, transform_indices = @transform_2, window_bounds = array<i64: 1, 32>}, {transform_indices = @transform_3, window_bounds = array<i64: 16, 32>}, {transform_indices = @transform_4, window_bounds = array<i64: 16, 32>}]} {
    %c0 = arith.constant 0 : index
    %c0_0 = arith.constant 0 : index
    %0 = vector.load %arg1[%c0, %c0_0] : memref<16x32xbf16, #tpu.memory_space<vmem>>, vector<16x32xbf16>
    %c0_1 = arith.constant 0 : index
    %c0_2 = arith.constant 0 : index
    %1 = vector.load %arg2[%c0_1, %c0_2] : memref<32x32xbf16, #tpu.memory_space<vmem>>, vector<32x32xbf16>
    %cst = arith.constant dense<0.000000e+00> : vector<16x32xf32>
    %2 = tpu.matmul %0, %1, %cst {dimension_numbers = #tpu.dot_dimension_numbers<[1], [0], [0], [1], [0, 0, 1, 1], [], []>} : vector<16x32xbf16>, vector<32x32xbf16>, vector<16x32xf32> -> vector<16x32xf32>
    %c0_3 = arith.constant 0 : index
    %c0_4 = arith.constant 0 : index
    %3 = vector.load %arg3[%c0_3, %c0_4] : memref<1x32xf32, #tpu.memory_space<vmem>>, vector<1x32xf32>
    %4 = vector.broadcast %3 : vector<1x32xf32> to vector<16x32xf32>
    %5 = arith.addf %2, %4 : vector<16x32xf32>
    %c0_5 = arith.constant 0 : index
    %c0_6 = arith.constant 0 : index
    %6 = vector.load %arg4[%c0_5, %c0_6] : memref<16x32xf32, #tpu.memory_space<vmem>>, vector<16x32xf32>
    %7 = arith.addf %5, %6 : vector<16x32xf32>
    %c0_7 = arith.constant 0 : index
    %c0_8 = arith.constant 0 : index
    %8 = vector.load %arg5[%c0_7, %c0_8] : memref<16x32xf32, #tpu.memory_space<vmem>>, vector<16x32xf32>
    tpu.vector_store %arg5[%c0_7, %c0_8], %7 {strides = array<i32>} : memref<16x32xf32, #tpu.memory_space<vmem>>, vector<16x32xf32>,
    return
  }
  func.func @transform_0(%arg0: i32) -> (i32, i32) {
    %c0_i32 = arith.constant 0 : i32
    %c0_i32_0 = arith.constant 0 : i32
    return %arg0, %c0_i32 : i32, i32
  }
  func.func @transform_1(%arg0: i32) -> (i32, i32) {
    %c0_i32 = arith.constant 0 : i32
    %c0_i32_0 = arith.constant 0 : i32
    %c0_i32_1 = arith.constant 0 : i32
    return %c0_i32, %c0_i32_0 : i32, i32
  }
  func.func @transform_2(%arg0: i32) -> (i32, i32) {
    %c0_i32 = arith.constant 0 : i32
    %c0_i32_0 = arith.constant 0 : i32
    %c0_i32_1 = arith.constant 0 : i32
    return %c0_i32, %c0_i32_0 : i32, i32
  }
  func.func @transform_3(%arg0: i32) -> (i32, i32) {
    %c0_i32 = arith.constant 0 : i32
    %c0_i32_0 = arith.constant 0 : i32
    return %arg0, %c0_i32 : i32, i32
  }
  func.func @transform_4(%arg0: i32) -> (i32, i32) {
    %c0_i32 = arith.constant 0 : i32
    %c0_i32_0 = arith.constant 0 : i32
    return %arg0, %c0_i32 : i32, i32
  }
}

module attributes {stable_mosaic.version = 11 : i64} {
  func.func @_fused_linear_kernel(%arg0: i32, %arg1: memref<16x32xf32, #tpu.memory_space<vmem>>, %arg2: memref<1x32xf32, #tpu.memory_space<vmem>>, %arg3: memref<1x32xf32, #tpu.memory_space<vmem>>, %arg4: memref<32x128xbf16, #tpu.memory_space<vmem>>, %arg5: memref<1x128xf32, #tpu.memory_space<vmem>>, %arg6: memref<16x128xbf16, #tpu.memory_space<vmem>>) attributes {dimension_semantics = [#tpu.dimension_semantics<parallel>], iteration_bounds = array<i64: 2>, scalar_prefetch = 0 : i64, scratch_operands = 0 : i64, tpu.core_type = #tpu.core_type<tc>, window_params = [{transform_indices = @transform_0, window_bounds = array<i64: 16, 32>}, {pipeline_mode = #tpu.pipeline_mode<synchronous>, transform_indices = @transform_1, window_bounds = array<i64: 1, 32>}, {pipeline_mode = #tpu.pipeline_mode<synchronous>, transform_indices = @transform_2, window_bounds = array<i64: 1, 32>}, {pipeline_mode = #tpu.pipeline_mode<synchronous>, transform_indices = @transform_3, window_bounds = array<i64: 32, 128>}, {pipeline_mode = #tpu.pipeline_mode<synchronous>, transform_indices = @transform_4, window_bounds = array<i64: 1, 128>}, {transform_indices = @transform_5, window_bounds = array<i64: 16, 128>}]} {
    %c0 = arith.constant 0 : index
    %c0_0 = arith.constant 0 : index
    %0 = vector.load %arg1[%c0, %c0_0] : memref<16x32xf32, #tpu.memory_space<vmem>>, vector<16x32xf32>
    %cst = arith.constant dense<0.000000e+00> : vector<16xf32>
    %1 = vector.multi_reduction <add>, %0, %cst [1] : vector<16x32xf32> to vector<16xf32>
    %2 = vector.shape_cast %1 : vector<16xf32> to vector<16x1xf32>
    %cst_1 = arith.constant 3.200000e+01 : f32
    %3 = vector.broadcast %cst_1 : f32 to vector<16x1xf32>
    %4 = arith.divf %2, %3 : vector<16x1xf32>
    %5 = vector.broadcast %4 : vector<16x1xf32> to vector<16x32xf32>
    %6 = arith.subf %0, %5 : vector<16x32xf32>
    %7 = arith.mulf %6, %6 : vector<16x32xf32>
    %cst_2 = arith.constant dense<0.000000e+00> : vector<16xf32>
    %8 = vector.multi_reduction <add>, %7, %cst_2 [1] : vector<16x32xf32> to vector<16xf32>
    %9 = vector.shape_cast %8 : vector<16xf32> to vector<16x1xf32>
    %cst_3 = arith.constant 3.200000e+01 : f32
    %10 = vector.broadcast %cst_3 : f32 to vector<16x1xf32>
    %11 = arith.divf %9, %10 : vector<16x1xf32>
    %cst_4 = arith.constant 9.99999996E-13 : f32
    %12 = vector.broadcast %cst_4 : f32 to vector<16x1xf32>
    %13 = arith.addf %11, %12 : vector<16x1xf32>
    %14 = math.rsqrt %13 : vector<16x1xf32>
    %15 = vector.broadcast %14 : vector<16x1xf32> to vector<16x32xf32>
    %16 = arith.mulf %6, %15 : vector<16x32xf32>
    %c0_5 = arith.constant 0 : index
    %c0_6 = arith.constant 0 : index
    %17 = vector.load %arg2[%c0_5, %c0_6] : memref<1x32xf32, #tpu.memory_space<vmem>>, vector<1x32xf32>
    %18 = vector.broadcast %17 : vector<1x32xf32> to vector<16x32xf32>
    %19 = arith.mulf %16, %18 : vector<16x32xf32>
    %c0_7 = arith.constant 0 : index
    %c0_8 = arith.constant 0 : index
    %20 = vector.load %arg3[%c0_7, %c0_8] : memref<1x32xf32, #tpu.memory_space<vmem>>, vector<1x32xf32>
    %21 = vector.broadcast %20 : vector<1x32xf32> to vector<16x32xf32>
    %22 = arith.addf %19, %21 : vector<16x32xf32>
    %23 = arith.truncf %22 : vector<16x32xf32> to vector<16x32xbf16>
    %c0_9 = arith.constant 0 : index
    %c0_10 = arith.constant 0 : index
    %24 = vector.load %arg4[%c0_9, %c0_10] : memref<32x128xbf16, #tpu.memory_space<vmem>>, vector<32x128xbf16>
    %cst_11 = arith.constant dense<0.000000e+00> : vector<16x128xf32>
    %25 = tpu.matmul %23, %24, %cst_11 {dimension_numbers = #tpu.dot_dimension_numbers<[1], [0], [0], [1], [0, 0, 1, 1], [], []>} : vector<16x32xbf16>, vector<32x128xbf16>, vector<16x128xf32> -> vector<16x128xf32>
    %c0_12 = arith.constant 0 : index
    %c0_13 = arith.constant 0 : index
    %26 = vector.load %arg5[%c0_12, %c0_13] : memref<1x128xf32, #tpu.memory_space<vmem>>, vector<1x128xf32>
    %27 = vector.broadcast %26 : vector<1x128xf32> to vector<16x128xf32>
    %28 = arith.addf %25, %27 : vector<16x128xf32>
    %cst_14 = arith.constant 5.000000e-01 : f32
    %29 = vector.broadcast %cst_14 : f32 to vector<16x128xf32>
    %30 = arith.mulf %29, %28 : vector<16x128xf32>
    %cst_15 = arith.constant 4.471500e-02 : f32
    %31 = vector.broadcast %cst_15 : f32 to vector<16x128xf32>
    %32 = arith.mulf %31, %28 : vector<16x128xf32>
    %33 = arith.mulf %32, %28 : vector<16x128xf32>
    %34 = arith.mulf %33, %28 : vector<16x128xf32>
    %35 = arith.addf %28, %34 : vector<16x128xf32>
    %cst_16 = arith.constant 0.797884583 : f32
    %36 = vector.broadcast %cst_16 : f32 to vector<16x128xf32>
    %37 = arith.mulf %36, %35 : vector<16x128xf32>
    %38 = math.tanh %37 : vector<16x128xf32>
    %cst_17 = arith.constant 1.000000e+00 : f32
    %39 = vector.broadcast %cst_17 : f32 to vector<16x128xf32>
    %40 = arith.addf %39, %38 : vector<16x128xf32>
    %41 = arith.mulf %30, %40 : vector<16x128xf32>
    %42 = arith.truncf %41 : vector<16x128xf32> to vector<16x128xbf16>
    %c0_18 = arith.constant 0 : index
    %c0_19 = arith.constant 0 : index
    %43 = vector.load %arg6[%c0_18, %c0_19] : memref<16x128xbf16, #tpu.memory_space<vmem>>, vector<16x128xbf16>
    tpu.vector_store %arg6[%c0_18, %c0_19], %42 {strides = array<i32>} : memref<16x128xbf16, #tpu.memory_space<vmem>>, vector<16x128xbf16>,
    return
  }
  func.func @transform_0(%arg0: i32) -> (i32, i32) {
    %c0_i32 = arith.constant 0 : i32
    %c0_i32_0 = arith.constant 0 : i32
    return %arg0, %c0_i32 : i32, i32
  }
  func.func @transform_1(%arg0: i32) -> (i32, i32) {
    %c0_i32 = arith.constant 0 : i32
    %c0_i32_0 = arith.constant 0 : i32
    %c0_i32_1 = arith.constant 0 : i32
    return %c0_i32, %c0_i32_0 : i32, i32
  }
  func.func @transform_2(%arg0: i32) -> (i32, i32) {
    %c0_i32 = arith.constant 0 : i32
    %c0_i32_0 = arith.constant 0 : i32
    %c0_i32_1 = arith.constant 0 : i32
    return %c0_i32, %c0_i32_0 : i32, i32
  }
  func.func @transform_3(%arg0: i32) -> (i32, i32) {
    %c0_i32 = arith.constant 0 : i32
    %c0_i32_0 = arith.constant 0 : i32
    %c0_i32_1 = arith.constant 0 : i32
    return %c0_i32, %c0_i32_0 : i32, i32
  }
  func.func @transform_4(%arg0: i32) -> (i32, i32) {
    %c0_i32 = arith.constant 0 : i32
    %c0_i32_0 = arith.constant 0 : i32
    %c0_i32_1 = arith.constant 0 : i32
    return %c0_i32, %c0_i32_0 : i32, i32
  }
  func.func @transform_5(%arg0: i32) -> (i32, i32) {
    %c0_i32 = arith.constant 0 : i32
    %c0_i32_0 = arith.constant 0 : i32
    return %arg0, %c0_i32 : i32, i32
  }
}

module attributes {stable_mosaic.version = 11 : i64} {
  func.func @_fused_linear_kernel(%arg0: i32, %arg1: memref<16x64xbf16, #tpu.memory_space<vmem>>, %arg2: memref<64x32xbf16, #tpu.memory_space<vmem>>, %arg3: memref<1x32xf32, #tpu.memory_space<vmem>>, %arg4: memref<16x32xf32, #tpu.memory_space<vmem>>, %arg5: memref<16x32xf32, #tpu.memory_space<vmem>>) attributes {dimension_semantics = [#tpu.dimension_semantics<parallel>], iteration_bounds = array<i64: 2>, scalar_prefetch = 0 : i64, scratch_operands = 0 : i64, tpu.core_type = #tpu.core_type<tc>, window_params = [{transform_indices = @transform_0, window_bounds = array<i64: 16, 64>}, {pipeline_mode = #tpu.pipeline_mode<synchronous>, transform_indices = @transform_1, window_bounds = array<i64: 64, 32>}, {pipeline_mode = #tpu.pipeline_mode<synchronous>, transform_indices = @transform_2, window_bounds = array<i64: 1, 32>}, {transform_indices = @transform_3, window_bounds = array<i64: 16, 32>}, {transform_indices = @transform_4, window_bounds = array<i64: 16, 32>}]} {
    %c0 = arith.constant 0 : index
    %c0_0 = arith.constant 0 : index
    %0 = vector.load %arg1[%c0, %c0_0] : memref<16x64xbf16, #tpu.memory_space<vmem>>, vector<16x64xbf16>
    %c0_1 = arith.constant 0 : index
    %c0_2 = arith.constant 0 : index
    %1 = vector.load %arg2[%c0_1, %c0_2] : memref<64x32xbf16, #tpu.memory_space<vmem>>, vector<64x32xbf16>
    %cst = arith.constant dense<0.000000e+00> : vector<16x32xf32>
    %2 = tpu.matmul %0, %1, %cst {dimension_numbers = #tpu.dot_dimension_numbers<[1], [0], [0], [1], [0, 0, 1, 1], [], []>} : vector<16x64xbf16>, vector<64x32xbf16>, vector<16x32xf32> -> vector<16x32xf32>
    %c0_3 = arith.constant 0 : index
    %c0_4 = arith.constant 0 : index
    %3 = vector.load %arg3[%c0_3, %c0_4] : memref<1x32xf32, #tpu.memory_space<vmem>>, vector<1x32xf32>
    %4 = vector.broadcast %3 : vector<1x32xf32> to vector<16x32xf32>
    %5 = arith.addf %2, %4 : vector<16x32xf32>
    %c0_5 = arith.constant 0 : index
    %c0_6 = arith.constant 0 : index
    %6 = vector.load %arg4[%c0_5, %c0_6] : memref<16x32xf32, #tpu.memory_space<vmem>>, vector<16x32xf32>
    %7 = arith.addf %5, %6 : vector<16x32xf32>
    %c0_7 = arith.constant 0 : index
    %c0_8 = arith.constant 0 : index
    %8 = vector.load %arg5[%c0_7, %c0_8] : memref<16x32xf32, #tpu.memory_space<vmem>>, vector<16x32xf32>
    tpu.vector_store %arg5[%c0_7, %c0_8], %7 {strides = array<i32>} : memref<16x32xf32, #tpu.memory_space<vmem>>, vector<16x32xf32>,
    return
  }
  func.func @transform_0(%arg0: i32) -> (i32, i32) {
    %c0_i32 = arith.constant 0 : i32
    %c0_i32_0 = arith.constant 0 : i32
    return %arg0, %c0_i32 : i32, i32
  }
  func.func @transform_1(%arg0: i32) -> (i32, i32) {
    %c0_i32 = arith.constant 0 : i32
    %c0_i32_0 = arith.constant 0 : i32
    %c0_i32_1 = arith.constant 0 : i32
    return %c0_i32, %c0_i32_0 : i32, i32
  }
  func.func @transform_2(%arg0: i32) -> (i32, i32) {
    %c0_i32 = arith.constant 0 : i32
    %c0_i32_0 = arith.constant 0 : i32
    %c0_i32_1 = arith.constant 0 : i32
    return %c0_i32, %c0_i32_0 : i32, i32
  }
  func.func @transform_3(%arg0: i32) -> (i32, i32) {
    %c0_i32 = arith.constant 0 : i32
    %c0_i32_0 = arith.constant 0 : i32
    return %arg0, %c0_i32 : i32, i32
  }
  func.func @transform_4(%arg0: i32) -> (i32, i32) {
    %c0_i32 = arith.constant 0 : i32
    %c0_i32_0 = arith.constant 0 : i32
    return %arg0, %c0_i32 : i32, i32
  }
}

module attributes {stable_mosaic.version = 11 : i64} {
  func.func @_fused_linear_kernel(%arg0: i32, %arg1: memref<2x32xf32, #tpu.memory_space<vmem>>, %arg2: memref<1x32xf32, #tpu.memory_space<vmem>>, %arg3: memref<1x32xf32, #tpu.memory_space<vmem>>, %arg4: memref<32x128xbf16, #tpu.memory_space<vmem>>, %arg5: memref<1x128xf32, #tpu.memory_space<vmem>>, %arg6: memref<2x128xf32, #tpu.memory_space<vmem>>) attributes {dimension_semantics = [#tpu.dimension_semantics<parallel>], iteration_bounds = array<i64: 1>, scalar_prefetch = 0 : i64, scratch_operands = 0 : i64, tpu.core_type = #tpu.core_type<tc>, window_params = [{transform_indices = @transform_0, window_bounds = array<i64: 2, 32>}, {pipeline_mode = #tpu.pipeline_mode<synchronous>, transform_indices = @transform_1, window_bounds = array<i64: 1, 32>}, {pipeline_mode = #tpu.pipeline_mode<synchronous>, transform_indices = @transform_2, window_bounds = array<i64: 1, 32>}, {pipeline_mode = #tpu.pipeline_mode<synchronous>, transform_indices = @transform_3, window_bounds = array<i64: 32, 128>}, {pipeline_mode = #tpu.pipeline_mode<synchronous>, transform_indices = @transform_4, window_bounds = array<i64: 1, 128>}, {transform_indices = @transform_5, window_bounds = array<i64: 2, 128>}]} {
    %c0 = arith.constant 0 : index
    %c0_0 = arith.constant 0 : index
    %0 = vector.load %arg1[%c0, %c0_0] : memref<2x32xf32, #tpu.memory_space<vmem>>, vector<2x32xf32>
    %cst = arith.constant dense<0.000000e+00> : vector<2xf32>
    %1 = vector.multi_reduction <add>, %0, %cst [1] : vector<2x32xf32> to vector<2xf32>
    %2 = vector.shape_cast %1 : vector<2xf32> to vector<2x1xf32>
    %cst_1 = arith.constant 3.200000e+01 : f32
    %3 = vector.broadcast %cst_1 : f32 to vector<2x1xf32>
    %4 = arith.divf %2, %3 : vector<2x1xf32>
    %5 = vector.broadcast %4 : vector<2x1xf32> to vector<2x32xf32>
    %6 = arith.subf %0, %5 : vector<2x32xf32>
    %7 = arith.mulf %6, %6 : vector<2x32xf32>
    %cst_2 = arith.constant dense<0.000000e+00> : vector<2xf32>
    %8 = vector.multi_reduction <add>, %7, %cst_2 [1] : vector<2x32xf32> to vector<2xf32>
    %9 = vector.shape_cast %8 : vector<2xf32> to vector<2x1xf32>
    %cst_3 = arith.constant 3.200000e+01 : f32
    %10 = vector.broadcast %cst_3 : f32 to vector<2x1xf32>
    %11 = arith.divf %9, %10 : vector<2x1xf32>
    %cst_4 = arith.constant 9.99999996E-13 : f32
    %12 = vector.broadcast %cst_4 : f32 to vector<2x1xf32>
    %13 = arith.addf %11, %12 : vector<2x1xf32>
    %14 = math.rsqrt %13 : vector<2x1xf32>
    %15 = vector.broadcast %14 : vector<2x1xf32> to vector<2x32xf32>
    %16 = arith.mulf %6, %15 : vector<2x32xf32>
    %c0_5 = arith.constant 0 : index
    %c0_6 = arith.constant 0 : index
    %17 = vector.load %arg2[%c0_5, %c0_6] : memref<1x32xf32, #tpu.memory_space<vmem>>, vector<1x32xf32>
    %18 = vector.broadcast %17 : vector<1x32xf32> to vector<2x32xf32>
    %19 = arith.mulf %16, %18 : vector<2x32xf32>
    %c0_7 = arith.constant 0 : index
    %c0_8 = arith.constant 0 : index
    %20 = vector.load %arg3[%c0_7, %c0_8] : memref<1x32xf32, #tpu.memory_space<vmem>>, vector<1x32xf32>
    %21 = vector.broadcast %20 : vector<1x32xf32> to vector<2x32xf32>
    %22 = arith.addf %19, %21 : vector<2x32xf32>
    %23 = arith.truncf %22 : vector<2x32xf32> to vector<2x32xbf16>
    %c0_9 = arith.constant 0 : index
    %c0_10 = arith.constant 0 : index
    %24 = vector.load %arg4[%c0_9, %c0_10] : memref<32x128xbf16, #tpu.memory_space<vmem>>, vector<32x128xbf16>
    %cst_11 = arith.constant dense<0.000000e+00> : vector<2x128xf32>
    %25 = tpu.matmul %23, %24, %cst_11 {dimension_numbers = #tpu.dot_dimension_numbers<[1], [0], [0], [1], [0, 0, 1, 1], [], []>} : vector<2x32xbf16>, vector<32x128xbf16>, vector<2x128xf32> -> vector<2x128xf32>
    %c0_12 = arith.constant 0 : index
    %c0_13 = arith.constant 0 : index
    %26 = vector.load %arg5[%c0_12, %c0_13] : memref<1x128xf32, #tpu.memory_space<vmem>>, vector<1x128xf32>
    %27 = vector.broadcast %26 : vector<1x128xf32> to vector<2x128xf32>
    %28 = arith.addf %25, %27 : vector<2x128xf32>
    %29 = math.tanh %28 : vector<2x128xf32>
    %c0_14 = arith.constant 0 : index
    %c0_15 = arith.constant 0 : index
    %30 = vector.load %arg6[%c0_14, %c0_15] : memref<2x128xf32, #tpu.memory_space<vmem>>, vector<2x128xf32>
    tpu.vector_store %arg6[%c0_14, %c0_15], %29 {strides = array<i32>} : memref<2x128xf32, #tpu.memory_space<vmem>>, vector<2x128xf32>,
    return
  }
  func.func @transform_0(%arg0: i32) -> (i32, i32) {
    %c0_i32 = arith.constant 0 : i32
    %c0_i32_0 = arith.constant 0 : i32
    return %arg0, %c0_i32 : i32, i32
  }
  func.func @transform_1(%arg0: i32) -> (i32, i32) {
    %c0_i32 = arith.constant 0 : i32
    %c0_i32_0 = arith.constant 0 : i32
    %c0_i32_1 = arith.constant 0 : i32
    return %c0_i32, %c0_i32_0 : i32, i32
  }
  func.func @transform_2(%arg0: i32) -> (i32, i32) {
    %c0_i32 = arith.constant 0 : i32
    %c0_i32_0 = arith.constant 0 : i32
    %c0_i32_1 = arith.constant 0 : i32
    return %c0_i32, %c0_i32_0 : i32, i32
  }
  func.func @transform_3(%arg0: i32) -> (i32, i32) {
    %c0_i32 = arith.constant 0 : i32
    %c0_i32_0 = arith.constant 0 : i32
    %c0_i32_1 = arith.constant 0 : i32
    return %c0_i32, %c0_i32_0 : i32, i32
  }
  func.func @transform_4(%arg0: i32) -> (i32, i32) {
    %c0_i32 = arith.constant 0 : i32
    %c0_i32_0 = arith.constant 0 : i32
    %c0_i32_1 = arith.constant 0 : i32
    return %c0_i32, %c0_i32_0 : i32, i32
  }
  func.func @transform_5(%arg0: i32) -> (i32, i32) {
    %c0_i32 = arith.constant 0 : i32
    %c0_i32_0 = arith.constant 0 : i32
    return %arg0, %c0_i32 : i32, i32
  }
}

module attributes {stable_mosaic.version = 11 : i64} {
  func.func @_fused_linear_kernel(%arg0: i32, %arg1: memref<2x64xf32, #tpu.memory_space<vmem>>, %arg2: memref<1x64xf32, #tpu.memory_space<vmem>>, %arg3: memref<1x64xf32, #tpu.memory_space<vmem>>, %arg4: memref<64x128xbf16, #tpu.memory_space<vmem>>, %arg5: memref<1x128xf32, #tpu.memory_space<vmem>>, %arg6: memref<2x128xf32, #tpu.memory_space<vmem>>) attributes {dimension_semantics = [#tpu.dimension_semantics<parallel>], iteration_bounds = array<i64: 1>, scalar_prefetch = 0 : i64, scratch_operands = 0 : i64, tpu.core_type = #tpu.core_type<tc>, window_params = [{transform_indices = @transform_0, window_bounds = array<i64: 2, 64>}, {pipeline_mode = #tpu.pipeline_mode<synchronous>, transform_indices = @transform_1, window_bounds = array<i64: 1, 64>}, {pipeline_mode = #tpu.pipeline_mode<synchronous>, transform_indices = @transform_2, window_bounds = array<i64: 1, 64>}, {pipeline_mode = #tpu.pipeline_mode<synchronous>, transform_indices = @transform_3, window_bounds = array<i64: 64, 128>}, {pipeline_mode = #tpu.pipeline_mode<synchronous>, transform_indices = @transform_4, window_bounds = array<i64: 1, 128>}, {transform_indices = @transform_5, window_bounds = array<i64: 2, 128>}]} {
    %c0 = arith.constant 0 : index
    %c0_0 = arith.constant 0 : index
    %0 = vector.load %arg1[%c0, %c0_0] : memref<2x64xf32, #tpu.memory_space<vmem>>, vector<2x64xf32>
    %cst = arith.constant dense<0.000000e+00> : vector<2xf32>
    %1 = vector.multi_reduction <add>, %0, %cst [1] : vector<2x64xf32> to vector<2xf32>
    %2 = vector.shape_cast %1 : vector<2xf32> to vector<2x1xf32>
    %cst_1 = arith.constant 6.400000e+01 : f32
    %3 = vector.broadcast %cst_1 : f32 to vector<2x1xf32>
    %4 = arith.divf %2, %3 : vector<2x1xf32>
    %5 = vector.broadcast %4 : vector<2x1xf32> to vector<2x64xf32>
    %6 = arith.subf %0, %5 : vector<2x64xf32>
    %7 = arith.mulf %6, %6 : vector<2x64xf32>
    %cst_2 = arith.constant dense<0.000000e+00> : vector<2xf32>
    %8 = vector.multi_reduction <add>, %7, %cst_2 [1] : vector<2x64xf32> to vector<2xf32>
    %9 = vector.shape_cast %8 : vector<2xf32> to vector<2x1xf32>
    %cst_3 = arith.constant 6.400000e+01 : f32
    %10 = vector.broadcast %cst_3 : f32 to vector<2x1xf32>
    %11 = arith.divf %9, %10 : vector<2x1xf32>
    %cst_4 = arith.constant 9.99999974E-6 : f32
    %12 = vector.broadcast %cst_4 : f32 to vector<2x1xf32>
    %13 = arith.addf %11, %12 : vector<2x1xf32>
    %14 = math.rsqrt %13 : vector<2x1xf32>
    %15 = vector.broadcast %14 : vector<2x1xf32> to vector<2x64xf32>
    %16 = arith.mulf %6, %15 : vector<2x64xf32>
    %c0_5 = arith.constant 0 : index
    %c0_6 = arith.constant 0 : index
    %17 = vector.load %arg2[%c0_5, %c0_6] : memref<1x64xf32, #tpu.memory_space<vmem>>, vector<1x64xf32>
    %18 = vector.broadcast %17 : vector<1x64xf32> to vector<2x64xf32>
    %19 = arith.mulf %16, %18 : vector<2x64xf32>
    %c0_7 = arith.constant 0 : index
    %c0_8 = arith.constant 0 : index
    %20 = vector.load %arg3[%c0_7, %c0_8] : memref<1x64xf32, #tpu.memory_space<vmem>>, vector<1x64xf32>
    %21 = vector.broadcast %20 : vector<1x64xf32> to vector<2x64xf32>
    %22 = arith.addf %19, %21 : vector<2x64xf32>
    %cst_9 = arith.constant 5.000000e-01 : f32
    %23 = vector.broadcast %cst_9 : f32 to vector<2x64xf32>
    %24 = arith.mulf %23, %22 : vector<2x64xf32>
    %cst_10 = arith.constant 4.471500e-02 : f32
    %25 = vector.broadcast %cst_10 : f32 to vector<2x64xf32>
    %26 = arith.mulf %25, %22 : vector<2x64xf32>
    %27 = arith.mulf %26, %22 : vector<2x64xf32>
    %28 = arith.mulf %27, %22 : vector<2x64xf32>
    %29 = arith.addf %22, %28 : vector<2x64xf32>
    %cst_11 = arith.constant 0.797884583 : f32
    %30 = vector.broadcast %cst_11 : f32 to vector<2x64xf32>
    %31 = arith.mulf %30, %29 : vector<2x64xf32>
    %32 = math.tanh %31 : vector<2x64xf32>
    %cst_12 = arith.constant 1.000000e+00 : f32
    %33 = vector.broadcast %cst_12 : f32 to vector<2x64xf32>
    %34 = arith.addf %33, %32 : vector<2x64xf32>
    %35 = arith.mulf %24, %34 : vector<2x64xf32>
    %36 = arith.truncf %35 : vector<2x64xf32> to vector<2x64xbf16>
    %c0_13 = arith.constant 0 : index
    %c0_14 = arith.constant 0 : index
    %37 = vector.load %arg4[%c0_13, %c0_14] : memref<64x128xbf16, #tpu.memory_space<vmem>>, vector<64x128xbf16>
    %cst_15 = arith.constant dense<0.000000e+00> : vector<2x128xf32>
    %38 = tpu.matmul %36, %37, %cst_15 {dimension_numbers = #tpu.dot_dimension_numbers<[1], [0], [0], [1], [0, 0, 1, 1], [], []>} : vector<2x64xbf16>, vector<64x128xbf16>, vector<2x128xf32> -> vector<2x128xf32>
    %c0_16 = arith.constant 0 : index
    %c0_17 = arith.constant 0 : index
    %39 = vector.load %arg5[%c0_16, %c0_17] : memref<1x128xf32, #tpu.memory_space<vmem>>, vector<1x128xf32>
    %40 = vector.broadcast %39 : vector<1x128xf32> to vector<2x128xf32>
    %41 = arith.addf %38, %40 : vector<2x128xf32>
    %c0_18 = arith.constant 0 : index
    %c0_19 = arith.constant 0 : index
    %42 = vector.load %arg6[%c0_18, %c0_19] : memref<2x128xf32, #tpu.memory_space<vmem>>, vector<2x128xf32>
    tpu.vector_store %arg6[%c0_18, %c0_19], %41 {strides = array<i32>} : memref<2x128xf32, #tpu.memory_space<vmem>>, vector<2x128xf32>,
    return
  }
  func.func @transform_0(%arg0: i32) -> (i32, i32) {
    %c0_i32 = arith.constant 0 : i32
    %c0_i32_0 = arith.constant 0 : i32
    return %arg0, %c0_i32 : i32, i32
  }
  func.func @transform_1(%arg0: i32) -> (i32, i32) {
    %c0_i32 = arith.constant 0 : i32
    %c0_i32_0 = arith.constant 0 : i32
    %c0_i32_1 = arith.constant 0 : i32
    return %c0_i32, %c0_i32_0 : i32, i32
  }
  func.func @transform_2(%arg0: i32) -> (i32, i32) {
    %c0_i32 = arith.constant 0 : i32
    %c0_i32_0 = arith.constant 0 : i32
    %c0_i32_1 = arith.constant 0 : i32
    return %c0_i32, %c0_i32_0 : i32, i32
  }
  func.func @transform_3(%arg0: i32) -> (i32, i32) {
    %c0_i32 = arith.constant 0 : i32
    %c0_i32_0 = arith.constant 0 : i32
    %c0_i32_1 = arith.constant 0 : i32
    return %c0_i32, %c0_i32_0 : i32, i32
  }
  func.func @transform_4(%arg0: i32) -> (i32, i32) {
    %c0_i32 = arith.constant 0 : i32
    %c0_i32_0 = arith.constant 0 : i32
    %c0_i32_1 = arith.constant 0 : i32
    return %c0_i32, %c0_i32_0 : i32, i32
  }
  func.func @transform_5(%arg0: i32) -> (i32, i32) {
    %c0_i32 = arith.constant 0 : i32
    %c0_i32_0 = arith.constant 0 : i32
    return %arg0, %c0_i32 : i32, i32
  }
}

module attributes {stable_mosaic.version = 11 : i64} {
  func.func @_fused_linear_kernel(%arg0: i32, %arg1: memref<2x32xf32, #tpu.memory_space<vmem>>, %arg2: memref<32x128xbf16, #tpu.memory_space<vmem>>, %arg3: memref<1x128xf32, #tpu.memory_space<vmem>>, %arg4: memref<2x128xf32, #tpu.memory_space<vmem>>) attributes {dimension_semantics = [#tpu.dimension_semantics<parallel>], iteration_bounds = array<i64: 1>, scalar_prefetch = 0 : i64, scratch_operands = 0 : i64, tpu.core_type = #tpu.core_type<tc>, window_params = [{transform_indices = @transform_0, window_bounds = array<i64: 2, 32>}, {pipeline_mode = #tpu.pipeline_mode<synchronous>, transform_indices = @transform_1, window_bounds = array<i64: 32, 128>}, {pipeline_mode = #tpu.pipeline_mode<synchronous>, transform_indices = @transform_2, window_bounds = array<i64: 1, 128>}, {transform_indices = @transform_3, window_bounds = array<i64: 2, 128>}]} {
    %c0 = arith.constant 0 : index
    %c0_0 = arith.constant 0 : index
    %0 = vector.load %arg1[%c0, %c0_0] : memref<2x32xf32, #tpu.memory_space<vmem>>, vector<2x32xf32>
    %1 = arith.truncf %0 : vector<2x32xf32> to vector<2x32xbf16>
    %c0_1 = arith.constant 0 : index
    %c0_2 = arith.constant 0 : index
    %2 = vector.load %arg2[%c0_1, %c0_2] : memref<32x128xbf16, #tpu.memory_space<vmem>>, vector<32x128xbf16>
    %cst = arith.constant dense<0.000000e+00> : vector<2x128xf32>
    %3 = tpu.matmul %1, %2, %cst {dimension_numbers = #tpu.dot_dimension_numbers<[1], [0], [0], [1], [0, 0, 1, 1], [], []>} : vector<2x32xbf16>, vector<32x128xbf16>, vector<2x128xf32> -> vector<2x128xf32>
    %c0_3 = arith.constant 0 : index
    %c0_4 = arith.constant 0 : index
    %4 = vector.load %arg3[%c0_3, %c0_4] : memref<1x128xf32, #tpu.memory_space<vmem>>, vector<1x128xf32>
    %5 = vector.broadcast %4 : vector<1x128xf32> to vector<2x128xf32>
    %6 = arith.addf %3, %5 : vector<2x128xf32>
    %c0_5 = arith.constant 0 : index
    %c0_6 = arith.constant 0 : index
    %7 = vector.load %arg4[%c0_5, %c0_6] : memref<2x128xf32, #tpu.memory_space<vmem>>, vector<2x128xf32>
    tpu.vector_store %arg4[%c0_5, %c0_6], %6 {strides = array<i32>} : memref<2x128xf32, #tpu.memory_space<vmem>>, vector<2x128xf32>,
    return
  }
  func.func @transform_0(%arg0: i32) -> (i32, i32) {
    %c0_i32 = arith.constant 0 : i32
    %c0_i32_0 = arith.constant 0 : i32
    return %arg0, %c0_i32 : i32, i32
  }
  func.func @transform_1(%arg0: i32) -> (i32, i32) {
    %c0_i32 = arith.constant 0 : i32
    %c0_i32_0 = arith.constant 0 : i32
    %c0_i32_1 = arith.constant 0 : i32
    return %c0_i32, %c0_i32_0 : i32, i32
  }
  func.func @transform_2(%arg0: i32) -> (i32, i32) {
    %c0_i32 = arith.constant 0 : i32
    %c0_i32_0 = arith.constant 0 : i32
    %c0_i32_1 = arith.constant 0 : i32
    return %c0_i32, %c0_i32_0 : i32, i32
  }
  func.func @transform_3(%arg0: i32) -> (i32, i32) {
    %c0_i32 = arith.constant 0 : i32
    %c0_i32_0 = arith.constant 0 : i32
    return %arg0, %c0_i32 : i32, i32
  }
}

</mosaic_0001>

<llo_original>
// kernel: tpu_custom_call.1
$region0: #{tpu_custom_call.1}
  #allocation0 [shape = 'u32[]', space=smem, size = 0x4, offset = 0x4, fixed_abs, tag = 'smem constant byte address 0x4 - core index']
  #allocation1 [shape = 'u32[144,128]{1,0:T(1,128)}', space=vmem, size = 0x12000, scoped, tag = 'internal scratch']
  %s0 = inlined_call_operand.hbm [shape: f32[8,128], index: 0, kind: input, shape index: {}]
  %s1 = inlined_call_operand.hbm [shape: f32[16,128], index: 1, kind: output, shape index: {}]
  %s2 = sld [smem:[#allocation0]]
  $region41: #{tpu_custom_call.1} parent=0
    _
  %s4 = ssub.s32 1, %s2
  %s5 = scalar_select 0, %s4, %s2
  $region1: #{tpu_custom_call.1} parent=0
    #allocation2 [shape = 'u8[4096]{0}', space=vmem, size = 0x1000, scoped, tag = 'input window, operand 0, single buffered']
    #allocation3 [shape = 's32[2]{0}', space=sflag, size = 0x8, scoped, tag = 'scoped memory for tpu_custom_call.1']
    #allocation4 [shape = 's32[2]{0}', space=sflag, size = 0x8, scoped, tag = 'scoped memory for tpu_custom_call.1']
    #allocation5 [shape = 'u8[8192]{0}', space=vmem, size = 0x2000, scoped, tag = 'output window, operand 0']
    %6 = vsyncpa [#allocation3], 0
    %7 = vsyncpa [#allocation4], 0
    %s8 = scalar_lea.sflag [#allocation4], 1
    %9 = vsyncpa %s8, 0
    loop: start=0, step=1, limit=4
    $region2: #{tpu_custom_call.1} parent=1 // loop_pre_header
      _
    $region3: #{tpu_custom_call.1} parent=1 // loop_header
      %s11 = sphi 0, %s15
      %p12 = scmp.ge.s32.totalorder %s11, 4
      %s19 = sphi 0, %s19
      %s21 = sphi 0, %s19
      %s22 = sphi 0, %s21
      %s36 = sphi 0, %s22
      %s42 = sphi 0, %s44
      %s45 = sphi 0, %s42
      %s46 = sphi 0, %s45
      %s62 = sphi 0, %s46
    $region4: #{tpu_custom_call.1} parent=1 // loop_header_branch
      %14 = sbr.rel (%p12) target = $region8
    $region5: #{tpu_custom_call.1} parent=1 // loop_body
      %s16 = ssub.s32 %s11, 1
      %s17 = ssub.s32 %s11, 2
      %s18 = sadd.s32 %s11, 1
      %s20 = sadd.s32 %s19, 1
      %p23 = scmp.eq.s32.totalorder %s11, 1
      %p24 = scmp.ne.s32.totalorder %s19, %s21
      %p25 = scmp.eq.s32.totalorder %s11, 0
      %p26 = por %p24, %p25
      %p27 = scmp.ne.s32.totalorder %s19, %s21
      %p28 = scmp.eq.s32.totalorder %s16, 1
      %p29 = por %p27, %p28
      %p30 = scmp.ne.s32.totalorder %s21, %s22
      %p31 = scmp.eq.s32.totalorder %s16, 0
      %p32 = por %p30, %p31
      %p33 = scmp.ne.s32.totalorder %s21, %s22
      %p34 = scmp.eq.s32.totalorder %s17, 1
      %p35 = por %p33, %p34
      %p37 = scmp.ne.s32.totalorder %s22, %s36
      %p38 = scmp.eq.s32.totalorder %s17, 0
      %p39 = por %p37, %p38
      %s40 = ssub.s32 %s11, %s18
      %p41 = scmp.eq.s32.totalorder %s40, 0
      %s43 = sadd.s32 %s42, 1
      %s44 = scalar_select %p41, %s42, %s43
      %p47 = pneg %p41
      %p48 = scmp.eq.s32.totalorder %s11, 1
      %p49 = por %p47, %p48
      %p50 = scmp.ne.s32.totalorder %s42, %s45
      %p51 = scmp.eq.s32.totalorder %s11, 0
      %p52 = por %p50, %p51
      %p53 = scmp.ne.s32.totalorder %s42, %s45
      %p54 = scmp.eq.s32.totalorder %s16, 1
      %p55 = por %p53, %p54
      %p56 = scmp.ne.s32.totalorder %s45, %s46
      %p57 = scmp.eq.s32.totalorder %s16, 0
      %p58 = por %p56, %p57
      %p59 = scmp.ne.s32.totalorder %s45, %s46
      %p60 = scmp.eq.s32.totalorder %s17, 1
      %p61 = por %p59, %p60
      %p63 = scmp.ne.s32.totalorder %s46, %s62
      %p64 = scmp.eq.s32.totalorder %s17, 0
      %p65 = por %p63, %p64
      %p66 = scmp.le.s32.totalorder 1, %s11
      %p67 = scmp.lt.s32.totalorder %s11, 3
      %p68 = pnand %p66, %p67
      %p69 = pneg %p68
      // Predicated region
      $region9: #{tpu_custom_call.1} parent=5 // pred_check
        _
      $region10: #{tpu_custom_call.1} parent=5 // pred_check_branch
        %71 = sbr.rel (%p68) target = $region12
      $region11: #{tpu_custom_call.1} parent=5 // pred_region
        %s72 = ssub.s32 %s11, 1
        // Predicated region
        $region13: #{tpu_custom_call.1} parent=11 // pred_check
          %p73 = pneg %p32
        $region14: #{tpu_custom_call.1} parent=11 // pred_check_branch
          %75 = sbr.rel (%p73) target = $region16
        $region15: #{tpu_custom_call.1} parent=11 // pred_region
          %s77 = ssub.s32 128, 128
          %78 = vsyncadd [#allocation3], %s77
          %s80 = sshll.u32 [#allocation2], 4
          %s81 = int_to_ptr.vmem [resolvable:$true] %s80
          %83 = dma.hbm_to_vmem [thread:$0]  %s0, 128, %s81, [#allocation3]
        $region16: #{tpu_custom_call.1} parent=11 // pred_fallthru
          _
      $region12: #{tpu_custom_call.1} parent=5 // pred_fallthru
        _
      %p84 = scmp.lt.s32.totalorder %s11, 2
      // Predicated region
      $region17: #{tpu_custom_call.1} parent=5 // pred_check
        %p85 = pneg %p84
      $region18: #{tpu_custom_call.1} parent=5 // pred_check_branch
        %87 = sbr.rel (%p85) target = $region20
      $region19: #{tpu_custom_call.1} parent=5 // pred_region
        _
      $region20: #{tpu_custom_call.1} parent=5 // pred_fallthru
        _
      %p88 = scmp.le.s32.totalorder 1, %s11
      %p89 = scmp.lt.s32.totalorder %s11, 3
      %p90 = pnand %p88, %p89
      %p91 = pneg %p90
      // Predicated region
      $region21: #{tpu_custom_call.1} parent=5 // pred_check
        _
      $region22: #{tpu_custom_call.1} parent=5 // pred_check_branch
        %93 = sbr.rel (%p90) target = $region24
      $region23: #{tpu_custom_call.1} parent=5 // pred_region
        %s94 = ssub.s32 %s11, 1
        // Predicated region
        $region25: #{tpu_custom_call.1} parent=23 // pred_check
          %p95 = pneg %p32
        $region26: #{tpu_custom_call.1} parent=23 // pred_check_branch
          %97 = sbr.rel (%p95) target = $region28
        $region27: #{tpu_custom_call.1} parent=23 // pred_region
          %98 = dma.done [#allocation3], 128
        $region28: #{tpu_custom_call.1} parent=23 // pred_fallthru
          _
        %p99 = pneg %p32
        %p100 = pneg %p29
        %p101 = pneg %p58
        %p102 = pneg %p55
        %s103 = sand.u32 %s45, 1
        %s104 = scalar_lea.sflag [#allocation4], %s103
        %s105 = sand.u32 %s45, 1
        %s106 = smul.addr %s105, 8
        %s107 = scalar_lea.vmem [#allocation5], %s106
        %v108 = vld [vmem:[#allocation2] sm:$0xff]
        %109 = vst [vmem:[%s107] sm:$0xff] %v108
        %s110 = sand.u32 %s45, 1
        %s111 = scalar_lea.sflag [#allocation4], %s110
        %s112 = sand.u32 %s45, 1
        %s113 = smul.addr %s112, 8
        %s114 = scalar_lea.vmem [#allocation5], %s113
        // Predicated region
        $region29: #{tpu_custom_call.1} parent=23 // pred_check
          %p115 = pneg %p55
        $region30: #{tpu_custom_call.1} parent=23 // pred_check_branch
          %117 = sbr.rel (%p115) target = $region32
        $region31: #{tpu_custom_call.1} parent=23 // pred_region
          %s119 = ssub.s32 128, 128
          %120 = vsyncadd %s111, %s119
          %s121 = smul.addr %s16, 128
          %s122 = scalar_lea.hbm %s1, %s121
          %s124 = sshll.u32 %s114, 4
          %s125 = int_to_ptr.vmem [resolvable:$true] %s124
          %127 = dma.vmem_to_hbm [thread:$0]  %s125, 128, %s122, %s111
        $region32: #{tpu_custom_call.1} parent=23 // pred_fallthru
          _
      $region24: #{tpu_custom_call.1} parent=5 // pred_fallthru
        _
      %p128 = scmp.le.s32.totalorder 2, %s11
      // Predicated region
      $region33: #{tpu_custom_call.1} parent=5 // pred_check
        %p129 = pneg %p128
      $region34: #{tpu_custom_call.1} parent=5 // pred_check_branch
        %131 = sbr.rel (%p129) target = $region36
      $region35: #{tpu_custom_call.1} parent=5 // pred_region
        %s132 = ssub.s32 %s11, 2
        // Predicated region
        $region37: #{tpu_custom_call.1} parent=35 // pred_check
          %p133 = pneg %p61
        $region38: #{tpu_custom_call.1} parent=35 // pred_check_branch
          %135 = sbr.rel (%p133) target = $region40
        $region39: #{tpu_custom_call.1} parent=35 // pred_region
          %s136 = sand.u32 %s46, 1
          %s137 = scalar_lea.sflag [#allocation4], %s136
          %s138 = sand.u32 %s46, 1
          %s139 = smul.addr %s138, 8
          %s140 = scalar_lea.vmem [#allocation5], %s139
          %141 = dma.done %s137, 128
        $region40: #{tpu_custom_call.1} parent=35 // pred_fallthru
          _
      $region36: #{tpu_custom_call.1} parent=5 // pred_fallthru
        _
    $region6: #{tpu_custom_call.1} parent=1 // loop_footer
      %s15 = sadd.s32 1, %s11
    $region7: #{tpu_custom_call.1} parent=1 // loop_footer_branch
      %10 = sbr.rel target = $region3
    $region8: #{tpu_custom_call.1} parent=1 // loop_exit
      _
    %142 = vsyncpa [#allocation3], 1
    %s143 = scalar_lea.sflag [#allocation3], 1
    %144 = vsyncpa %s143, 1
    %145 = vsyncpa [#allocation4], 1
    %s146 = scalar_lea.sflag [#allocation4], 1
    %147 = vsyncpa %s146, 1

// kernel: vilt_vqa_forward.16
$region0: #{vilt_vqa_forward.16}
  #allocation0 [shape = 'u32[]', space=smem, size = 0x4, offset = 0x4, fixed_abs, tag = 'smem constant byte address 0x4 - core index']
  #allocation1 [shape = 'u32[144,128]{1,0:T(1,128)}', space=vmem, size = 0x12000, scoped, tag = 'internal scratch']
  %s0 = inlined_call_operand.vmem [shape: f32[8,768], index: 0, kind: input, shape index: {}]
  %s1 = inlined_call_operand.vmem [shape: bf16[768,128], index: 1, kind: input, shape index: {}]
  %s2 = inlined_call_operand.vmem [shape: f32[1,128], index: 2, kind: input, shape index: {}]
  %s3 = inlined_call_operand.vmem [shape: f32[8,128], index: 3, kind: output, shape index: {}]
  %s4 = sld [smem:[#allocation0]]
  $region22: #{vilt_vqa_forward.16} parent=0
    _
  %s6 = ssub.s32 1, %s4
  %s7 = scalar_select 0, %s6, %s4
  // Predicated region
  $region2: #{vilt_vqa_forward.16} parent=0 // pred_check
    _
  $region3: #{vilt_vqa_forward.16} parent=0 // pred_check_branch
    %9 = sbr.rel (0) target = $region5
  $region4: #{vilt_vqa_forward.16} parent=0 // pred_region
    _
  $region5: #{vilt_vqa_forward.16} parent=0 // pred_fallthru
    _
  // Predicated region
  $region6: #{vilt_vqa_forward.16} parent=0 // pred_check
    _
  $region7: #{vilt_vqa_forward.16} parent=0 // pred_check_branch
    %11 = sbr.rel (0) target = $region9
  $region8: #{vilt_vqa_forward.16} parent=0 // pred_region
    _
  $region9: #{vilt_vqa_forward.16} parent=0 // pred_fallthru
    _
  // Predicated region
  $region10: #{vilt_vqa_forward.16} parent=0 // pred_check
    _
  $region11: #{vilt_vqa_forward.16} parent=0 // pred_check_branch
    %13 = sbr.rel (0) target = $region13
  $region12: #{vilt_vqa_forward.16} parent=0 // pred_region
    _
  $region13: #{vilt_vqa_forward.16} parent=0 // pred_fallthru
    _
  %v15 = vld [vmem:[%s0] sm:$0xff]
  %v16 = vld [vmem:[%s0 + $0x8] sm:$0xff]
  %v17 = vld [vmem:[%s0 + $0x10] sm:$0xff]
  %v18 = vld [vmem:[%s0 + $0x18] sm:$0xff]
  %v19 = vld [vmem:[%s0 + $0x20] sm:$0xff]
  %v20 = vld [vmem:[%s0 + $0x28] sm:$0xff]
  %v21 = vpack.c.bf16 %v15, %v15
  %v22 = vpack.c.bf16 %v16, %v16
  %v23 = vpack.c.bf16 %v17, %v17
  %v24 = vpack.c.bf16 %v18, %v18
  %v25 = vpack.c.bf16 %v19, %v19
  %v26 = vpack.c.bf16 %v20, %v20
  %v27 = vld [vmem:[%s1] sm:$0xf]
  %v28 = vld [vmem:[%s1 + $0x4] sm:$0xf]
  %v29 = vld [vmem:[%s1 + $0x8] sm:$0xf]
  %v30 = vld [vmem:[%s1 + $0xc] sm:$0xf]
  %v31 = vld [vmem:[%s1 + $0x10] sm:$0xf]
  %v32 = vld [vmem:[%s1 + $0x14] sm:$0xf]
  %v33 = vld [vmem:[%s1 + $0x18] sm:$0xf]
  %v34 = vld [vmem:[%s1 + $0x1c] sm:$0xf]
  %v35 = vld [vmem:[%s1 + $0x20] sm:$0xf]
  %v36 = vld [vmem:[%s1 + $0x24] sm:$0xf]
  %v37 = vld [vmem:[%s1 + $0x28] sm:$0xf]
  %v38 = vld [vmem:[%s1 + $0x2c] sm:$0xf]
  %v39 = vld [vmem:[%s1 + $0x30] sm:$0xf]
  %v40 = vld [vmem:[%s1 + $0x34] sm:$0xf]
  %v41 = vld [vmem:[%s1 + $0x38] sm:$0xf]
  %v42 = vld [vmem:[%s1 + $0x3c] sm:$0xf]
  %v43 = vld [vmem:[%s1 + $0x40] sm:$0xf]
  %v44 = vld [vmem:[%s1 + $0x44] sm:$0xf]
  %v45 = vld [vmem:[%s1 + $0x48] sm:$0xf]
  %v46 = vld [vmem:[%s1 + $0x4c] sm:$0xf]
  %v47 = vld [vmem:[%s1 + $0x50] sm:$0xf]
  %v48 = vld [vmem:[%s1 + $0x54] sm:$0xf]
  %v49 = vld [vmem:[%s1 + $0x58] sm:$0xf]
  %v50 = vld [vmem:[%s1 + $0x5c] sm:$0xf]
  %v51 = vld [vmem:[%s1 + $0x60] sm:$0xf]
  %v52 = vld [vmem:[%s1 + $0x64] sm:$0xf]
  %v53 = vld [vmem:[%s1 + $0x68] sm:$0xf]
  %v54 = vld [vmem:[%s1 + $0x6c] sm:$0xf]
  %v55 = vld [vmem:[%s1 + $0x70] sm:$0xf]
  %v56 = vld [vmem:[%s1 + $0x74] sm:$0xf]
  %v57 = vld [vmem:[%s1 + $0x78] sm:$0xf]
  %v58 = vld [vmem:[%s1 + $0x7c] sm:$0xf]
  %v59 = vld [vmem:[%s1 + $0x80] sm:$0xf]
  %v60 = vld [vmem:[%s1 + $0x84] sm:$0xf]
  %v61 = vld [vmem:[%s1 + $0x88] sm:$0xf]
  %v62 = vld [vmem:[%s1 + $0x8c] sm:$0xf]
  %v63 = vld [vmem:[%s1 + $0x90] sm:$0xf]
  %v64 = vld [vmem:[%s1 + $0x94] sm:$0xf]
  %v65 = vld [vmem:[%s1 + $0x98] sm:$0xf]
  %v66 = vld [vmem:[%s1 + $0x9c] sm:$0xf]
  %v67 = vld [vmem:[%s1 + $0xa0] sm:$0xf]
  %v68 = vld [vmem:[%s1 + $0xa4] sm:$0xf]
  %v69 = vld [vmem:[%s1 + $0xa8] sm:$0xf]
  %v70 = vld [vmem:[%s1 + $0xac] sm:$0xf]
  %v71 = vld [vmem:[%s1 + $0xb0] sm:$0xf]
  %v72 = vld [vmem:[%s1 + $0xb4] sm:$0xf]
  %v73 = vld [vmem:[%s1 + $0xb8] sm:$0xf]
  %v74 = vld [vmem:[%s1 + $0xbc] sm:$0xf]
  %v75 = vld [vmem:[%s1 + $0xc0] sm:$0xf]
  %v76 = vld [vmem:[%s1 + $0xc4] sm:$0xf]
  %v77 = vld [vmem:[%s1 + $0xc8] sm:$0xf]
  %v78 = vld [vmem:[%s1 + $0xcc] sm:$0xf]
  %v79 = vld [vmem:[%s1 + $0xd0] sm:$0xf]
  %v80 = vld [vmem:[%s1 + $0xd4] sm:$0xf]
  %v81 = vld [vmem:[%s1 + $0xd8] sm:$0xf]
  %v82 = vld [vmem:[%s1 + $0xdc] sm:$0xf]
  %v83 = vld [vmem:[%s1 + $0xe0] sm:$0xf]
  %v84 = vld [vmem:[%s1 + $0xe4] sm:$0xf]
  %v85 = vld [vmem:[%s1 + $0xe8] sm:$0xf]
  %v86 = vld [vmem:[%s1 + $0xec] sm:$0xf]
  %v87 = vld [vmem:[%s1 + $0xf0] sm:$0xf]
  %v88 = vld [vmem:[%s1 + $0xf4] sm:$0xf]
  %v89 = vld [vmem:[%s1 + $0xf8] sm:$0xf]
  %v90 = vld [vmem:[%s1 + $0xfc] sm:$0xf]
  %v91 = vld [vmem:[%s1 + $0x100] sm:$0xf]
  %v92 = vld [vmem:[%s1 + $0x104] sm:$0xf]
  %v93 = vld [vmem:[%s1 + $0x108] sm:$0xf]
  %v94 = vld [vmem:[%s1 + $0x10c] sm:$0xf]
  %v95 = vld [vmem:[%s1 + $0x110] sm:$0xf]
  %v96 = vld [vmem:[%s1 + $0x114] sm:$0xf]
  %v97 = vld [vmem:[%s1 + $0x118] sm:$0xf]
  %v98 = vld [vmem:[%s1 + $0x11c] sm:$0xf]
  %v99 = vld [vmem:[%s1 + $0x120] sm:$0xf]
  %v100 = vld [vmem:[%s1 + $0x124] sm:$0xf]
  %v101 = vld [vmem:[%s1 + $0x128] sm:$0xf]
  %v102 = vld [vmem:[%s1 + $0x12c] sm:$0xf]
  %v103 = vld [vmem:[%s1 + $0x130] sm:$0xf]
  %v104 = vld [vmem:[%s1 + $0x134] sm:$0xf]
  %v105 = vld [vmem:[%s1 + $0x138] sm:$0xf]
  %v106 = vld [vmem:[%s1 + $0x13c] sm:$0xf]
  %v107 = vld [vmem:[%s1 + $0x140] sm:$0xf]
  %v108 = vld [vmem:[%s1 + $0x144] sm:$0xf]
  %v109 = vld [vmem:[%s1 + $0x148] sm:$0xf]
  %v110 = vld [vmem:[%s1 + $0x14c] sm:$0xf]
  %v111 = vld [vmem:[%s1 + $0x150] sm:$0xf]
  %v112 = vld [vmem:[%s1 + $0x154] sm:$0xf]
  %v113 = vld [vmem:[%s1 + $0x158] sm:$0xf]
  %v114 = vld [vmem:[%s1 + $0x15c] sm:$0xf]
  %v115 = vld [vmem:[%s1 + $0x160] sm:$0xf]
  %v116 = vld [vmem:[%s1 + $0x164] sm:$0xf]
  %v117 = vld [vmem:[%s1 + $0x168] sm:$0xf]
  %v118 = vld [vmem:[%s1 + $0x16c] sm:$0xf]
  %v119 = vld [vmem:[%s1 + $0x170] sm:$0xf]
  %v120 = vld [vmem:[%s1 + $0x174] sm:$0xf]
  %v121 = vld [vmem:[%s1 + $0x178] sm:$0xf]
  %v122 = vld [vmem:[%s1 + $0x17c] sm:$0xf]
  %v123 = vld [vmem:[%s2] sm:$0x1]
  %v125 = vlaneseq
  %v126 = vshrl.u32 %v125, 7
  %v127 = vsub.s32 0, %v126
  %v128 = vrot.slane %v123, %v127
  %v226 = vunpack.c.l.b16 %v27
  %v227 = vunpack.c.l.b16 %v28
  %v228 = vunpack.c.l.b16 %v29
  %v229 = vunpack.c.l.b16 %v30
  %v230 = vunpack.c.l.b16 %v31
  %v231 = vunpack.c.l.b16 %v32
  %v232 = vunpack.c.l.b16 %v33
  %v233 = vunpack.c.l.b16 %v34
  %v234 = vunpack.c.l.b16 %v35
  %v235 = vunpack.c.l.b16 %v36
  %v236 = vunpack.c.l.b16 %v37
  %v237 = vunpack.c.l.b16 %v38
  %v238 = vunpack.c.l.b16 %v39
  %v239 = vunpack.c.l.b16 %v40
  %v240 = vunpack.c.l.b16 %v41
  %v241 = vunpack.c.l.b16 %v42
  %v242 = vunpack.c.l.b16 %v43
  %v243 = vunpack.c.l.b16 %v44
  %v244 = vunpack.c.l.b16 %v45
  %v245 = vunpack.c.l.b16 %v46
  %v246 = vunpack.c.l.b16 %v47
  %v247 = vunpack.c.l.b16 %v48
  %v248 = vunpack.c.l.b16 %v49
  %v249 = vunpack.c.l.b16 %v50
  %v250 = vunpack.c.l.b16 %v51
  %v251 = vunpack.c.l.b16 %v52
  %v252 = vunpack.c.l.b16 %v53
  %v253 = vunpack.c.l.b16 %v54
  %v254 = vunpack.c.l.b16 %v55
  %v255 = vunpack.c.l.b16 %v56
  %v256 = vunpack.c.l.b16 %v57
  %v257 = vunpack.c.l.b16 %v58
  %v258 = vunpack.c.l.b16 %v59
  %v259 = vunpack.c.l.b16 %v60
  %v260 = vunpack.c.l.b16 %v61
  %v261 = vunpack.c.l.b16 %v62
  %v262 = vunpack.c.l.b16 %v63
  %v263 = vunpack.c.l.b16 %v64
  %v264 = vunpack.c.l.b16 %v65
  %v265 = vunpack.c.l.b16 %v66
  %v266 = vunpack.c.l.b16 %v67
  %v267 = vunpack.c.l.b16 %v68
  %v268 = vunpack.c.l.b16 %v69
  %v269 = vunpack.c.l.b16 %v70
  %v270 = vunpack.c.l.b16 %v71
  %v271 = vunpack.c.l.b16 %v72
  %v272 = vunpack.c.l.b16 %v73
  %v273 = vunpack.c.l.b16 %v74
  %v274 = vunpack.c.l.b16 %v75
  %v275 = vunpack.c.l.b16 %v76
  %v276 = vunpack.c.l.b16 %v77
  %v277 = vunpack.c.l.b16 %v78
  %v278 = vunpack.c.l.b16 %v79
  %v279 = vunpack.c.l.b16 %v80
  %v280 = vunpack.c.l.b16 %v81
  %v281 = vunpack.c.l.b16 %v82
  %v282 = vunpack.c.l.b16 %v83
  %v283 = vunpack.c.l.b16 %v84
  %v284 = vunpack.c.l.b16 %v85
  %v285 = vunpack.c.l.b16 %v86
  %v286 = vunpack.c.l.b16 %v87
  %v287 = vunpack.c.l.b16 %v88
  %v288 = vunpack.c.l.b16 %v89
  %v289 = vunpack.c.l.b16 %v90
  %v290 = vunpack.c.l.b16 %v91
  %v291 = vunpack.c.l.b16 %v92
  %v292 = vunpack.c.l.b16 %v93
  %v293 = vunpack.c.l.b16 %v94
  %v294 = vunpack.c.l.b16 %v95
  %v295 = vunpack.c.l.b16 %v96
  %v296 = vunpack.c.l.b16 %v97
  %v297 = vunpack.c.l.b16 %v98
  %v298 = vunpack.c.l.b16 %v99
  %v299 = vunpack.c.l.b16 %v100
  %v300 = vunpack.c.l.b16 %v101
  %v301 = vunpack.c.l.b16 %v102
  %v302 = vunpack.c.l.b16 %v103
  %v303 = vunpack.c.l.b16 %v104
  %v304 = vunpack.c.l.b16 %v105
  %v305 = vunpack.c.l.b16 %v106
  %v306 = vunpack.c.l.b16 %v107
  %v307 = vunpack.c.l.b16 %v108
  %v308 = vunpack.c.l.b16 %v109
  %v309 = vunpack.c.l.b16 %v110
  %v310 = vunpack.c.l.b16 %v111
  %v311 = vunpack.c.l.b16 %v112
  %v312 = vunpack.c.l.b16 %v113
  %v313 = vunpack.c.l.b16 %v114
  %v314 = vunpack.c.l.b16 %v115
  %v315 = vunpack.c.l.b16 %v116
  %v316 = vunpack.c.l.b16 %v117
  %v317 = vunpack.c.l.b16 %v118
  %v318 = vunpack.c.l.b16 %v119
  %v319 = vunpack.c.l.b16 %v120
  %v320 = vunpack.c.l.b16 %v121
  %v321 = vunpack.c.l.b16 %v122
  %v322 = vpack.c.b16 %v227, %v226
  %v323 = vpack.c.b16 %v229, %v228
  %v324 = vpack.c.b16 %v231, %v230
  %v325 = vpack.c.b16 %v233, %v232
  %v326 = vpack.c.b16 %v235, %v234
  %v327 = vpack.c.b16 %v237, %v236
  %v328 = vpack.c.b16 %v239, %v238
  %v329 = vpack.c.b16 %v241, %v240
  %v330 = vpack.c.b16 %v243, %v242
  %v331 = vpack.c.b16 %v245, %v244
  %v332 = vpack.c.b16 %v247, %v246
  %v333 = vpack.c.b16 %v249, %v248
  %v334 = vpack.c.b16 %v251, %v250
  %v335 = vpack.c.b16 %v253, %v252
  %v336 = vpack.c.b16 %v255, %v254
  %v337 = vpack.c.b16 %v257, %v256
  %v338 = vpack.c.b16 %v259, %v258
  %v339 = vpack.c.b16 %v261, %v260
  %v340 = vpack.c.b16 %v263, %v262
  %v341 = vpack.c.b16 %v265, %v264
  %v342 = vpack.c.b16 %v267, %v266
  %v343 = vpack.c.b16 %v269, %v268
  %v344 = vpack.c.b16 %v271, %v270
  %v345 = vpack.c.b16 %v273, %v272
  %v346 = vpack.c.b16 %v275, %v274
  %v347 = vpack.c.b16 %v277, %v276
  %v348 = vpack.c.b16 %v279, %v278
  %v349 = vpack.c.b16 %v281, %v280
  %v350 = vpack.c.b16 %v283, %v282
  %v351 = vpack.c.b16 %v285, %v284
  %v352 = vpack.c.b16 %v287, %v286
  %v353 = vpack.c.b16 %v289, %v288
  %v354 = vpack.c.b16 %v291, %v290
  %v355 = vpack.c.b16 %v293, %v292
  %v356 = vpack.c.b16 %v295, %v294
  %v357 = vpack.c.b16 %v297, %v296
  %v358 = vpack.c.b16 %v299, %v298
  %v359 = vpack.c.b16 %v301, %v300
  %v360 = vpack.c.b16 %v303, %v302
  %v361 = vpack.c.b16 %v305, %v304
  %v362 = vpack.c.b16 %v307, %v306
  %v363 = vpack.c.b16 %v309, %v308
  %v364 = vpack.c.b16 %v311, %v310
  %v365 = vpack.c.b16 %v313, %v312
  %v366 = vpack.c.b16 %v315, %v314
  %v367 = vpack.c.b16 %v317, %v316
  %v368 = vpack.c.b16 %v319, %v318
  %v369 = vpack.c.b16 %v321, %v320
  %418 = vmatprep.subr.bf16.mxu0 0
  %419 = vmatpush1.bf16.msra.mxu0 %v322
  %420 = vmatprep.subr.bf16.mxu0 0
  %421 = vmatpush1.bf16.msra.mxu0 %v323
  %422 = vmatprep.subr.bf16.mxu0 0
  %423 = vmatpush1.bf16.msra.mxu0 %v324
  %424 = vmatprep.subr.bf16.mxu0 0
  %425 = vmatpush1.bf16.msra.mxu0 %v325
  %426 = vmatprep.subr.bf16.mxu0 0
  %427 = vmatpush1.bf16.msra.mxu0 %v326
  %428 = vmatprep.subr.bf16.mxu0 0
  %429 = vmatpush1.bf16.msra.mxu0 %v327
  %430 = vmatprep.subr.bf16.mxu0 0
  %431 = vmatpush1.bf16.msra.mxu0 %v328
  %432 = vmatprep.subr.bf16.mxu0 0
  %433 = vmatpush1.bf16.msra.mxu0 %v329
  %434 = vmatprep.subr.bf16.mxu0 0
  %435 = vmatpush1.bf16.msra.mxu0 %v330
  %436 = vmatprep.subr.bf16.mxu0 0
  %437 = vmatpush1.bf16.msra.mxu0 %v331
  %438 = vmatprep.subr.bf16.mxu0 0
  %439 = vmatpush1.bf16.msra.mxu0 %v332
  %440 = vmatprep.subr.bf16.mxu0 0
  %441 = vmatpush1.bf16.msra.mxu0 %v333
  %442 = vmatprep.subr.bf16.mxu0 0
  %443 = vmatpush1.bf16.msra.mxu0 %v334
  %444 = vmatprep.subr.bf16.mxu0 0
  %445 = vmatpush1.bf16.msra.mxu0 %v335
  %446 = vmatprep.subr.bf16.mxu0 0
  %447 = vmatpush1.bf16.msra.mxu0 %v336
  %448 = vmatprep.subr.bf16.mxu0 0
  %449 = vmatpush1.bf16.msra.mxu0 %v337
  %450 = vmatprep.mubr.bf16.mxu0 %v22
  %451 = vmatmul.mubr.bf16.gmra.mrb[0].mxu0 %v21
  %v452 = vpop.f32.mrb[0].mxu0
  %v453 = vadd.f32 %v128, %v452
  %v454 = vpop.f32.mrb[0].mxu0
  %v455 = vpop.f32.mrb[0].mxu0
  %v456 = vpop.f32.mrb[0].mxu0
  %457 = vdwg.mxu0
  %458 = vmatprep.subr.bf16.mxu0 0
  %459 = vmatpush1.bf16.msra.mxu0 %v338
  %460 = vmatprep.subr.bf16.mxu0 0
  %461 = vmatpush1.bf16.msra.mxu0 %v339
  %462 = vmatprep.subr.bf16.mxu0 0
  %463 = vmatpush1.bf16.msra.mxu0 %v340
  %464 = vmatprep.subr.bf16.mxu0 0
  %465 = vmatpush1.bf16.msra.mxu0 %v341
  %466 = vmatprep.subr.bf16.mxu0 0
  %467 = vmatpush1.bf16.msra.mxu0 %v342
  %468 = vmatprep.subr.bf16.mxu0 0
  %469 = vmatpush1.bf16.msra.mxu0 %v343
  %470 = vmatprep.subr.bf16.mxu0 0
  %471 = vmatpush1.bf16.msra.mxu0 %v344
  %472 = vmatprep.subr.bf16.mxu0 0
  %473 = vmatpush1.bf16.msra.mxu0 %v345
  %474 = vmatprep.subr.bf16.mxu0 0
  %475 = vmatpush1.bf16.msra.mxu0 %v346
  %476 = vmatprep.subr.bf16.mxu0 0
  %477 = vmatpush1.bf16.msra.mxu0 %v347
  %478 = vmatprep.subr.bf16.mxu0 0
  %479 = vmatpush1.bf16.msra.mxu0 %v348
  %480 = vmatprep.subr.bf16.mxu0 0
  %481 = vmatpush1.bf16.msra.mxu0 %v349
  %482 = vmatprep.subr.bf16.mxu0 0
  %483 = vmatpush1.bf16.msra.mxu0 %v350
  %484 = vmatprep.subr.bf16.mxu0 0
  %485 = vmatpush1.bf16.msra.mxu0 %v351
  %486 = vmatprep.subr.bf16.mxu0 0
  %487 = vmatpush1.bf16.msra.mxu0 %v352
  %488 = vmatprep.subr.bf16.mxu0 0
  %489 = vmatpush1.bf16.msra.mxu0 %v353
  %490 = vmatprep.mubr.bf16.mxu0 %v24
  %491 = vmatmul.mubr.bf16.gmra.mrb[0].mxu0 %v23
  %v492 = vpop.f32.mrb[0].mxu0
  %v493 = vadd.f32 %v453, %v492
  %v494 = vpop.f32.mrb[0].mxu0
  %v495 = vpop.f32.mrb[0].mxu0
  %v496 = vpop.f32.mrb[0].mxu0
  %497 = vdwg.mxu0
  %498 = vmatprep.subr.bf16.mxu0 0
  %499 = vmatpush1.bf16.msra.mxu0 %v354
  %500 = vmatprep.subr.bf16.mxu0 0
  %501 = vmatpush1.bf16.msra.mxu0 %v355
  %502 = vmatprep.subr.bf16.mxu0 0
  %503 = vmatpush1.bf16.msra.mxu0 %v356
  %504 = vmatprep.subr.bf16.mxu0 0
  %505 = vmatpush1.bf16.msra.mxu0 %v357
  %506 = vmatprep.subr.bf16.mxu0 0
  %507 = vmatpush1.bf16.msra.mxu0 %v358
  %508 = vmatprep.subr.bf16.mxu0 0
  %509 = vmatpush1.bf16.msra.mxu0 %v359
  %510 = vmatprep.subr.bf16.mxu0 0
  %511 = vmatpush1.bf16.msra.mxu0 %v360
  %512 = vmatprep.subr.bf16.mxu0 0
  %513 = vmatpush1.bf16.msra.mxu0 %v361
  %514 = vmatprep.subr.bf16.mxu0 0
  %515 = vmatpush1.bf16.msra.mxu0 %v362
  %516 = vmatprep.subr.bf16.mxu0 0
  %517 = vmatpush1.bf16.msra.mxu0 %v363
  %518 = vmatprep.subr.bf16.mxu0 0
  %519 = vmatpush1.bf16.msra.mxu0 %v364
  %520 = vmatprep.subr.bf16.mxu0 0
  %521 = vmatpush1.bf16.msra.mxu0 %v365
  %522 = vmatprep.subr.bf16.mxu0 0
  %523 = vmatpush1.bf16.msra.mxu0 %v366
  %524 = vmatprep.subr.bf16.mxu0 0
  %525 = vmatpush1.bf16.msra.mxu0 %v367
  %526 = vmatprep.subr.bf16.mxu0 0
  %527 = vmatpush1.bf16.msra.mxu0 %v368
  %528 = vmatprep.subr.bf16.mxu0 0
  %529 = vmatpush1.bf16.msra.mxu0 %v369
  %530 = vmatprep.mubr.bf16.mxu0 %v26
  %531 = vmatmul.mubr.bf16.gmra.mrb[0].mxu0 %v25
  %v532 = vpop.f32.mrb[0].mxu0
  %v533 = vadd.f32 %v493, %v532
  %v534 = vpop.f32.mrb[0].mxu0
  %v535 = vpop.f32.mrb[0].mxu0
  %v536 = vpop.f32.mrb[0].mxu0
  %537 = vdwg.mxu0
  %538 = vst [vmem:[%s3] sm:$0xff] %v533
  // Predicated region
  $region14: #{vilt_vqa_forward.16} parent=0 // pred_check
    _
  $region15: #{vilt_vqa_forward.16} parent=0 // pred_check_branch
    %540 = sbr.rel (0) target = $region17
  $region16: #{vilt_vqa_forward.16} parent=0 // pred_region
    _
  $region17: #{vilt_vqa_forward.16} parent=0 // pred_fallthru
    _
  // Predicated region
  $region18: #{vilt_vqa_forward.16} parent=0 // pred_check
    _
  $region19: #{vilt_vqa_forward.16} parent=0 // pred_check_branch
    %542 = sbr.rel (0) target = $region21
  $region20: #{vilt_vqa_forward.16} parent=0 // pred_region
    _
  $region21: #{vilt_vqa_forward.16} parent=0 // pred_fallthru
    _

// kernel: vilt_vqa_forward.17
$region0: #{vilt_vqa_forward.17}
  #allocation0 [shape = 'u32[]', space=smem, size = 0x4, offset = 0x4, fixed_abs, tag = 'smem constant byte address 0x4 - core index']
  #allocation1 [shape = 'u32[144,128]{1,0:T(1,128)}', space=vmem, size = 0x12000, scoped, tag = 'internal scratch']
  %s0 = inlined_call_operand.vmem [shape: f32[32,32], index: 0, kind: input, shape index: {}]
  %s1 = inlined_call_operand.vmem [shape: f32[1,32], index: 1, kind: input, shape index: {}]
  %s2 = inlined_call_operand.vmem [shape: f32[1,32], index: 2, kind: input, shape index: {}]
  %s3 = inlined_call_operand.vmem [shape: bf16[32,128], index: 3, kind: input, shape index: {}]
  %s4 = inlined_call_operand.vmem [shape: f32[1,128], index: 4, kind: input, shape index: {}]
  %s5 = inlined_call_operand.vmem [shape: bf16[32,128], index: 5, kind: output, shape index: {}]
  %s6 = sld [smem:[#allocation0]]
  $region53: #{vilt_vqa_forward.17} parent=0
    _
  %s8 = ssub.s32 1, %s6
  %s9 = scalar_select 0, %s8, %s6
  loop: start=0, step=1, limit=4
  $region2: #{vilt_vqa_forward.17} parent=0 // loop_pre_header
    _
  $region3: #{vilt_vqa_forward.17} parent=0 // loop_header
    %s11 = sphi 0, %s15
    %p12 = scmp.ge.s32.totalorder %s11, 4
    %s21 = sphi 0, %s23
    %s24 = sphi 0, %s21
    %s25 = sphi 0, %s24
    %s41 = sphi 0, %s25
    %s45 = sphi 0, %s45
    %s47 = sphi 0, %s45
    %s48 = sphi 0, %s47
    %s62 = sphi 0, %s48
    %s66 = sphi 0, %s66
    %s68 = sphi 0, %s66
    %s69 = sphi 0, %s68
    %s83 = sphi 0, %s69
    %s87 = sphi 0, %s87
    %s89 = sphi 0, %s87
    %s90 = sphi 0, %s89
    %s104 = sphi 0, %s90
    %s108 = sphi 0, %s108
    %s110 = sphi 0, %s108
    %s111 = sphi 0, %s110
    %s125 = sphi 0, %s111
    %s131 = sphi 0, %s133
    %s134 = sphi 0, %s131
    %s135 = sphi 0, %s134
    %s151 = sphi 0, %s135
  $region4: #{vilt_vqa_forward.17} parent=0 // loop_header_branch
    %14 = sbr.rel (%p12) target = $region8
  $region5: #{vilt_vqa_forward.17} parent=0 // loop_body
    %s16 = ssub.s32 %s11, 1
    %s17 = ssub.s32 %s11, 2
    %s18 = sadd.s32 %s11, 1
    %s19 = ssub.s32 %s11, %s18
    %p20 = scmp.eq.s32.totalorder %s19, 0
    %s22 = sadd.s32 %s21, 1
    %s23 = scalar_select %p20, %s21, %s22
    %p26 = pneg %p20
    %p27 = scmp.eq.s32.totalorder %s11, 1
    %p28 = por %p26, %p27
    %p29 = scmp.ne.s32.totalorder %s21, %s24
    %p30 = scmp.eq.s32.totalorder %s11, 0
    %p31 = por %p29, %p30
    %p32 = scmp.ne.s32.totalorder %s21, %s24
    %p33 = scmp.eq.s32.totalorder %s16, 1
    %p34 = por %p32, %p33
    %p35 = scmp.ne.s32.totalorder %s24, %s25
    %p36 = scmp.eq.s32.totalorder %s16, 0
    %p37 = por %p35, %p36
    %p38 = scmp.ne.s32.totalorder %s24, %s25
    %p39 = scmp.eq.s32.totalorder %s17, 1
    %p40 = por %p38, %p39
    %p42 = scmp.ne.s32.totalorder %s25, %s41
    %p43 = scmp.eq.s32.totalorder %s17, 0
    %p44 = por %p42, %p43
    %s46 = sadd.s32 %s45, 1
    %p49 = scmp.eq.s32.totalorder %s11, 1
    %p50 = scmp.ne.s32.totalorder %s45, %s47
    %p51 = scmp.eq.s32.totalorder %s11, 0
    %p52 = por %p50, %p51
    %p53 = scmp.ne.s32.totalorder %s45, %s47
    %p54 = scmp.eq.s32.totalorder %s16, 1
    %p55 = por %p53, %p54
    %p56 = scmp.ne.s32.totalorder %s47, %s48
    %p57 = scmp.eq.s32.totalorder %s16, 0
    %p58 = por %p56, %p57
    %p59 = scmp.ne.s32.totalorder %s47, %s48
    %p60 = scmp.eq.s32.totalorder %s17, 1
    %p61 = por %p59, %p60
    %p63 = scmp.ne.s32.totalorder %s48, %s62
    %p64 = scmp.eq.s32.totalorder %s17, 0
    %p65 = por %p63, %p64
    %s67 = sadd.s32 %s66, 1
    %p70 = scmp.eq.s32.totalorder %s11, 1
    %p71 = scmp.ne.s32.totalorder %s66, %s68
    %p72 = scmp.eq.s32.totalorder %s11, 0
    %p73 = por %p71, %p72
    %p74 = scmp.ne.s32.totalorder %s66, %s68
    %p75 = scmp.eq.s32.totalorder %s16, 1
    %p76 = por %p74, %p75
    %p77 = scmp.ne.s32.totalorder %s68, %s69
    %p78 = scmp.eq.s32.totalorder %s16, 0
    %p79 = por %p77, %p78
    %p80 = scmp.ne.s32.totalorder %s68, %s69
    %p81 = scmp.eq.s32.totalorder %s17, 1
    %p82 = por %p80, %p81
    %p84 = scmp.ne.s32.totalorder %s69, %s83
    %p85 = scmp.eq.s32.totalorder %s17, 0
    %p86 = por %p84, %p85
    %s88 = sadd.s32 %s87, 1
    %p91 = scmp.eq.s32.totalorder %s11, 1
    %p92 = scmp.ne.s32.totalorder %s87, %s89
    %p93 = scmp.eq.s32.totalorder %s11, 0
    %p94 = por %p92, %p93
    %p95 = scmp.ne.s32.totalorder %s87, %s89
    %p96 = scmp.eq.s32.totalorder %s16, 1
    %p97 = por %p95, %p96
    %p98 = scmp.ne.s32.totalorder %s89, %s90
    %p99 = scmp.eq.s32.totalorder %s16, 0
    %p100 = por %p98, %p99
    %p101 = scmp.ne.s32.totalorder %s89, %s90
    %p102 = scmp.eq.s32.totalorder %s17, 1
    %p103 = por %p101, %p102
    %p105 = scmp.ne.s32.totalorder %s90, %s104
    %p106 = scmp.eq.s32.totalorder %s17, 0
    %p107 = por %p105, %p106
    %s109 = sadd.s32 %s108, 1
    %p112 = scmp.eq.s32.totalorder %s11, 1
    %p113 = scmp.ne.s32.totalorder %s108, %s110
    %p114 = scmp.eq.s32.totalorder %s11, 0
    %p115 = por %p113, %p114
    %p116 = scmp.ne.s32.totalorder %s108, %s110
    %p117 = scmp.eq.s32.totalorder %s16, 1
    %p118 = por %p116, %p117
    %p119 = scmp.ne.s32.totalorder %s110, %s111
    %p120 = scmp.eq.s32.totalorder %s16, 0
    %p121 = por %p119, %p120
    %p122 = scmp.ne.s32.totalorder %s110, %s111
    %p123 = scmp.eq.s32.totalorder %s17, 1
    %p124 = por %p122, %p123
    %p126 = scmp.ne.s32.totalorder %s111, %s125
    %p127 = scmp.eq.s32.totalorder %s17, 0
    %p128 = por %p126, %p127
    %s129 = ssub.s32 %s11, %s18
    %p130 = scmp.eq.s32.totalorder %s129, 0
    %s132 = sadd.s32 %s131, 1
    %s133 = scalar_select %p130, %s131, %s132
    %p136 = pneg %p130
    %p137 = scmp.eq.s32.totalorder %s11, 1
    %p138 = por %p136, %p137
    %p139 = scmp.ne.s32.totalorder %s131, %s134
    %p140 = scmp.eq.s32.totalorder %s11, 0
    %p141 = por %p139, %p140
    %p142 = scmp.ne.s32.totalorder %s131, %s134
    %p143 = scmp.eq.s32.totalorder %s16, 1
    %p144 = por %p142, %p143
    %p145 = scmp.ne.s32.totalorder %s134, %s135
    %p146 = scmp.eq.s32.totalorder %s16, 0
    %p147 = por %p145, %p146
    %p148 = scmp.ne.s32.totalorder %s134, %s135
    %p149 = scmp.eq.s32.totalorder %s17, 1
    %p150 = por %p148, %p149
    %p152 = scmp.ne.s32.totalorder %s135, %s151
    %p153 = scmp.eq.s32.totalorder %s17, 0
    %p154 = por %p152, %p153
    %p155 = scmp.le.s32.totalorder 1, %s11
    %p156 = scmp.lt.s32.totalorder %s11, 3
    %p157 = pnand %p155, %p156
    %p158 = pneg %p157
    // Predicated region
    $region9: #{vilt_vqa_forward.17} parent=5 // pred_check
      _
    $region10: #{vilt_vqa_forward.17} parent=5 // pred_check_branch
      %160 = sbr.rel (%p157) target = $region12
    $region11: #{vilt_vqa_forward.17} parent=5 // pred_region
      %s161 = ssub.s32 %s11, 1
      // Predicated region
      $region13: #{vilt_vqa_forward.17} parent=11 // pred_check
        %p162 = pneg %p58
      $region14: #{vilt_vqa_forward.17} parent=11 // pred_check_branch
        %164 = sbr.rel (%p162) target = $region16
      $region15: #{vilt_vqa_forward.17} parent=11 // pred_region
        _
      $region16: #{vilt_vqa_forward.17} parent=11 // pred_fallthru
        _
      // Predicated region
      $region17: #{vilt_vqa_forward.17} parent=11 // pred_check
        %p165 = pneg %p79
      $region18: #{vilt_vqa_forward.17} parent=11 // pred_check_branch
        %167 = sbr.rel (%p165) target = $region20
      $region19: #{vilt_vqa_forward.17} parent=11 // pred_region
        _
      $region20: #{vilt_vqa_forward.17} parent=11 // pred_fallthru
        _
      // Predicated region
      $region21: #{vilt_vqa_forward.17} parent=11 // pred_check
        %p168 = pneg %p100
      $region22: #{vilt_vqa_forward.17} parent=11 // pred_check_branch
        %170 = sbr.rel (%p168) target = $region24
      $region23: #{vilt_vqa_forward.17} parent=11 // pred_region
        _
      $region24: #{vilt_vqa_forward.17} parent=11 // pred_fallthru
        _
      // Predicated region
      $region25: #{vilt_vqa_forward.17} parent=11 // pred_check
        %p171 = pneg %p121
      $region26: #{vilt_vqa_forward.17} parent=11 // pred_check_branch
        %173 = sbr.rel (%p171) target = $region28
      $region27: #{vilt_vqa_forward.17} parent=11 // pred_region
        _
      $region28: #{vilt_vqa_forward.17} parent=11 // pred_fallthru
        _
    $region12: #{vilt_vqa_forward.17} parent=5 // pred_fallthru
      _
    %p174 = scmp.lt.s32.totalorder %s11, 2
    // Predicated region
    $region29: #{vilt_vqa_forward.17} parent=5 // pred_check
      %p175 = pneg %p174
    $region30: #{vilt_vqa_forward.17} parent=5 // pred_check_branch
      %177 = sbr.rel (%p175) target = $region32
    $region31: #{vilt_vqa_forward.17} parent=5 // pred_region
      // Predicated region
      $region33: #{vilt_vqa_forward.17} parent=31 // pred_check
        %p178 = pneg %p31
      $region34: #{vilt_vqa_forward.17} parent=31 // pred_check_branch
        %180 = sbr.rel (%p178) target = $region36
      $region35: #{vilt_vqa_forward.17} parent=31 // pred_region
        %s181 = smul.u32 2, %s11
        %p182 = scmp.lt.s32.totalorder %s181, 3
        %s183 = scalar_select %p182, %s181, 3
        %s184 = smul.addr %s183, 8
        %s185 = scalar_lea.vmem %s0, %s184
        %s186 = smul.u32 2, %s11
      $region36: #{vilt_vqa_forward.17} parent=31 // pred_fallthru
        _
    $region32: #{vilt_vqa_forward.17} parent=5 // pred_fallthru
      _
    %p187 = scmp.le.s32.totalorder 1, %s11
    %p188 = scmp.lt.s32.totalorder %s11, 3
    %p189 = pnand %p187, %p188
    %p190 = pneg %p189
    // Predicated region
    $region37: #{vilt_vqa_forward.17} parent=5 // pred_check
      _
    $region38: #{vilt_vqa_forward.17} parent=5 // pred_check_branch
      %192 = sbr.rel (%p189) target = $region40
    $region39: #{vilt_vqa_forward.17} parent=5 // pred_region
      %s193 = ssub.s32 %s11, 1
      %s194 = smul.u32 2, %s16
      %p195 = scmp.lt.s32.totalorder %s194, 3
      %s196 = scalar_select %p195, %s194, 3
      %s197 = smul.addr %s196, 8
      %s198 = scalar_lea.vmem %s0, %s197
      %p199 = pneg %p37
      %p200 = pneg %p34
      %p201 = pneg %p58
      %p202 = pneg %p55
      %p203 = pneg %p79
      %p204 = pneg %p76
      %p205 = pneg %p100
      %p206 = pneg %p97
      %p207 = pneg %p121
      %p208 = pneg %p118
      %p209 = pneg %p147
      %p210 = pneg %p144
      %s211 = smul.u32 2, %s16
      %p212 = scmp.lt.s32.totalorder %s211, 3
      %s213 = scalar_select %p212, %s211, 3
      %s214 = smul.addr %s213, 4
      %s215 = scalar_lea.vmem %s5, %s214
      %s216 = smul.u32 2, %s16
      %p217 = scmp.lt.s32.totalorder %s216, 3
      %s218 = scalar_select %p217, %s216, 3
      %s219 = smul.addr %s218, 8
      %s220 = scalar_lea.vmem %s0, %s219
      %s221 = smul.u32 2, %s16
      %s222 = smul.u32 2, %s16
      %p223 = scmp.lt.s32.totalorder %s222, 3
      %s224 = scalar_select %p223, %s222, 3
      %s225 = smul.addr %s224, 4
      %s226 = scalar_lea.vmem %s5, %s225
      %s227 = smul.u32 2, %s16
      %v229 = vld [vmem:[%s220] sm:$0xff]
      %v230 = vld [vmem:[%s220 + $0x8] sm:$0xff]
      %vm231 = vcmask 261120
      %v232 = vsel %vm231, %v229, 0.0
      %233 = vadd.xlane.f32.xlu0 %v232
      %v234 = vpop.xlane.xlu0 %233
      %v235 = vsel %vm231, %v230, 0.0
      %236 = vadd.xlane.f32.xlu0 %v235
      %v237 = vpop.xlane.xlu0 %236
      %v238 = vrcp.pop 32.0
      %v239 = vmul.f32 %v234, %v238
      %v240 = vmul.f32 %v237, %v238
      %v241 = vsub.f32 %v229, %v239
      %v242 = vsub.f32 %v230, %v240
      %v243 = vmul.f32 %v241, %v241
      %v244 = vmul.f32 %v242, %v242
      %v245 = vsel %vm231, %v243, 0.0
      %246 = vadd.xlane.f32.xlu0 %v245
      %v247 = vpop.xlane.xlu0 %246
      %v248 = vsel %vm231, %v244, 0.0
      %249 = vadd.xlane.f32.xlu0 %v248
      %v250 = vpop.xlane.xlu0 %249
      %v251 = vmul.f32 %v247, %v238
      %v252 = vmul.f32 %v250, %v238
      %v253 = vadd.f32 %v251, 1e-12
      %v254 = vadd.f32 %v252, 1e-12
      %v255 = vrsqrt.pop %v253
      %v256 = vrsqrt.pop %v254
      %v257 = vmul.f32 %v241, %v255
      %v258 = vmul.f32 %v242, %v256
      %v259 = vld [vmem:[%s1] sm:$0x1]
      %v261 = vlaneseq
      %v262 = vshrl.u32 %v261, 7
      %v263 = vsub.s32 0, %v262
      %v264 = vrot.slane %v259, %v263
      %v266 = vmul.f32 %v257, %v264
      %v267 = vmul.f32 %v258, %v264
      %v268 = vld [vmem:[%s2] sm:$0x1]
      %v270 = vlaneseq
      %v271 = vshrl.u32 %v270, 7
      %v272 = vsub.s32 0, %v271
      %v273 = vrot.slane %v268, %v272
      %v275 = vadd.f32 %v266, %v273
      %v276 = vadd.f32 %v267, %v273
      %v277 = vpack.c.bf16 %v276, %v275
      %v278 = vld [vmem:[%s3] sm:$0xf]
      %v279 = vld [vmem:[%s3 + $0x4] sm:$0xf]
      %v280 = vld [vmem:[%s3 + $0x8] sm:$0xf]
      %v281 = vld [vmem:[%s3 + $0xc] sm:$0xf]
      %v282 = vld [vmem:[%s4] sm:$0x1]
      %v284 = vlaneseq
      %v285 = vshrl.u32 %v284, 7
      %v286 = vsub.s32 0, %v285
      %v287 = vrot.slane %v282, %v286
      %v293 = vunpack.c.l.b16 %v278
      %v294 = vunpack.c.l.b16 %v279
      %v295 = vunpack.c.l.b16 %v280
      %v296 = vunpack.c.l.b16 %v281
      %v297 = vpack.c.b16 %v294, %v293
      %v298 = vpack.c.b16 %v296, %v295
      %v302 = vsel %vm231, %v277, 0
      %304 = vmatprep.subr.bf16.mxu0 0
      %305 = vmatpush1.bf16.msra.mxu0 %v297
      %306 = vmatprep.subr.bf16.mxu0 0
      %307 = vmatpush1.bf16.msra.mxu0 %v298
      %308 = vmatprep.subr.bf16.mxu0 0
      %309 = vmatpush1.bf16.msra.mxu0 0
      %310 = vmatprep.subr.bf16.mxu0 0
      %311 = vmatpush1.bf16.msra.mxu0 0
      %312 = vmatprep.subr.bf16.mxu0 0
      %313 = vmatpush1.bf16.msra.mxu0 0
      %314 = vmatprep.subr.bf16.mxu0 0
      %315 = vmatpush1.bf16.msra.mxu0 0
      %316 = vmatprep.subr.bf16.mxu0 0
      %317 = vmatpush1.bf16.msra.mxu0 0
      %318 = vmatprep.subr.bf16.mxu0 0
      %319 = vmatpush1.bf16.msra.mxu0 0
      %320 = vmatprep.subr.bf16.mxu0 0
      %321 = vmatpush1.bf16.msra.mxu0 0
      %322 = vmatprep.subr.bf16.mxu0 0
      %323 = vmatpush1.bf16.msra.mxu0 0
      %324 = vmatprep.subr.bf16.mxu0 0
      %325 = vmatpush1.bf16.msra.mxu0 0
      %326 = vmatprep.subr.bf16.mxu0 0
      %327 = vmatpush1.bf16.msra.mxu0 0
      %328 = vmatprep.subr.bf16.mxu0 0
      %329 = vmatpush1.bf16.msra.mxu0 0
      %330 = vmatprep.subr.bf16.mxu0 0
      %331 = vmatpush1.bf16.msra.mxu0 0
      %332 = vmatprep.subr.bf16.mxu0 0
      %333 = vmatpush1.bf16.msra.mxu0 0
      %334 = vmatprep.subr.bf16.mxu0 0
      %335 = vmatpush1.bf16.msra.mxu0 0
      %336 = vmatprep.mubr.bf16.mxu0 0
      %337 = vmatmul.mubr.bf16.gmra.mrb[0].mxu0 %v302
      %v338 = vpop.f32.mrb[0].mxu0
      %v339 = vadd.f32 %v287, %v338
      %v340 = vpop.f32.mrb[0].mxu0
      %v341 = vpop.f32.mrb[0].mxu0
      %v342 = vadd.f32 %v287, %v341
      %v343 = vpop.f32.mrb[0].mxu0
      %344 = vdwg.mxu0
      %v345 = vpack.c.bf16 %v342, %v339
      %v347 = vunpack.c.l.b16 %v345
      %v348 = vunpack.c.h.b16 %v345
      %v349 = vpack.c.b16 %v347, %v347
      %v350 = vpack.c.b16 %v348, %v348
      %353 = vst [vmem:[%s226] sm:$0xf] %v349
      %354 = vst [vmem:[%s226 + $0x4] sm:$0xf] %v350
      %s355 = smul.u32 2, %s16
      %p356 = scmp.lt.s32.totalorder %s355, 3
      %s357 = scalar_select %p356, %s355, 3
      %s358 = smul.addr %s357, 4
      %s359 = scalar_lea.vmem %s5, %s358
      // Predicated region
      $region41: #{vilt_vqa_forward.17} parent=39 // pred_check
        %p360 = pneg %p144
      $region42: #{vilt_vqa_forward.17} parent=39 // pred_check_branch
        %362 = sbr.rel (%p360) target = $region44
      $region43: #{vilt_vqa_forward.17} parent=39 // pred_region
        %s363 = smul.u32 2, %s16
      $region44: #{vilt_vqa_forward.17} parent=39 // pred_fallthru
        _
    $region40: #{vilt_vqa_forward.17} parent=5 // pred_fallthru
      _
    %p364 = scmp.le.s32.totalorder 2, %s11
    // Predicated region
    $region45: #{vilt_vqa_forward.17} parent=5 // pred_check
      %p365 = pneg %p364
    $region46: #{vilt_vqa_forward.17} parent=5 // pred_check_branch
      %367 = sbr.rel (%p365) target = $region48
    $region47: #{vilt_vqa_forward.17} parent=5 // pred_region
      %s368 = ssub.s32 %s11, 2
      // Predicated region
      $region49: #{vilt_vqa_forward.17} parent=47 // pred_check
        %p369 = pneg %p150
      $region50: #{vilt_vqa_forward.17} parent=47 // pred_check_branch
        %371 = sbr.rel (%p369) target = $region52
      $region51: #{vilt_vqa_forward.17} parent=47 // pred_region
        %s372 = smul.u32 2, %s17
        %p373 = scmp.lt.s32.totalorder %s372, 3
        %s374 = scalar_select %p373, %s372, 3
        %s375 = smul.addr %s374, 4
        %s376 = scalar_lea.vmem %s5, %s375
      $region52: #{vilt_vqa_forward.17} parent=47 // pred_fallthru
        _
    $region48: #{vilt_vqa_forward.17} parent=5 // pred_fallthru
      _
  $region6: #{vilt_vqa_forward.17} parent=0 // loop_footer
    %s15 = sadd.s32 1, %s11
  $region7: #{vilt_vqa_forward.17} parent=0 // loop_footer_branch
    %10 = sbr.rel target = $region3
  $region8: #{vilt_vqa_forward.17} parent=0 // loop_exit
    _

// kernel: vilt_vqa_forward.15
$region0: #{vilt_vqa_forward.15}
  #allocation0 [shape = 'u32[]', space=smem, size = 0x4, offset = 0x4, fixed_abs, tag = 'smem constant byte address 0x4 - core index']
  #allocation1 [shape = 'u32[144,128]{1,0:T(1,128)}', space=vmem, size = 0x12000, scoped, tag = 'internal scratch']
  %s0 = inlined_call_operand.vmem [shape: f32[16,32], index: 0, kind: input, shape index: {}]
  %s1 = inlined_call_operand.vmem [shape: f32[1,32], index: 1, kind: input, shape index: {}]
  %s2 = inlined_call_operand.vmem [shape: f32[1,32], index: 2, kind: input, shape index: {}]
  %s3 = inlined_call_operand.vmem [shape: f32[16,32], index: 3, kind: output, shape index: {}]
  %s4 = sld [smem:[#allocation0]]
  $region45: #{vilt_vqa_forward.15} parent=0
    _
  %s6 = ssub.s32 1, %s4
  %s7 = scalar_select 0, %s6, %s4
  loop: start=0, step=1, limit=4
  $region2: #{vilt_vqa_forward.15} parent=0 // loop_pre_header
    _
  $region3: #{vilt_vqa_forward.15} parent=0 // loop_header
    %s9 = sphi 0, %s13
    %p10 = scmp.ge.s32.totalorder %s9, 4
    %s19 = sphi 0, %s21
    %s22 = sphi 0, %s19
    %s23 = sphi 0, %s22
    %s39 = sphi 0, %s23
    %s43 = sphi 0, %s43
    %s45 = sphi 0, %s43
    %s46 = sphi 0, %s45
    %s60 = sphi 0, %s46
    %s64 = sphi 0, %s64
    %s66 = sphi 0, %s64
    %s67 = sphi 0, %s66
    %s81 = sphi 0, %s67
    %s87 = sphi 0, %s89
    %s90 = sphi 0, %s87
    %s91 = sphi 0, %s90
    %s107 = sphi 0, %s91
  $region4: #{vilt_vqa_forward.15} parent=0 // loop_header_branch
    %12 = sbr.rel (%p10) target = $region8
  $region5: #{vilt_vqa_forward.15} parent=0 // loop_body
    %s14 = ssub.s32 %s9, 1
    %s15 = ssub.s32 %s9, 2
    %s16 = sadd.s32 %s9, 1
    %s17 = ssub.s32 %s9, %s16
    %p18 = scmp.eq.s32.totalorder %s17, 0
    %s20 = sadd.s32 %s19, 1
    %s21 = scalar_select %p18, %s19, %s20
    %p24 = pneg %p18
    %p25 = scmp.eq.s32.totalorder %s9, 1
    %p26 = por %p24, %p25
    %p27 = scmp.ne.s32.totalorder %s19, %s22
    %p28 = scmp.eq.s32.totalorder %s9, 0
    %p29 = por %p27, %p28
    %p30 = scmp.ne.s32.totalorder %s19, %s22
    %p31 = scmp.eq.s32.totalorder %s14, 1
    %p32 = por %p30, %p31
    %p33 = scmp.ne.s32.totalorder %s22, %s23
    %p34 = scmp.eq.s32.totalorder %s14, 0
    %p35 = por %p33, %p34
    %p36 = scmp.ne.s32.totalorder %s22, %s23
    %p37 = scmp.eq.s32.totalorder %s15, 1
    %p38 = por %p36, %p37
    %p40 = scmp.ne.s32.totalorder %s23, %s39
    %p41 = scmp.eq.s32.totalorder %s15, 0
    %p42 = por %p40, %p41
    %s44 = sadd.s32 %s43, 1
    %p47 = scmp.eq.s32.totalorder %s9, 1
    %p48 = scmp.ne.s32.totalorder %s43, %s45
    %p49 = scmp.eq.s32.totalorder %s9, 0
    %p50 = por %p48, %p49
    %p51 = scmp.ne.s32.totalorder %s43, %s45
    %p52 = scmp.eq.s32.totalorder %s14, 1
    %p53 = por %p51, %p52
    %p54 = scmp.ne.s32.totalorder %s45, %s46
    %p55 = scmp.eq.s32.totalorder %s14, 0
    %p56 = por %p54, %p55
    %p57 = scmp.ne.s32.totalorder %s45, %s46
    %p58 = scmp.eq.s32.totalorder %s15, 1
    %p59 = por %p57, %p58
    %p61 = scmp.ne.s32.totalorder %s46, %s60
    %p62 = scmp.eq.s32.totalorder %s15, 0
    %p63 = por %p61, %p62
    %s65 = sadd.s32 %s64, 1
    %p68 = scmp.eq.s32.totalorder %s9, 1
    %p69 = scmp.ne.s32.totalorder %s64, %s66
    %p70 = scmp.eq.s32.totalorder %s9, 0
    %p71 = por %p69, %p70
    %p72 = scmp.ne.s32.totalorder %s64, %s66
    %p73 = scmp.eq.s32.totalorder %s14, 1
    %p74 = por %p72, %p73
    %p75 = scmp.ne.s32.totalorder %s66, %s67
    %p76 = scmp.eq.s32.totalorder %s14, 0
    %p77 = por %p75, %p76
    %p78 = scmp.ne.s32.totalorder %s66, %s67
    %p79 = scmp.eq.s32.totalorder %s15, 1
    %p80 = por %p78, %p79
    %p82 = scmp.ne.s32.totalorder %s67, %s81
    %p83 = scmp.eq.s32.totalorder %s15, 0
    %p84 = por %p82, %p83
    %s85 = ssub.s32 %s9, %s16
    %p86 = scmp.eq.s32.totalorder %s85, 0
    %s88 = sadd.s32 %s87, 1
    %s89 = scalar_select %p86, %s87, %s88
    %p92 = pneg %p86
    %p93 = scmp.eq.s32.totalorder %s9, 1
    %p94 = por %p92, %p93
    %p95 = scmp.ne.s32.totalorder %s87, %s90
    %p96 = scmp.eq.s32.totalorder %s9, 0
    %p97 = por %p95, %p96
    %p98 = scmp.ne.s32.totalorder %s87, %s90
    %p99 = scmp.eq.s32.totalorder %s14, 1
    %p100 = por %p98, %p99
    %p101 = scmp.ne.s32.totalorder %s90, %s91
    %p102 = scmp.eq.s32.totalorder %s14, 0
    %p103 = por %p101, %p102
    %p104 = scmp.ne.s32.totalorder %s90, %s91
    %p105 = scmp.eq.s32.totalorder %s15, 1
    %p106 = por %p104, %p105
    %p108 = scmp.ne.s32.totalorder %s91, %s107
    %p109 = scmp.eq.s32.totalorder %s15, 0
    %p110 = por %p108, %p109
    %p111 = scmp.le.s32.totalorder 1, %s9
    %p112 = scmp.lt.s32.totalorder %s9, 3
    %p113 = pnand %p111, %p112
    %p114 = pneg %p113
    // Predicated region
    $region9: #{vilt_vqa_forward.15} parent=5 // pred_check
      _
    $region10: #{vilt_vqa_forward.15} parent=5 // pred_check_branch
      %116 = sbr.rel (%p113) target = $region12
    $region11: #{vilt_vqa_forward.15} parent=5 // pred_region
      %s117 = ssub.s32 %s9, 1
      // Predicated region
      $region13: #{vilt_vqa_forward.15} parent=11 // pred_check
        %p118 = pneg %p56
      $region14: #{vilt_vqa_forward.15} parent=11 // pred_check_branch
        %120 = sbr.rel (%p118) target = $region16
      $region15: #{vilt_vqa_forward.15} parent=11 // pred_region
        _
      $region16: #{vilt_vqa_forward.15} parent=11 // pred_fallthru
        _
      // Predicated region
      $region17: #{vilt_vqa_forward.15} parent=11 // pred_check
        %p121 = pneg %p77
      $region18: #{vilt_vqa_forward.15} parent=11 // pred_check_branch
        %123 = sbr.rel (%p121) target = $region20
      $region19: #{vilt_vqa_forward.15} parent=11 // pred_region
        _
      $region20: #{vilt_vqa_forward.15} parent=11 // pred_fallthru
        _
    $region12: #{vilt_vqa_forward.15} parent=5 // pred_fallthru
      _
    %p124 = scmp.lt.s32.totalorder %s9, 2
    // Predicated region
    $region21: #{vilt_vqa_forward.15} parent=5 // pred_check
      %p125 = pneg %p124
    $region22: #{vilt_vqa_forward.15} parent=5 // pred_check_branch
      %127 = sbr.rel (%p125) target = $region24
    $region23: #{vilt_vqa_forward.15} parent=5 // pred_region
      // Predicated region
      $region25: #{vilt_vqa_forward.15} parent=23 // pred_check
        %p128 = pneg %p29
      $region26: #{vilt_vqa_forward.15} parent=23 // pred_check_branch
        %130 = sbr.rel (%p128) target = $region28
      $region27: #{vilt_vqa_forward.15} parent=23 // pred_region
        %p131 = scmp.lt.s32.totalorder %s9, 1
        %s132 = scalar_select %p131, %s9, 1
        %s133 = smul.addr %s132, 8
        %s134 = scalar_lea.vmem %s0, %s133
      $region28: #{vilt_vqa_forward.15} parent=23 // pred_fallthru
        _
    $region24: #{vilt_vqa_forward.15} parent=5 // pred_fallthru
      _
    %p135 = scmp.le.s32.totalorder 1, %s9
    %p136 = scmp.lt.s32.totalorder %s9, 3
    %p137 = pnand %p135, %p136
    %p138 = pneg %p137
    // Predicated region
    $region29: #{vilt_vqa_forward.15} parent=5 // pred_check
      _
    $region30: #{vilt_vqa_forward.15} parent=5 // pred_check_branch
      %140 = sbr.rel (%p137) target = $region32
    $region31: #{vilt_vqa_forward.15} parent=5 // pred_region
      %s141 = ssub.s32 %s9, 1
      %p142 = scmp.lt.s32.totalorder %s14, 1
      %s143 = scalar_select %p142, %s14, 1
      %s144 = smul.addr %s143, 8
      %s145 = scalar_lea.vmem %s0, %s144
      %p146 = pneg %p35
      %p147 = pneg %p32
      %p148 = pneg %p56
      %p149 = pneg %p53
      %p150 = pneg %p77
      %p151 = pneg %p74
      %p152 = pneg %p103
      %p153 = pneg %p100
      %p154 = scmp.lt.s32.totalorder %s14, 1
      %s155 = scalar_select %p154, %s14, 1
      %s156 = smul.addr %s155, 8
      %s157 = scalar_lea.vmem %s3, %s156
      %p158 = scmp.lt.s32.totalorder %s14, 1
      %s159 = scalar_select %p158, %s14, 1
      %s160 = smul.addr %s159, 8
      %s161 = scalar_lea.vmem %s0, %s160
      %p162 = scmp.lt.s32.totalorder %s14, 1
      %s163 = scalar_select %p162, %s14, 1
      %s164 = smul.addr %s163, 8
      %s165 = scalar_lea.vmem %s3, %s164
      %v166 = vld [vmem:[%s161] sm:$0xff]
      %vm167 = vcmask 261120
      %v168 = vsel %vm167, %v166, 0.0
      %169 = vadd.xlane.f32.xlu0 %v168
      %v170 = vpop.xlane.xlu0 %169
      %v171 = vrcp.pop 32.0
      %v172 = vmul.f32 %v170, %v171
      %v173 = vsub.f32 %v166, %v172
      %v174 = vmul.f32 %v173, %v173
      %v175 = vsel %vm167, %v174, 0.0
      %176 = vadd.xlane.f32.xlu0 %v175
      %v177 = vpop.xlane.xlu0 %176
      %v178 = vmul.f32 %v177, %v171
      %v179 = vadd.f32 %v178, 1e-12
      %v180 = vrsqrt.pop %v179
      %v181 = vmul.f32 %v173, %v180
      %v182 = vld [vmem:[%s1] sm:$0x1]
      %v184 = vlaneseq
      %v185 = vshrl.u32 %v184, 7
      %v186 = vsub.s32 0, %v185
      %v187 = vrot.slane %v182, %v186
      %v189 = vmul.f32 %v181, %v187
      %v190 = vld [vmem:[%s2] sm:$0x1]
      %v192 = vlaneseq
      %v193 = vshrl.u32 %v192, 7
      %v194 = vsub.s32 0, %v193
      %v195 = vrot.slane %v190, %v194
      %v197 = vadd.f32 %v189, %v195
      %198 = vst.msk [vmem:[%s165] sm:$0xff] %vm167, %v197
      %p199 = scmp.lt.s32.totalorder %s14, 1
      %s200 = scalar_select %p199, %s14, 1
      %s201 = smul.addr %s200, 8
      %s202 = scalar_lea.vmem %s3, %s201
      // Predicated region
      $region33: #{vilt_vqa_forward.15} parent=31 // pred_check
        %p203 = pneg %p100
      $region34: #{vilt_vqa_forward.15} parent=31 // pred_check_branch
        %205 = sbr.rel (%p203) target = $region36
      $region35: #{vilt_vqa_forward.15} parent=31 // pred_region
        _
      $region36: #{vilt_vqa_forward.15} parent=31 // pred_fallthru
        _
    $region32: #{vilt_vqa_forward.15} parent=5 // pred_fallthru
      _
    %p206 = scmp.le.s32.totalorder 2, %s9
    // Predicated region
    $region37: #{vilt_vqa_forward.15} parent=5 // pred_check
      %p207 = pneg %p206
    $region38: #{vilt_vqa_forward.15} parent=5 // pred_check_branch
      %209 = sbr.rel (%p207) target = $region40
    $region39: #{vilt_vqa_forward.15} parent=5 // pred_region
      %s210 = ssub.s32 %s9, 2
      // Predicated region
      $region41: #{vilt_vqa_forward.15} parent=39 // pred_check
        %p211 = pneg %p106
      $region42: #{vilt_vqa_forward.15} parent=39 // pred_check_branch
        %213 = sbr.rel (%p211) target = $region44
      $region43: #{vilt_vqa_forward.15} parent=39 // pred_region
        %p214 = scmp.lt.s32.totalorder %s15, 1
        %s215 = scalar_select %p214, %s15, 1
        %s216 = smul.addr %s215, 8
        %s217 = scalar_lea.vmem %s3, %s216
      $region44: #{vilt_vqa_forward.15} parent=39 // pred_fallthru
        _
    $region40: #{vilt_vqa_forward.15} parent=5 // pred_fallthru
      _
  $region6: #{vilt_vqa_forward.15} parent=0 // loop_footer
    %s13 = sadd.s32 1, %s9
  $region7: #{vilt_vqa_forward.15} parent=0 // loop_footer_branch
    %8 = sbr.rel target = $region3
  $region8: #{vilt_vqa_forward.15} parent=0 // loop_exit
    _

// kernel: vilt_vqa_forward.19
$region0: #{vilt_vqa_forward.19}
  #allocation0 [shape = 'u32[]', space=smem, size = 0x4, offset = 0x4, fixed_abs, tag = 'smem constant byte address 0x4 - core index']
  #allocation1 [shape = 'u32[144,128]{1,0:T(1,128)}', space=vmem, size = 0x12000, scoped, tag = 'internal scratch']
  %s0 = inlined_call_operand.vmem [shape: bf16[32,32], index: 0, kind: input, shape index: {}]
  %s1 = inlined_call_operand.vmem [shape: bf16[32,32], index: 1, kind: input, shape index: {}]
  %s2 = inlined_call_operand.vmem [shape: f32[1,32], index: 2, kind: input, shape index: {}]
  %s3 = inlined_call_operand.vmem [shape: f32[32,32], index: 3, kind: input, shape index: {}]
  %s4 = inlined_call_operand.vmem [shape: f32[32,32], index: 4, kind: output, shape index: {}]
  %s5 = sld [smem:[#allocation0]]
  $region49: #{vilt_vqa_forward.19} parent=0
    _
  %s7 = ssub.s32 1, %s5
  %s8 = scalar_select 0, %s7, %s5
  loop: start=0, step=1, limit=4
  $region2: #{vilt_vqa_forward.19} parent=0 // loop_pre_header
    _
  $region3: #{vilt_vqa_forward.19} parent=0 // loop_header
    %s10 = sphi 0, %s14
    %p11 = scmp.ge.s32.totalorder %s10, 4
    %s20 = sphi 0, %s22
    %s23 = sphi 0, %s20
    %s24 = sphi 0, %s23
    %s40 = sphi 0, %s24
    %s44 = sphi 0, %s44
    %s46 = sphi 0, %s44
    %s47 = sphi 0, %s46
    %s61 = sphi 0, %s47
    %s65 = sphi 0, %s65
    %s67 = sphi 0, %s65
    %s68 = sphi 0, %s67
    %s82 = sphi 0, %s68
    %s88 = sphi 0, %s90
    %s91 = sphi 0, %s88
    %s92 = sphi 0, %s91
    %s108 = sphi 0, %s92
    %s114 = sphi 0, %s116
    %s117 = sphi 0, %s114
    %s118 = sphi 0, %s117
    %s134 = sphi 0, %s118
  $region4: #{vilt_vqa_forward.19} parent=0 // loop_header_branch
    %13 = sbr.rel (%p11) target = $region8
  $region5: #{vilt_vqa_forward.19} parent=0 // loop_body
    %s15 = ssub.s32 %s10, 1
    %s16 = ssub.s32 %s10, 2
    %s17 = sadd.s32 %s10, 1
    %s18 = ssub.s32 %s10, %s17
    %p19 = scmp.eq.s32.totalorder %s18, 0
    %s21 = sadd.s32 %s20, 1
    %s22 = scalar_select %p19, %s20, %s21
    %p25 = pneg %p19
    %p26 = scmp.eq.s32.totalorder %s10, 1
    %p27 = por %p25, %p26
    %p28 = scmp.ne.s32.totalorder %s20, %s23
    %p29 = scmp.eq.s32.totalorder %s10, 0
    %p30 = por %p28, %p29
    %p31 = scmp.ne.s32.totalorder %s20, %s23
    %p32 = scmp.eq.s32.totalorder %s15, 1
    %p33 = por %p31, %p32
    %p34 = scmp.ne.s32.totalorder %s23, %s24
    %p35 = scmp.eq.s32.totalorder %s15, 0
    %p36 = por %p34, %p35
    %p37 = scmp.ne.s32.totalorder %s23, %s24
    %p38 = scmp.eq.s32.totalorder %s16, 1
    %p39 = por %p37, %p38
    %p41 = scmp.ne.s32.totalorder %s24, %s40
    %p42 = scmp.eq.s32.totalorder %s16, 0
    %p43 = por %p41, %p42
    %s45 = sadd.s32 %s44, 1
    %p48 = scmp.eq.s32.totalorder %s10, 1
    %p49 = scmp.ne.s32.totalorder %s44, %s46
    %p50 = scmp.eq.s32.totalorder %s10, 0
    %p51 = por %p49, %p50
    %p52 = scmp.ne.s32.totalorder %s44, %s46
    %p53 = scmp.eq.s32.totalorder %s15, 1
    %p54 = por %p52, %p53
    %p55 = scmp.ne.s32.totalorder %s46, %s47
    %p56 = scmp.eq.s32.totalorder %s15, 0
    %p57 = por %p55, %p56
    %p58 = scmp.ne.s32.totalorder %s46, %s47
    %p59 = scmp.eq.s32.totalorder %s16, 1
    %p60 = por %p58, %p59
    %p62 = scmp.ne.s32.totalorder %s47, %s61
    %p63 = scmp.eq.s32.totalorder %s16, 0
    %p64 = por %p62, %p63
    %s66 = sadd.s32 %s65, 1
    %p69 = scmp.eq.s32.totalorder %s10, 1
    %p70 = scmp.ne.s32.totalorder %s65, %s67
    %p71 = scmp.eq.s32.totalorder %s10, 0
    %p72 = por %p70, %p71
    %p73 = scmp.ne.s32.totalorder %s65, %s67
    %p74 = scmp.eq.s32.totalorder %s15, 1
    %p75 = por %p73, %p74
    %p76 = scmp.ne.s32.totalorder %s67, %s68
    %p77 = scmp.eq.s32.totalorder %s15, 0
    %p78 = por %p76, %p77
    %p79 = scmp.ne.s32.totalorder %s67, %s68
    %p80 = scmp.eq.s32.totalorder %s16, 1
    %p81 = por %p79, %p80
    %p83 = scmp.ne.s32.totalorder %s68, %s82
    %p84 = scmp.eq.s32.totalorder %s16, 0
    %p85 = por %p83, %p84
    %s86 = ssub.s32 %s10, %s17
    %p87 = scmp.eq.s32.totalorder %s86, 0
    %s89 = sadd.s32 %s88, 1
    %s90 = scalar_select %p87, %s88, %s89
    %p93 = pneg %p87
    %p94 = scmp.eq.s32.totalorder %s10, 1
    %p95 = por %p93, %p94
    %p96 = scmp.ne.s32.totalorder %s88, %s91
    %p97 = scmp.eq.s32.totalorder %s10, 0
    %p98 = por %p96, %p97
    %p99 = scmp.ne.s32.totalorder %s88, %s91
    %p100 = scmp.eq.s32.totalorder %s15, 1
    %p101 = por %p99, %p100
    %p102 = scmp.ne.s32.totalorder %s91, %s92
    %p103 = scmp.eq.s32.totalorder %s15, 0
    %p104 = por %p102, %p103
    %p105 = scmp.ne.s32.totalorder %s91, %s92
    %p106 = scmp.eq.s32.totalorder %s16, 1
    %p107 = por %p105, %p106
    %p109 = scmp.ne.s32.totalorder %s92, %s108
    %p110 = scmp.eq.s32.totalorder %s16, 0
    %p111 = por %p109, %p110
    %s112 = ssub.s32 %s10, %s17
    %p113 = scmp.eq.s32.totalorder %s112, 0
    %s115 = sadd.s32 %s114, 1
    %s116 = scalar_select %p113, %s114, %s115
    %p119 = pneg %p113
    %p120 = scmp.eq.s32.totalorder %s10, 1
    %p121 = por %p119, %p120
    %p122 = scmp.ne.s32.totalorder %s114, %s117
    %p123 = scmp.eq.s32.totalorder %s10, 0
    %p124 = por %p122, %p123
    %p125 = scmp.ne.s32.totalorder %s114, %s117
    %p126 = scmp.eq.s32.totalorder %s15, 1
    %p127 = por %p125, %p126
    %p128 = scmp.ne.s32.totalorder %s117, %s118
    %p129 = scmp.eq.s32.totalorder %s15, 0
    %p130 = por %p128, %p129
    %p131 = scmp.ne.s32.totalorder %s117, %s118
    %p132 = scmp.eq.s32.totalorder %s16, 1
    %p133 = por %p131, %p132
    %p135 = scmp.ne.s32.totalorder %s118, %s134
    %p136 = scmp.eq.s32.totalorder %s16, 0
    %p137 = por %p135, %p136
    %p138 = scmp.le.s32.totalorder 1, %s10
    %p139 = scmp.lt.s32.totalorder %s10, 3
    %p140 = pnand %p138, %p139
    %p141 = pneg %p140
    // Predicated region
    $region9: #{vilt_vqa_forward.19} parent=5 // pred_check
      _
    $region10: #{vilt_vqa_forward.19} parent=5 // pred_check_branch
      %143 = sbr.rel (%p140) target = $region12
    $region11: #{vilt_vqa_forward.19} parent=5 // pred_region
      %s144 = ssub.s32 %s10, 1
      // Predicated region
      $region13: #{vilt_vqa_forward.19} parent=11 // pred_check
        %p145 = pneg %p57
      $region14: #{vilt_vqa_forward.19} parent=11 // pred_check_branch
        %147 = sbr.rel (%p145) target = $region16
      $region15: #{vilt_vqa_forward.19} parent=11 // pred_region
        _
      $region16: #{vilt_vqa_forward.19} parent=11 // pred_fallthru
        _
      // Predicated region
      $region17: #{vilt_vqa_forward.19} parent=11 // pred_check
        %p148 = pneg %p78
      $region18: #{vilt_vqa_forward.19} parent=11 // pred_check_branch
        %150 = sbr.rel (%p148) target = $region20
      $region19: #{vilt_vqa_forward.19} parent=11 // pred_region
        _
      $region20: #{vilt_vqa_forward.19} parent=11 // pred_fallthru
        _
    $region12: #{vilt_vqa_forward.19} parent=5 // pred_fallthru
      _
    %p151 = scmp.lt.s32.totalorder %s10, 2
    // Predicated region
    $region21: #{vilt_vqa_forward.19} parent=5 // pred_check
      %p152 = pneg %p151
    $region22: #{vilt_vqa_forward.19} parent=5 // pred_check_branch
      %154 = sbr.rel (%p152) target = $region24
    $region23: #{vilt_vqa_forward.19} parent=5 // pred_region
      // Predicated region
      $region25: #{vilt_vqa_forward.19} parent=23 // pred_check
        %p155 = pneg %p30
      $region26: #{vilt_vqa_forward.19} parent=23 // pred_check_branch
        %157 = sbr.rel (%p155) target = $region28
      $region27: #{vilt_vqa_forward.19} parent=23 // pred_region
        %s158 = smul.u32 2, %s10
        %p159 = scmp.lt.s32.totalorder %s158, 3
        %s160 = scalar_select %p159, %s158, 3
        %s161 = smul.addr %s160, 4
        %s162 = scalar_lea.vmem %s0, %s161
        %s163 = smul.u32 2, %s10
      $region28: #{vilt_vqa_forward.19} parent=23 // pred_fallthru
        _
      // Predicated region
      $region29: #{vilt_vqa_forward.19} parent=23 // pred_check
        %p164 = pneg %p98
      $region30: #{vilt_vqa_forward.19} parent=23 // pred_check_branch
        %166 = sbr.rel (%p164) target = $region32
      $region31: #{vilt_vqa_forward.19} parent=23 // pred_region
        %s167 = smul.u32 2, %s10
        %p168 = scmp.lt.s32.totalorder %s167, 3
        %s169 = scalar_select %p168, %s167, 3
        %s170 = smul.addr %s169, 8
        %s171 = scalar_lea.vmem %s3, %s170
        %s172 = smul.u32 2, %s10
      $region32: #{vilt_vqa_forward.19} parent=23 // pred_fallthru
        _
    $region24: #{vilt_vqa_forward.19} parent=5 // pred_fallthru
      _
    %p173 = scmp.le.s32.totalorder 1, %s10
    %p174 = scmp.lt.s32.totalorder %s10, 3
    %p175 = pnand %p173, %p174
    %p176 = pneg %p175
    // Predicated region
    $region33: #{vilt_vqa_forward.19} parent=5 // pred_check
      _
    $region34: #{vilt_vqa_forward.19} parent=5 // pred_check_branch
      %178 = sbr.rel (%p175) target = $region36
    $region35: #{vilt_vqa_forward.19} parent=5 // pred_region
      %s179 = ssub.s32 %s10, 1
      %s180 = smul.u32 2, %s15
      %p181 = scmp.lt.s32.totalorder %s180, 3
      %s182 = scalar_select %p181, %s180, 3
      %s183 = smul.addr %s182, 4
      %s184 = scalar_lea.vmem %s0, %s183
      %p185 = pneg %p36
      %p186 = pneg %p33
      %p187 = pneg %p57
      %p188 = pneg %p54
      %p189 = pneg %p78
      %p190 = pneg %p75
      %s191 = smul.u32 2, %s15
      %p192 = scmp.lt.s32.totalorder %s191, 3
      %s193 = scalar_select %p192, %s191, 3
      %s194 = smul.addr %s193, 8
      %s195 = scalar_lea.vmem %s3, %s194
      %p196 = pneg %p104
      %p197 = pneg %p101
      %p198 = pneg %p130
      %p199 = pneg %p127
      %s200 = smul.u32 2, %s15
      %p201 = scmp.lt.s32.totalorder %s200, 3
      %s202 = scalar_select %p201, %s200, 3
      %s203 = smul.addr %s202, 8
      %s204 = scalar_lea.vmem %s4, %s203
      %s205 = smul.u32 2, %s15
      %p206 = scmp.lt.s32.totalorder %s205, 3
      %s207 = scalar_select %p206, %s205, 3
      %s208 = smul.addr %s207, 4
      %s209 = scalar_lea.vmem %s0, %s208
      %s210 = smul.u32 2, %s15
      %s211 = smul.u32 2, %s15
      %p212 = scmp.lt.s32.totalorder %s211, 3
      %s213 = scalar_select %p212, %s211, 3
      %s214 = smul.addr %s213, 8
      %s215 = scalar_lea.vmem %s3, %s214
      %s216 = smul.u32 2, %s15
      %s217 = smul.u32 2, %s15
      %p218 = scmp.lt.s32.totalorder %s217, 3
      %s219 = scalar_select %p218, %s217, 3
      %s220 = smul.addr %s219, 8
      %s221 = scalar_lea.vmem %s4, %s220
      %s222 = smul.u32 2, %s15
      %v224 = vld [vmem:[%s209] sm:$0xf]
      %v225 = vld [vmem:[%s209 + $0x4] sm:$0xf]
      %v226 = vld [vmem:[%s1] sm:$0xf]
      %v227 = vld [vmem:[%s1 + $0x4] sm:$0xf]
      %v228 = vld [vmem:[%s1 + $0x8] sm:$0xf]
      %v229 = vld [vmem:[%s1 + $0xc] sm:$0xf]
      %v230 = vld [vmem:[%s2] sm:$0x1]
      %v232 = vlaneseq
      %v233 = vshrl.u32 %v232, 7
      %v234 = vsub.s32 0, %v233
      %v235 = vrot.slane %v230, %v234
      %v239 = vunpack.c.l.b16 %v224
      %v240 = vunpack.c.l.b16 %v225
      %v241 = vpack.c.b16 %v240, %v239
      %v246 = vunpack.c.l.b16 %v226
      %v247 = vunpack.c.l.b16 %v227
      %v248 = vunpack.c.l.b16 %v228
      %v249 = vunpack.c.l.b16 %v229
      %v250 = vpack.c.b16 %v247, %v246
      %v251 = vpack.c.b16 %v249, %v248
      %vm254 = vcmask 261120
      %v256 = vsel %vm254, %v241, 0
      %258 = vmatprep.subr.bf16.mxu0 0
      %259 = vmatpush1.bf16.msra.mxu0 %v250
      %260 = vmatprep.subr.bf16.mxu0 0
      %261 = vmatpush1.bf16.msra.mxu0 %v251
      %262 = vmatprep.subr.bf16.mxu0 0
      %263 = vmatpush1.bf16.msra.mxu0 0
      %264 = vmatprep.subr.bf16.mxu0 0
      %265 = vmatpush1.bf16.msra.mxu0 0
      %266 = vmatprep.subr.bf16.mxu0 0
      %267 = vmatpush1.bf16.msra.mxu0 0
      %268 = vmatprep.subr.bf16.mxu0 0
      %269 = vmatpush1.bf16.msra.mxu0 0
      %270 = vmatprep.subr.bf16.mxu0 0
      %271 = vmatpush1.bf16.msra.mxu0 0
      %272 = vmatprep.subr.bf16.mxu0 0
      %273 = vmatpush1.bf16.msra.mxu0 0
      %274 = vmatprep.subr.bf16.mxu0 0
      %275 = vmatpush1.bf16.msra.mxu0 0
      %276 = vmatprep.subr.bf16.mxu0 0
      %277 = vmatpush1.bf16.msra.mxu0 0
      %278 = vmatprep.subr.bf16.mxu0 0
      %279 = vmatpush1.bf16.msra.mxu0 0
      %280 = vmatprep.subr.bf16.mxu0 0
      %281 = vmatpush1.bf16.msra.mxu0 0
      %282 = vmatprep.subr.bf16.mxu0 0
      %283 = vmatpush1.bf16.msra.mxu0 0
      %284 = vmatprep.subr.bf16.mxu0 0
      %285 = vmatpush1.bf16.msra.mxu0 0
      %286 = vmatprep.subr.bf16.mxu0 0
      %287 = vmatpush1.bf16.msra.mxu0 0
      %288 = vmatprep.subr.bf16.mxu0 0
      %289 = vmatpush1.bf16.msra.mxu0 0
      %290 = vmatprep.mubr.bf16.mxu0 0
      %291 = vmatmul.mubr.bf16.gmra.mrb[0].mxu0 %v256
      %v292 = vpop.f32.mrb[0].mxu0
      %v293 = vadd.f32 %v235, %v292
      %v294 = vpop.f32.mrb[0].mxu0
      %v295 = vpop.f32.mrb[0].mxu0
      %v296 = vadd.f32 %v235, %v295
      %v297 = vpop.f32.mrb[0].mxu0
      %298 = vdwg.mxu0
      %v299 = vld [vmem:[%s215] sm:$0xff]
      %v300 = vld [vmem:[%s215 + $0x8] sm:$0xff]
      %v301 = vadd.f32 %v293, %v299
      %v302 = vadd.f32 %v296, %v300
      %303 = vst.msk [vmem:[%s221] sm:$0xff] %vm254, %v301
      %304 = vst.msk [vmem:[%s221 + $0x8] sm:$0xff] %vm254, %v302
      %s305 = smul.u32 2, %s15
      %p306 = scmp.lt.s32.totalorder %s305, 3
      %s307 = scalar_select %p306, %s305, 3
      %s308 = smul.addr %s307, 8
      %s309 = scalar_lea.vmem %s4, %s308
      // Predicated region
      $region37: #{vilt_vqa_forward.19} parent=35 // pred_check
        %p310 = pneg %p127
      $region38: #{vilt_vqa_forward.19} parent=35 // pred_check_branch
        %312 = sbr.rel (%p310) target = $region40
      $region39: #{vilt_vqa_forward.19} parent=35 // pred_region
        %s313 = smul.u32 2, %s15
      $region40: #{vilt_vqa_forward.19} parent=35 // pred_fallthru
        _
    $region36: #{vilt_vqa_forward.19} parent=5 // pred_fallthru
      _
    %p314 = scmp.le.s32.totalorder 2, %s10
    // Predicated region
    $region41: #{vilt_vqa_forward.19} parent=5 // pred_check
      %p315 = pneg %p314
    $region42: #{vilt_vqa_forward.19} parent=5 // pred_check_branch
      %317 = sbr.rel (%p315) target = $region44
    $region43: #{vilt_vqa_forward.19} parent=5 // pred_region
      %s318 = ssub.s32 %s10, 2
      // Predicated region
      $region45: #{vilt_vqa_forward.19} parent=43 // pred_check
        %p319 = pneg %p133
      $region46: #{vilt_vqa_forward.19} parent=43 // pred_check_branch
        %321 = sbr.rel (%p319) target = $region48
      $region47: #{vilt_vqa_forward.19} parent=43 // pred_region
        %s322 = smul.u32 2, %s16
        %p323 = scmp.lt.s32.totalorder %s322, 3
        %s324 = scalar_select %p323, %s322, 3
        %s325 = smul.addr %s324, 8
        %s326 = scalar_lea.vmem %s4, %s325
      $region48: #{vilt_vqa_forward.19} parent=43 // pred_fallthru
        _
    $region44: #{vilt_vqa_forward.19} parent=5 // pred_fallthru
      _
  $region6: #{vilt_vqa_forward.19} parent=0 // loop_footer
    %s14 = sadd.s32 1, %s10
  $region7: #{vilt_vqa_forward.19} parent=0 // loop_footer_branch
    %9 = sbr.rel target = $region3
  $region8: #{vilt_vqa_forward.19} parent=0 // loop_exit
    _

// kernel: vilt_vqa_forward.18
$region0: #{vilt_vqa_forward.18}
  #allocation0 [shape = 'u32[]', space=smem, size = 0x4, offset = 0x4, fixed_abs, tag = 'smem constant byte address 0x4 - core index']
  #allocation1 [shape = 'u32[144,128]{1,0:T(1,128)}', space=vmem, size = 0x12000, scoped, tag = 'internal scratch']
  %s0 = inlined_call_operand.vmem [shape: bf16[2,16,96], index: 0, kind: input, shape index: {}]
  %s1 = inlined_call_operand.vmem [shape: f32[2,1,16], index: 1, kind: input, shape index: {}]
  %s2 = inlined_call_operand.vmem [shape: bf16[2,16,32], index: 2, kind: output, shape index: {}]
  %s3 = sld [smem:[#allocation0]]
  $region41: #{vilt_vqa_forward.18} parent=0
    _
  %s5 = ssub.s32 1, %s3
  %s6 = scalar_select 0, %s5, %s3
  loop: start=0, step=1, limit=4
  $region2: #{vilt_vqa_forward.18} parent=0 // loop_pre_header
    _
  $region3: #{vilt_vqa_forward.18} parent=0 // loop_header
    %s8 = sphi 0, %s12
    %p9 = scmp.ge.s32.totalorder %s8, 4
    %s18 = sphi 0, %s20
    %s21 = sphi 0, %s18
    %s22 = sphi 0, %s21
    %s38 = sphi 0, %s22
    %s44 = sphi 0, %s46
    %s47 = sphi 0, %s44
    %s48 = sphi 0, %s47
    %s64 = sphi 0, %s48
    %s70 = sphi 0, %s72
    %s73 = sphi 0, %s70
    %s74 = sphi 0, %s73
    %s90 = sphi 0, %s74
  $region4: #{vilt_vqa_forward.18} parent=0 // loop_header_branch
    %11 = sbr.rel (%p9) target = $region8
  $region5: #{vilt_vqa_forward.18} parent=0 // loop_body
    %s13 = ssub.s32 %s8, 1
    %s14 = ssub.s32 %s8, 2
    %s15 = sadd.s32 %s8, 1
    %s16 = ssub.s32 %s8, %s15
    %p17 = scmp.eq.s32.totalorder %s16, 0
    %s19 = sadd.s32 %s18, 1
    %s20 = scalar_select %p17, %s18, %s19
    %p23 = pneg %p17
    %p24 = scmp.eq.s32.totalorder %s8, 1
    %p25 = por %p23, %p24
    %p26 = scmp.ne.s32.totalorder %s18, %s21
    %p27 = scmp.eq.s32.totalorder %s8, 0
    %p28 = por %p26, %p27
    %p29 = scmp.ne.s32.totalorder %s18, %s21
    %p30 = scmp.eq.s32.totalorder %s13, 1
    %p31 = por %p29, %p30
    %p32 = scmp.ne.s32.totalorder %s21, %s22
    %p33 = scmp.eq.s32.totalorder %s13, 0
    %p34 = por %p32, %p33
    %p35 = scmp.ne.s32.totalorder %s21, %s22
    %p36 = scmp.eq.s32.totalorder %s14, 1
    %p37 = por %p35, %p36
    %p39 = scmp.ne.s32.totalorder %s22, %s38
    %p40 = scmp.eq.s32.totalorder %s14, 0
    %p41 = por %p39, %p40
    %s42 = ssub.s32 %s8, %s15
    %p43 = scmp.eq.s32.totalorder %s42, 0
    %s45 = sadd.s32 %s44, 1
    %s46 = scalar_select %p43, %s44, %s45
    %p49 = pneg %p43
    %p50 = scmp.eq.s32.totalorder %s8, 1
    %p51 = por %p49, %p50
    %p52 = scmp.ne.s32.totalorder %s44, %s47
    %p53 = scmp.eq.s32.totalorder %s8, 0
    %p54 = por %p52, %p53
    %p55 = scmp.ne.s32.totalorder %s44, %s47
    %p56 = scmp.eq.s32.totalorder %s13, 1
    %p57 = por %p55, %p56
    %p58 = scmp.ne.s32.totalorder %s47, %s48
    %p59 = scmp.eq.s32.totalorder %s13, 0
    %p60 = por %p58, %p59
    %p61 = scmp.ne.s32.totalorder %s47, %s48
    %p62 = scmp.eq.s32.totalorder %s14, 1
    %p63 = por %p61, %p62
    %p65 = scmp.ne.s32.totalorder %s48, %s64
    %p66 = scmp.eq.s32.totalorder %s14, 0
    %p67 = por %p65, %p66
    %s68 = ssub.s32 %s8, %s15
    %p69 = scmp.eq.s32.totalorder %s68, 0
    %s71 = sadd.s32 %s70, 1
    %s72 = scalar_select %p69, %s70, %s71
    %p75 = pneg %p69
    %p76 = scmp.eq.s32.totalorder %s8, 1
    %p77 = por %p75, %p76
    %p78 = scmp.ne.s32.totalorder %s70, %s73
    %p79 = scmp.eq.s32.totalorder %s8, 0
    %p80 = por %p78, %p79
    %p81 = scmp.ne.s32.totalorder %s70, %s73
    %p82 = scmp.eq.s32.totalorder %s13, 1
    %p83 = por %p81, %p82
    %p84 = scmp.ne.s32.totalorder %s73, %s74
    %p85 = scmp.eq.s32.totalorder %s13, 0
    %p86 = por %p84, %p85
    %p87 = scmp.ne.s32.totalorder %s73, %s74
    %p88 = scmp.eq.s32.totalorder %s14, 1
    %p89 = por %p87, %p88
    %p91 = scmp.ne.s32.totalorder %s74, %s90
    %p92 = scmp.eq.s32.totalorder %s14, 0
    %p93 = por %p91, %p92
    %p94 = scmp.le.s32.totalorder 1, %s8
    %p95 = scmp.lt.s32.totalorder %s8, 3
    %p96 = pnand %p94, %p95
    %p97 = pneg %p96
    // Predicated region
    $region9: #{vilt_vqa_forward.18} parent=5 // pred_check
      _
    $region10: #{vilt_vqa_forward.18} parent=5 // pred_check_branch
      %99 = sbr.rel (%p96) target = $region12
    $region11: #{vilt_vqa_forward.18} parent=5 // pred_region
      %s100 = ssub.s32 %s8, 1
    $region12: #{vilt_vqa_forward.18} parent=5 // pred_fallthru
      _
    %p101 = scmp.lt.s32.totalorder %s8, 2
    // Predicated region
    $region13: #{vilt_vqa_forward.18} parent=5 // pred_check
      %p102 = pneg %p101
    $region14: #{vilt_vqa_forward.18} parent=5 // pred_check_branch
      %104 = sbr.rel (%p102) target = $region16
    $region15: #{vilt_vqa_forward.18} parent=5 // pred_region
      // Predicated region
      $region17: #{vilt_vqa_forward.18} parent=15 // pred_check
        %p105 = pneg %p28
      $region18: #{vilt_vqa_forward.18} parent=15 // pred_check_branch
        %107 = sbr.rel (%p105) target = $region20
      $region19: #{vilt_vqa_forward.18} parent=15 // pred_region
        %p108 = scmp.lt.s32.totalorder %s8, 1
        %s109 = scalar_select %p108, %s8, 1
        %s110 = smul.addr %s109, 2
        %s111 = smul.addr %s110, 4
        %s112 = scalar_lea.vmem %s0, %s111
      $region20: #{vilt_vqa_forward.18} parent=15 // pred_fallthru
        _
      // Predicated region
      $region21: #{vilt_vqa_forward.18} parent=15 // pred_check
        %p113 = pneg %p54
      $region22: #{vilt_vqa_forward.18} parent=15 // pred_check_branch
        %115 = sbr.rel (%p113) target = $region24
      $region23: #{vilt_vqa_forward.18} parent=15 // pred_region
        %p116 = scmp.lt.s32.totalorder %s8, 1
        %s117 = scalar_select %p116, %s8, 1
        %s118 = scalar_lea.vmem %s1, %s117
      $region24: #{vilt_vqa_forward.18} parent=15 // pred_fallthru
        _
    $region16: #{vilt_vqa_forward.18} parent=5 // pred_fallthru
      _
    %p119 = scmp.le.s32.totalorder 1, %s8
    %p120 = scmp.lt.s32.totalorder %s8, 3
    %p121 = pnand %p119, %p120
    %p122 = pneg %p121
    // Predicated region
    $region25: #{vilt_vqa_forward.18} parent=5 // pred_check
      _
    $region26: #{vilt_vqa_forward.18} parent=5 // pred_check_branch
      %124 = sbr.rel (%p121) target = $region28
    $region27: #{vilt_vqa_forward.18} parent=5 // pred_region
      %s125 = ssub.s32 %s8, 1
      %p126 = scmp.lt.s32.totalorder %s13, 1
      %s127 = scalar_select %p126, %s13, 1
      %s128 = smul.addr %s127, 2
      %s129 = smul.addr %s128, 4
      %s130 = scalar_lea.vmem %s0, %s129
      %p131 = pneg %p34
      %p132 = pneg %p31
      %p133 = scmp.lt.s32.totalorder %s13, 1
      %s134 = scalar_select %p133, %s13, 1
      %s135 = scalar_lea.vmem %s1, %s134
      %p136 = pneg %p60
      %p137 = pneg %p57
      %p138 = pneg %p86
      %p139 = pneg %p83
      %p140 = scmp.lt.s32.totalorder %s13, 1
      %s141 = scalar_select %p140, %s13, 1
      %s142 = smul.addr %s141, 2
      %s143 = smul.addr %s142, 4
      %s144 = scalar_lea.vmem %s2, %s143
      %p145 = scmp.lt.s32.totalorder %s13, 1
      %s146 = scalar_select %p145, %s13, 1
      %s147 = smul.addr %s146, 2
      %s148 = smul.addr %s147, 4
      %s149 = scalar_lea.vmem %s0, %s148
      %p150 = scmp.lt.s32.totalorder %s13, 1
      %s151 = scalar_select %p150, %s13, 1
      %s152 = scalar_lea.vmem %s1, %s151
      %p153 = scmp.lt.s32.totalorder %s13, 1
      %s154 = scalar_select %p153, %s13, 1
      %s155 = smul.addr %s154, 2
      %s156 = smul.addr %s155, 4
      %s157 = scalar_lea.vmem %s2, %s156
      %v159 = vld [vmem:[%s149] sm:$0xf]
      %v160 = vld [vmem:[%s149 + $0x4] sm:$0xf]
      %v161 = vld [vmem:[%s152] sm:$0x1]
      %v164 = vunpack.c.l.b16 %v159
      %v165 = vunpack.c.l.b16 %v160
      %v166 = vpack.c.b16 %v165, %v164
      %167 = vrot.lane.b32.xlu0 %v166, 96
      %v168 = vpop.permute.xlu0 %167
      %vm169 = vcmask 64512
      %v171 = vsel %vm169, %v166, 0
      %v174 = vsel %vm169, %v168, 0
      %176 = vmatprep.subr.bf16.mxu0 0
      %177 = vmatpush1.bf16.xpose.msra.mxu0 %v174
      %178 = vmatprep.subr.bf16.mxu0 0
      %179 = vmatpush1.bf16.xpose.msra.mxu0 0
      %180 = vmatprep.subr.bf16.mxu0 0
      %181 = vmatpush1.bf16.xpose.msra.mxu0 0
      %182 = vmatprep.subr.bf16.mxu0 0
      %183 = vmatpush1.bf16.xpose.msra.mxu0 0
      %184 = vmatprep.subr.bf16.mxu0 0
      %185 = vmatpush1.bf16.xpose.msra.mxu0 0
      %186 = vmatprep.subr.bf16.mxu0 0
      %187 = vmatpush1.bf16.xpose.msra.mxu0 0
      %188 = vmatprep.subr.bf16.mxu0 0
      %189 = vmatpush1.bf16.xpose.msra.mxu0 0
      %190 = vmatprep.subr.bf16.mxu0 0
      %191 = vmatpush1.bf16.xpose.msra.mxu0 0
      %192 = vmatprep.subr.bf16.mxu0 0
      %193 = vmatpush1.bf16.xpose.msra.mxu0 0
      %194 = vmatprep.subr.bf16.mxu0 0
      %195 = vmatpush1.bf16.xpose.msra.mxu0 0
      %196 = vmatprep.subr.bf16.mxu0 0
      %197 = vmatpush1.bf16.xpose.msra.mxu0 0
      %198 = vmatprep.subr.bf16.mxu0 0
      %199 = vmatpush1.bf16.xpose.msra.mxu0 0
      %200 = vmatprep.subr.bf16.mxu0 0
      %201 = vmatpush1.bf16.xpose.msra.mxu0 0
      %202 = vmatprep.subr.bf16.mxu0 0
      %203 = vmatpush1.bf16.xpose.msra.mxu0 0
      %204 = vmatprep.subr.bf16.mxu0 0
      %205 = vmatpush1.bf16.xpose.msra.mxu0 0
      %206 = vmatprep.subr.bf16.mxu0 0
      %207 = vmatpush1.bf16.xpose.msra.mxu0 0
      %208 = vmatprep.mubr.bf16.mxu0 0
      %209 = vmatmul.mubr.bf16.gmra.mrb[0].mxu0 %v171
      %v210 = vpop.f32.mrb[0].mxu0
      %v211 = vadd.f32 0.0, %v210
      %v212 = vpop.f32.mrb[0].mxu0
      %v213 = vpop.f32.mrb[0].mxu0
      %v214 = vadd.f32 0.0, %v213
      %v215 = vpop.f32.mrb[0].mxu0
      %216 = vdwg.mxu0
      %v217 = vmul.f32 %v211, 0.35355338
      %v218 = vmul.f32 %v214, 0.35355338
      %v220 = vlaneseq
      %v221 = vshrl.u32 %v220, 7
      %v222 = vsub.s32 0, %v221
      %v223 = vrot.slane %v161, %v222
      %v225 = vadd.f32 %v217, %v223
      %v226 = vadd.f32 %v218, %v223
      %vm227 = vcmask 130048
      %v228 = vsel %vm227, %v225, -inf
      %229 = vmax.xlane.f32.xlu0 %v228
      %v230 = vpop.xlane.xlu0 %229
      %v231 = vsel %vm227, %v226, -inf
      %232 = vmax.xlane.f32.xlu0 %v231
      %v233 = vpop.xlane.xlu0 %232
      %v234 = vsub.f32 %v225, %v230
      %v235 = vsub.f32 %v226, %v233
      %v236 = vmul.f32 %v234, 1.442695
      %v237 = vpow.pop %v236
      %v238 = vmul.f32 %v235, 1.442695
      %v239 = vpow.pop %v238
      %v240 = vsel %vm227, %v237, 0.0
      %241 = vadd.xlane.f32.xlu0 %v240
      %v242 = vpop.xlane.xlu0 %241
      %v243 = vsel %vm227, %v239, 0.0
      %244 = vadd.xlane.f32.xlu0 %v243
      %v245 = vpop.xlane.xlu0 %244
      %v246 = vrcp.pop %v242
      %v247 = vmul.f32 %v237, %v246
      %v248 = vrcp.pop %v245
      %v249 = vmul.f32 %v239, %v248
      %v250 = vpack.c.bf16 %v249, %v247
      %251 = vrot.lane.b32.xlu0 %v166, 64
      %v252 = vpop.permute.xlu0 %251
      %v255 = vsel %vm227, %v250, 0
      %257 = vmatprep.subr.bf16.mxu0 0
      %258 = vmatpush1.bf16.msra.mxu0 %v252
      %259 = vmatprep.subr.bf16.mxu0 0
      %260 = vmatpush1.bf16.msra.mxu0 0
      %261 = vmatprep.subr.bf16.mxu0 0
      %262 = vmatpush1.bf16.msra.mxu0 0
      %263 = vmatprep.subr.bf16.mxu0 0
      %264 = vmatpush1.bf16.msra.mxu0 0
      %265 = vmatprep.subr.bf16.mxu0 0
      %266 = vmatpush1.bf16.msra.mxu0 0
      %267 = vmatprep.subr.bf16.mxu0 0
      %268 = vmatpush1.bf16.msra.mxu0 0
      %269 = vmatprep.subr.bf16.mxu0 0
      %270 = vmatpush1.bf16.msra.mxu0 0
      %271 = vmatprep.subr.bf16.mxu0 0
      %272 = vmatpush1.bf16.msra.mxu0 0
      %273 = vmatprep.subr.bf16.mxu0 0
      %274 = vmatpush1.bf16.msra.mxu0 0
      %275 = vmatprep.subr.bf16.mxu0 0
      %276 = vmatpush1.bf16.msra.mxu0 0
      %277 = vmatprep.subr.bf16.mxu0 0
      %278 = vmatpush1.bf16.msra.mxu0 0
      %279 = vmatprep.subr.bf16.mxu0 0
      %280 = vmatpush1.bf16.msra.mxu0 0
      %281 = vmatprep.subr.bf16.mxu0 0
      %282 = vmatpush1.bf16.msra.mxu0 0
      %283 = vmatprep.subr.bf16.mxu0 0
      %284 = vmatpush1.bf16.msra.mxu0 0
      %285 = vmatprep.subr.bf16.mxu0 0
      %286 = vmatpush1.bf16.msra.mxu0 0
      %287 = vmatprep.subr.bf16.mxu0 0
      %288 = vmatpush1.bf16.msra.mxu0 0
      %289 = vmatprep.mubr.bf16.mxu0 0
      %290 = vmatmul.mubr.bf16.gmra.mrb[0].mxu0 %v255
      %v291 = vpop.f32.mrb[0].mxu0
      %v292 = vadd.f32 0.0, %v291
      %v293 = vpop.f32.mrb[0].mxu0
      %v294 = vpop.f32.mrb[0].mxu0
      %v295 = vadd.f32 0.0, %v294
      %v296 = vpop.f32.mrb[0].mxu0
      %297 = vdwg.mxu0
      %v298 = vpack.c.bf16 %v295, %v292
      %v300 = vunpack.c.l.b16 %v298
      %v301 = vunpack.c.h.b16 %v298
      %v302 = vpack.c.b16 %v300, %v300
      %v303 = vpack.c.b16 %v301, %v301
      %vm306 = vcmask 60416
      %307 = vst.msk [vmem:[%s157] sm:$0xf] %vm306, %v302
      %308 = vst.msk [vmem:[%s157 + $0x4] sm:$0xf] %vm306, %v303
      %309 = vrot.lane.b32.xlu0 %v166, 120
      %v310 = vpop.permute.xlu0 %309
      %311 = vrot.lane.b32.xlu0 %v166, 88
      %v312 = vpop.permute.xlu0 %311
      %v314 = vsel %vm169, %v310, 0
      %v317 = vsel %vm169, %v312, 0
      %319 = vmatprep.subr.bf16.mxu0 0
      %320 = vmatpush1.bf16.xpose.msra.mxu0 %v317
      %321 = vmatprep.subr.bf16.mxu0 0
      %322 = vmatpush1.bf16.xpose.msra.mxu0 0
      %323 = vmatprep.subr.bf16.mxu0 0
      %324 = vmatpush1.bf16.xpose.msra.mxu0 0
      %325 = vmatprep.subr.bf16.mxu0 0
      %326 = vmatpush1.bf16.xpose.msra.mxu0 0
      %327 = vmatprep.subr.bf16.mxu0 0
      %328 = vmatpush1.bf16.xpose.msra.mxu0 0
      %329 = vmatprep.subr.bf16.mxu0 0
      %330 = vmatpush1.bf16.xpose.msra.mxu0 0
      %331 = vmatprep.subr.bf16.mxu0 0
      %332 = vmatpush1.bf16.xpose.msra.mxu0 0
      %333 = vmatprep.subr.bf16.mxu0 0
      %334 = vmatpush1.bf16.xpose.msra.mxu0 0
      %335 = vmatprep.subr.bf16.mxu0 0
      %336 = vmatpush1.bf16.xpose.msra.mxu0 0
      %337 = vmatprep.subr.bf16.mxu0 0
      %338 = vmatpush1.bf16.xpose.msra.mxu0 0
      %339 = vmatprep.subr.bf16.mxu0 0
      %340 = vmatpush1.bf16.xpose.msra.mxu0 0
      %341 = vmatprep.subr.bf16.mxu0 0
      %342 = vmatpush1.bf16.xpose.msra.mxu0 0
      %343 = vmatprep.subr.bf16.mxu0 0
      %344 = vmatpush1.bf16.xpose.msra.mxu0 0
      %345 = vmatprep.subr.bf16.mxu0 0
      %346 = vmatpush1.bf16.xpose.msra.mxu0 0
      %347 = vmatprep.subr.bf16.mxu0 0
      %348 = vmatpush1.bf16.xpose.msra.mxu0 0
      %349 = vmatprep.subr.bf16.mxu0 0
      %350 = vmatpush1.bf16.xpose.msra.mxu0 0
      %351 = vmatprep.mubr.bf16.mxu0 0
      %352 = vmatmul.mubr.bf16.gmra.mrb[0].mxu0 %v314
      %v353 = vpop.f32.mrb[0].mxu0
      %v354 = vadd.f32 0.0, %v353
      %v355 = vpop.f32.mrb[0].mxu0
      %v356 = vpop.f32.mrb[0].mxu0
      %v357 = vadd.f32 0.0, %v356
      %v358 = vpop.f32.mrb[0].mxu0
      %359 = vdwg.mxu0
      %v360 = vmul.f32 %v354, 0.35355338
      %v361 = vmul.f32 %v357, 0.35355338
      %v362 = vadd.f32 %v360, %v223
      %v363 = vadd.f32 %v361, %v223
      %v364 = vsel %vm227, %v362, -inf
      %365 = vmax.xlane.f32.xlu0 %v364
      %v366 = vpop.xlane.xlu0 %365
      %v367 = vsel %vm227, %v363, -inf
      %368 = vmax.xlane.f32.xlu0 %v367
      %v369 = vpop.xlane.xlu0 %368
      %v370 = vsub.f32 %v362, %v366
      %v371 = vsub.f32 %v363, %v369
      %v372 = vmul.f32 %v370, 1.442695
      %v373 = vpow.pop %v372
      %v374 = vmul.f32 %v371, 1.442695
      %v375 = vpow.pop %v374
      %v376 = vsel %vm227, %v373, 0.0
      %377 = vadd.xlane.f32.xlu0 %v376
      %v378 = vpop.xlane.xlu0 %377
      %v379 = vsel %vm227, %v375, 0.0
      %380 = vadd.xlane.f32.xlu0 %v379
      %v381 = vpop.xlane.xlu0 %380
      %v382 = vrcp.pop %v378
      %v383 = vmul.f32 %v373, %v382
      %v384 = vrcp.pop %v381
      %v385 = vmul.f32 %v375, %v384
      %v386 = vpack.c.bf16 %v385, %v383
      %387 = vrot.lane.b32.xlu0 %v166, 56
      %v388 = vpop.permute.xlu0 %387
      %v391 = vsel %vm227, %v386, 0
      %393 = vmatprep.subr.bf16.mxu0 0
      %394 = vmatpush1.bf16.msra.mxu0 %v388
      %395 = vmatprep.subr.bf16.mxu0 0
      %396 = vmatpush1.bf16.msra.mxu0 0
      %397 = vmatprep.subr.bf16.mxu0 0
      %398 = vmatpush1.bf16.msra.mxu0 0
      %399 = vmatprep.subr.bf16.mxu0 0
      %400 = vmatpush1.bf16.msra.mxu0 0
      %401 = vmatprep.subr.bf16.mxu0 0
      %402 = vmatpush1.bf16.msra.mxu0 0
      %403 = vmatprep.subr.bf16.mxu0 0
      %404 = vmatpush1.bf16.msra.mxu0 0
      %405 = vmatprep.subr.bf16.mxu0 0
      %406 = vmatpush1.bf16.msra.mxu0 0
      %407 = vmatprep.subr.bf16.mxu0 0
      %408 = vmatpush1.bf16.msra.mxu0 0
      %409 = vmatprep.subr.bf16.mxu0 0
      %410 = vmatpush1.bf16.msra.mxu0 0
      %411 = vmatprep.subr.bf16.mxu0 0
      %412 = vmatpush1.bf16.msra.mxu0 0
      %413 = vmatprep.subr.bf16.mxu0 0
      %414 = vmatpush1.bf16.msra.mxu0 0
      %415 = vmatprep.subr.bf16.mxu0 0
      %416 = vmatpush1.bf16.msra.mxu0 0
      %417 = vmatprep.subr.bf16.mxu0 0
      %418 = vmatpush1.bf16.msra.mxu0 0
      %419 = vmatprep.subr.bf16.mxu0 0
      %420 = vmatpush1.bf16.msra.mxu0 0
      %421 = vmatprep.subr.bf16.mxu0 0
      %422 = vmatpush1.bf16.msra.mxu0 0
      %423 = vmatprep.subr.bf16.mxu0 0
      %424 = vmatpush1.bf16.msra.mxu0 0
      %425 = vmatprep.mubr.bf16.mxu0 0
      %426 = vmatmul.mubr.bf16.gmra.mrb[0].mxu0 %v391
      %v427 = vpop.f32.mrb[0].mxu0
      %v428 = vadd.f32 0.0, %v427
      %v429 = vpop.f32.mrb[0].mxu0
      %v430 = vpop.f32.mrb[0].mxu0
      %v431 = vadd.f32 0.0, %v430
      %v432 = vpop.f32.mrb[0].mxu0
      %433 = vdwg.mxu0
      %v434 = vpack.c.bf16 %v431, %v428
      %v436 = vunpack.c.l.b16 %v434
      %v437 = vunpack.c.h.b16 %v434
      %v438 = vpack.c.b16 %v436, %v436
      %v439 = vpack.c.b16 %v437, %v437
      %440 = vrot.lane.b32.xlu0 %v438, 8
      %v441 = vpop.permute.xlu0 %440
      %442 = vrot.lane.b32.xlu0 %v439, 8
      %v443 = vpop.permute.xlu0 %442
      %vm446 = vcmask 126016
      %447 = vst.msk [vmem:[%s157] sm:$0xf] %vm446, %v441
      %448 = vst.msk [vmem:[%s157 + $0x4] sm:$0xf] %vm446, %v443
      %449 = vrot.lane.b32.xlu0 %v166, 112
      %v450 = vpop.permute.xlu0 %449
      %451 = vrot.lane.b32.xlu0 %v166, 80
      %v452 = vpop.permute.xlu0 %451
      %v454 = vsel %vm169, %v450, 0
      %v457 = vsel %vm169, %v452, 0
      %459 = vmatprep.subr.bf16.mxu0 0
      %460 = vmatpush1.bf16.xpose.msra.mxu0 %v457
      %461 = vmatprep.subr.bf16.mxu0 0
      %462 = vmatpush1.bf16.xpose.msra.mxu0 0
      %463 = vmatprep.subr.bf16.mxu0 0
      %464 = vmatpush1.bf16.xpose.msra.mxu0 0
      %465 = vmatprep.subr.bf16.mxu0 0
      %466 = vmatpush1.bf16.xpose.msra.mxu0 0
      %467 = vmatprep.subr.bf16.mxu0 0
      %468 = vmatpush1.bf16.xpose.msra.mxu0 0
      %469 = vmatprep.subr.bf16.mxu0 0
      %470 = vmatpush1.bf16.xpose.msra.mxu0 0
      %471 = vmatprep.subr.bf16.mxu0 0
      %472 = vmatpush1.bf16.xpose.msra.mxu0 0
      %473 = vmatprep.subr.bf16.mxu0 0
      %474 = vmatpush1.bf16.xpose.msra.mxu0 0
      %475 = vmatprep.subr.bf16.mxu0 0
      %476 = vmatpush1.bf16.xpose.msra.mxu0 0
      %477 = vmatprep.subr.bf16.mxu0 0
      %478 = vmatpush1.bf16.xpose.msra.mxu0 0
      %479 = vmatprep.subr.bf16.mxu0 0
      %480 = vmatpush1.bf16.xpose.msra.mxu0 0
      %481 = vmatprep.subr.bf16.mxu0 0
      %482 = vmatpush1.bf16.xpose.msra.mxu0 0
      %483 = vmatprep.subr.bf16.mxu0 0
      %484 = vmatpush1.bf16.xpose.msra.mxu0 0
      %485 = vmatprep.subr.bf16.mxu0 0
      %486 = vmatpush1.bf16.xpose.msra.mxu0 0
      %487 = vmatprep.subr.bf16.mxu0 0
      %488 = vmatpush1.bf16.xpose.msra.mxu0 0
      %489 = vmatprep.subr.bf16.mxu0 0
      %490 = vmatpush1.bf16.xpose.msra.mxu0 0
      %491 = vmatprep.mubr.bf16.mxu0 0
      %492 = vmatmul.mubr.bf16.gmra.mrb[0].mxu0 %v454
      %v493 = vpop.f32.mrb[0].mxu0
      %v494 = vadd.f32 0.0, %v493
      %v495 = vpop.f32.mrb[0].mxu0
      %v496 = vpop.f32.mrb[0].mxu0
      %v497 = vadd.f32 0.0, %v496
      %v498 = vpop.f32.mrb[0].mxu0
      %499 = vdwg.mxu0
      %v500 = vmul.f32 %v494, 0.35355338
      %v501 = vmul.f32 %v497, 0.35355338
      %v502 = vadd.f32 %v500, %v223
      %v503 = vadd.f32 %v501, %v223
      %v504 = vsel %vm227, %v502, -inf
      %505 = vmax.xlane.f32.xlu0 %v504
      %v506 = vpop.xlane.xlu0 %505
      %v507 = vsel %vm227, %v503, -inf
      %508 = vmax.xlane.f32.xlu0 %v507
      %v509 = vpop.xlane.xlu0 %508
      %v510 = vsub.f32 %v502, %v506
      %v511 = vsub.f32 %v503, %v509
      %v512 = vmul.f32 %v510, 1.442695
      %v513 = vpow.pop %v512
      %v514 = vmul.f32 %v511, 1.442695
      %v515 = vpow.pop %v514
      %v516 = vsel %vm227, %v513, 0.0
      %517 = vadd.xlane.f32.xlu0 %v516
      %v518 = vpop.xlane.xlu0 %517
      %v519 = vsel %vm227, %v515, 0.0
      %520 = vadd.xlane.f32.xlu0 %v519
      %v521 = vpop.xlane.xlu0 %520
      %v522 = vrcp.pop %v518
      %v523 = vmul.f32 %v513, %v522
      %v524 = vrcp.pop %v521
      %v525 = vmul.f32 %v515, %v524
      %v526 = vpack.c.bf16 %v525, %v523
      %527 = vrot.lane.b32.xlu0 %v166, 48
      %v528 = vpop.permute.xlu0 %527
      %v531 = vsel %vm227, %v526, 0
      %533 = vmatprep.subr.bf16.mxu0 0
      %534 = vmatpush1.bf16.msra.mxu0 %v528
      %535 = vmatprep.subr.bf16.mxu0 0
      %536 = vmatpush1.bf16.msra.mxu0 0
      %537 = vmatprep.subr.bf16.mxu0 0
      %538 = vmatpush1.bf16.msra.mxu0 0
      %539 = vmatprep.subr.bf16.mxu0 0
      %540 = vmatpush1.bf16.msra.mxu0 0
      %541 = vmatprep.subr.bf16.mxu0 0
      %542 = vmatpush1.bf16.msra.mxu0 0
      %543 = vmatprep.subr.bf16.mxu0 0
      %544 = vmatpush1.bf16.msra.mxu0 0
      %545 = vmatprep.subr.bf16.mxu0 0
      %546 = vmatpush1.bf16.msra.mxu0 0
      %547 = vmatprep.subr.bf16.mxu0 0
      %548 = vmatpush1.bf16.msra.mxu0 0
      %549 = vmatprep.subr.bf16.mxu0 0
      %550 = vmatpush1.bf16.msra.mxu0 0
      %551 = vmatprep.subr.bf16.mxu0 0
      %552 = vmatpush1.bf16.msra.mxu0 0
      %553 = vmatprep.subr.bf16.mxu0 0
      %554 = vmatpush1.bf16.msra.mxu0 0
      %555 = vmatprep.subr.bf16.mxu0 0
      %556 = vmatpush1.bf16.msra.mxu0 0
      %557 = vmatprep.subr.bf16.mxu0 0
      %558 = vmatpush1.bf16.msra.mxu0 0
      %559 = vmatprep.subr.bf16.mxu0 0
      %560 = vmatpush1.bf16.msra.mxu0 0
      %561 = vmatprep.subr.bf16.mxu0 0
      %562 = vmatpush1.bf16.msra.mxu0 0
      %563 = vmatprep.subr.bf16.mxu0 0
      %564 = vmatpush1.bf16.msra.mxu0 0
      %565 = vmatprep.mubr.bf16.mxu0 0
      %566 = vmatmul.mubr.bf16.gmra.mrb[0].mxu0 %v531
      %v567 = vpop.f32.mrb[0].mxu0
      %v568 = vadd.f32 0.0, %v567
      %v569 = vpop.f32.mrb[0].mxu0
      %v570 = vpop.f32.mrb[0].mxu0
      %v571 = vadd.f32 0.0, %v570
      %v572 = vpop.f32.mrb[0].mxu0
      %573 = vdwg.mxu0
      %v574 = vpack.c.bf16 %v571, %v568
      %v576 = vunpack.c.l.b16 %v574
      %v577 = vunpack.c.h.b16 %v574
      %v578 = vpack.c.b16 %v576, %v576
      %v579 = vpack.c.b16 %v577, %v577
      %580 = vrot.lane.b32.xlu0 %v578, 16
      %v581 = vpop.permute.xlu0 %580
      %582 = vrot.lane.b32.xlu0 %v579, 16
      %v583 = vpop.permute.xlu0 %582
      %vm586 = vcmask 191616
      %587 = vst.msk [vmem:[%s157] sm:$0xf] %vm586, %v581
      %588 = vst.msk [vmem:[%s157 + $0x4] sm:$0xf] %vm586, %v583
      %589 = vrot.lane.b32.xlu0 %v166, 104
      %v590 = vpop.permute.xlu0 %589
      %591 = vrot.lane.b32.xlu0 %v166, 72
      %v592 = vpop.permute.xlu0 %591
      %v594 = vsel %vm169, %v590, 0
      %v597 = vsel %vm169, %v592, 0
      %599 = vmatprep.subr.bf16.mxu0 0
      %600 = vmatpush1.bf16.xpose.msra.mxu0 %v597
      %601 = vmatprep.subr.bf16.mxu0 0
      %602 = vmatpush1.bf16.xpose.msra.mxu0 0
      %603 = vmatprep.subr.bf16.mxu0 0
      %604 = vmatpush1.bf16.xpose.msra.mxu0 0
      %605 = vmatprep.subr.bf16.mxu0 0
      %606 = vmatpush1.bf16.xpose.msra.mxu0 0
      %607 = vmatprep.subr.bf16.mxu0 0
      %608 = vmatpush1.bf16.xpose.msra.mxu0 0
      %609 = vmatprep.subr.bf16.mxu0 0
      %610 = vmatpush1.bf16.xpose.msra.mxu0 0
      %611 = vmatprep.subr.bf16.mxu0 0
      %612 = vmatpush1.bf16.xpose.msra.mxu0 0
      %613 = vmatprep.subr.bf16.mxu0 0
      %614 = vmatpush1.bf16.xpose.msra.mxu0 0
      %615 = vmatprep.subr.bf16.mxu0 0
      %616 = vmatpush1.bf16.xpose.msra.mxu0 0
      %617 = vmatprep.subr.bf16.mxu0 0
      %618 = vmatpush1.bf16.xpose.msra.mxu0 0
      %619 = vmatprep.subr.bf16.mxu0 0
      %620 = vmatpush1.bf16.xpose.msra.mxu0 0
      %621 = vmatprep.subr.bf16.mxu0 0
      %622 = vmatpush1.bf16.xpose.msra.mxu0 0
      %623 = vmatprep.subr.bf16.mxu0 0
      %624 = vmatpush1.bf16.xpose.msra.mxu0 0
      %625 = vmatprep.subr.bf16.mxu0 0
      %626 = vmatpush1.bf16.xpose.msra.mxu0 0
      %627 = vmatprep.subr.bf16.mxu0 0
      %628 = vmatpush1.bf16.xpose.msra.mxu0 0
      %629 = vmatprep.subr.bf16.mxu0 0
      %630 = vmatpush1.bf16.xpose.msra.mxu0 0
      %631 = vmatprep.mubr.bf16.mxu0 0
      %632 = vmatmul.mubr.bf16.gmra.mrb[0].mxu0 %v594
      %v633 = vpop.f32.mrb[0].mxu0
      %v634 = vadd.f32 0.0, %v633
      %v635 = vpop.f32.mrb[0].mxu0
      %v636 = vpop.f32.mrb[0].mxu0
      %v637 = vadd.f32 0.0, %v636
      %v638 = vpop.f32.mrb[0].mxu0
      %639 = vdwg.mxu0
      %v640 = vmul.f32 %v634, 0.35355338
      %v641 = vmul.f32 %v637, 0.35355338
      %v642 = vadd.f32 %v640, %v223
      %v643 = vadd.f32 %v641, %v223
      %v644 = vsel %vm227, %v642, -inf
      %645 = vmax.xlane.f32.xlu0 %v644
      %v646 = vpop.xlane.xlu0 %645
      %v647 = vsel %vm227, %v643, -inf
      %648 = vmax.xlane.f32.xlu0 %v647
      %v649 = vpop.xlane.xlu0 %648
      %v650 = vsub.f32 %v642, %v646
      %v651 = vsub.f32 %v643, %v649
      %v652 = vmul.f32 %v650, 1.442695
      %v653 = vpow.pop %v652
      %v654 = vmul.f32 %v651, 1.442695
      %v655 = vpow.pop %v654
      %v656 = vsel %vm227, %v653, 0.0
      %657 = vadd.xlane.f32.xlu0 %v656
      %v658 = vpop.xlane.xlu0 %657
      %v659 = vsel %vm227, %v655, 0.0
      %660 = vadd.xlane.f32.xlu0 %v659
      %v661 = vpop.xlane.xlu0 %660
      %v662 = vrcp.pop %v658
      %v663 = vmul.f32 %v653, %v662
      %v664 = vrcp.pop %v661
      %v665 = vmul.f32 %v655, %v664
      %v666 = vpack.c.bf16 %v665, %v663
      %667 = vrot.lane.b32.xlu0 %v166, 40
      %v668 = vpop.permute.xlu0 %667
      %v671 = vsel %vm227, %v666, 0
      %673 = vmatprep.subr.bf16.mxu0 0
      %674 = vmatpush1.bf16.msra.mxu0 %v668
      %675 = vmatprep.subr.bf16.mxu0 0
      %676 = vmatpush1.bf16.msra.mxu0 0
      %677 = vmatprep.subr.bf16.mxu0 0
      %678 = vmatpush1.bf16.msra.mxu0 0
      %679 = vmatprep.subr.bf16.mxu0 0
      %680 = vmatpush1.bf16.msra.mxu0 0
      %681 = vmatprep.subr.bf16.mxu0 0
      %682 = vmatpush1.bf16.msra.mxu0 0
      %683 = vmatprep.subr.bf16.mxu0 0
      %684 = vmatpush1.bf16.msra.mxu0 0
      %685 = vmatprep.subr.bf16.mxu0 0
      %686 = vmatpush1.bf16.msra.mxu0 0
      %687 = vmatprep.subr.bf16.mxu0 0
      %688 = vmatpush1.bf16.msra.mxu0 0
      %689 = vmatprep.subr.bf16.mxu0 0
      %690 = vmatpush1.bf16.msra.mxu0 0
      %691 = vmatprep.subr.bf16.mxu0 0
      %692 = vmatpush1.bf16.msra.mxu0 0
      %693 = vmatprep.subr.bf16.mxu0 0
      %694 = vmatpush1.bf16.msra.mxu0 0
      %695 = vmatprep.subr.bf16.mxu0 0
      %696 = vmatpush1.bf16.msra.mxu0 0
      %697 = vmatprep.subr.bf16.mxu0 0
      %698 = vmatpush1.bf16.msra.mxu0 0
      %699 = vmatprep.subr.bf16.mxu0 0
      %700 = vmatpush1.bf16.msra.mxu0 0
      %701 = vmatprep.subr.bf16.mxu0 0
      %702 = vmatpush1.bf16.msra.mxu0 0
      %703 = vmatprep.subr.bf16.mxu0 0
      %704 = vmatpush1.bf16.msra.mxu0 0
      %705 = vmatprep.mubr.bf16.mxu0 0
      %706 = vmatmul.mubr.bf16.gmra.mrb[0].mxu0 %v671
      %v707 = vpop.f32.mrb[0].mxu0
      %v708 = vadd.f32 0.0, %v707
      %v709 = vpop.f32.mrb[0].mxu0
      %v710 = vpop.f32.mrb[0].mxu0
      %v711 = vadd.f32 0.0, %v710
      %v712 = vpop.f32.mrb[0].mxu0
      %713 = vdwg.mxu0
      %v714 = vpack.c.bf16 %v711, %v708
      %v716 = vunpack.c.l.b16 %v714
      %v717 = vunpack.c.h.b16 %v714
      %v718 = vpack.c.b16 %v716, %v716
      %v719 = vpack.c.b16 %v717, %v717
      %720 = vrot.lane.b32.xlu0 %v718, 24
      %v721 = vpop.permute.xlu0 %720
      %722 = vrot.lane.b32.xlu0 %v719, 24
      %v723 = vpop.permute.xlu0 %722
      %vm726 = vcmask 257216
      %727 = vst.msk [vmem:[%s157] sm:$0xf] %vm726, %v721
      %728 = vst.msk [vmem:[%s157 + $0x4] sm:$0xf] %vm726, %v723
      %p729 = scmp.lt.s32.totalorder %s13, 1
      %s730 = scalar_select %p729, %s13, 1
      %s731 = smul.addr %s730, 2
      %s732 = smul.addr %s731, 4
      %s733 = scalar_lea.vmem %s2, %s732
      // Predicated region
      $region29: #{vilt_vqa_forward.18} parent=27 // pred_check
        %p734 = pneg %p83
      $region30: #{vilt_vqa_forward.18} parent=27 // pred_check_branch
        %736 = sbr.rel (%p734) target = $region32
      $region31: #{vilt_vqa_forward.18} parent=27 // pred_region
        _
      $region32: #{vilt_vqa_forward.18} parent=27 // pred_fallthru
        _
    $region28: #{vilt_vqa_forward.18} parent=5 // pred_fallthru
      _
    %p737 = scmp.le.s32.totalorder 2, %s8
    // Predicated region
    $region33: #{vilt_vqa_forward.18} parent=5 // pred_check
      %p738 = pneg %p737
    $region34: #{vilt_vqa_forward.18} parent=5 // pred_check_branch
      %740 = sbr.rel (%p738) target = $region36
    $region35: #{vilt_vqa_forward.18} parent=5 // pred_region
      %s741 = ssub.s32 %s8, 2
      // Predicated region
      $region37: #{vilt_vqa_forward.18} parent=35 // pred_check
        %p742 = pneg %p89
      $region38: #{vilt_vqa_forward.18} parent=35 // pred_check_branch
        %744 = sbr.rel (%p742) target = $region40
      $region39: #{vilt_vqa_forward.18} parent=35 // pred_region
        %p745 = scmp.lt.s32.totalorder %s14, 1
        %s746 = scalar_select %p745, %s14, 1
        %s747 = smul.addr %s746, 2
        %s748 = smul.addr %s747, 4
        %s749 = scalar_lea.vmem %s2, %s748
      $region40: #{vilt_vqa_forward.18} parent=35 // pred_fallthru
        _
    $region36: #{vilt_vqa_forward.18} parent=5 // pred_fallthru
      _
  $region6: #{vilt_vqa_forward.18} parent=0 // loop_footer
    %s12 = sadd.s32 1, %s8
  $region7: #{vilt_vqa_forward.18} parent=0 // loop_footer_branch
    %7 = sbr.rel target = $region3
  $region8: #{vilt_vqa_forward.18} parent=0 // loop_exit
    _

// kernel: vilt_vqa_forward.20
$region0: #{vilt_vqa_forward.20}
  #allocation0 [shape = 'u32[]', space=smem, size = 0x4, offset = 0x4, fixed_abs, tag = 'smem constant byte address 0x4 - core index']
  #allocation1 [shape = 'u32[144,128]{1,0:T(1,128)}', space=vmem, size = 0x12000, scoped, tag = 'internal scratch']
  %s0 = inlined_call_operand.vmem [shape: f32[32,32], index: 0, kind: input, shape index: {}]
  %s1 = inlined_call_operand.vmem [shape: f32[1,32], index: 1, kind: input, shape index: {}]
  %s2 = inlined_call_operand.vmem [shape: f32[1,32], index: 2, kind: input, shape index: {}]
  %s3 = inlined_call_operand.vmem [shape: bf16[32,128], index: 3, kind: input, shape index: {}]
  %s4 = inlined_call_operand.vmem [shape: f32[1,128], index: 4, kind: input, shape index: {}]
  %s5 = inlined_call_operand.vmem [shape: bf16[32,128], index: 5, kind: output, shape index: {}]
  %s6 = sld [smem:[#allocation0]]
  $region53: #{vilt_vqa_forward.20} parent=0
    _
  %s8 = ssub.s32 1, %s6
  %s9 = scalar_select 0, %s8, %s6
  loop: start=0, step=1, limit=4
  $region2: #{vilt_vqa_forward.20} parent=0 // loop_pre_header
    _
  $region3: #{vilt_vqa_forward.20} parent=0 // loop_header
    %s11 = sphi 0, %s15
    %p12 = scmp.ge.s32.totalorder %s11, 4
    %s21 = sphi 0, %s23
    %s24 = sphi 0, %s21
    %s25 = sphi 0, %s24
    %s41 = sphi 0, %s25
    %s45 = sphi 0, %s45
    %s47 = sphi 0, %s45
    %s48 = sphi 0, %s47
    %s62 = sphi 0, %s48
    %s66 = sphi 0, %s66
    %s68 = sphi 0, %s66
    %s69 = sphi 0, %s68
    %s83 = sphi 0, %s69
    %s87 = sphi 0, %s87
    %s89 = sphi 0, %s87
    %s90 = sphi 0, %s89
    %s104 = sphi 0, %s90
    %s108 = sphi 0, %s108
    %s110 = sphi 0, %s108
    %s111 = sphi 0, %s110
    %s125 = sphi 0, %s111
    %s131 = sphi 0, %s133
    %s134 = sphi 0, %s131
    %s135 = sphi 0, %s134
    %s151 = sphi 0, %s135
  $region4: #{vilt_vqa_forward.20} parent=0 // loop_header_branch
    %14 = sbr.rel (%p12) target = $region8
  $region5: #{vilt_vqa_forward.20} parent=0 // loop_body
    %s16 = ssub.s32 %s11, 1
    %s17 = ssub.s32 %s11, 2
    %s18 = sadd.s32 %s11, 1
    %s19 = ssub.s32 %s11, %s18
    %p20 = scmp.eq.s32.totalorder %s19, 0
    %s22 = sadd.s32 %s21, 1
    %s23 = scalar_select %p20, %s21, %s22
    %p26 = pneg %p20
    %p27 = scmp.eq.s32.totalorder %s11, 1
    %p28 = por %p26, %p27
    %p29 = scmp.ne.s32.totalorder %s21, %s24
    %p30 = scmp.eq.s32.totalorder %s11, 0
    %p31 = por %p29, %p30
    %p32 = scmp.ne.s32.totalorder %s21, %s24
    %p33 = scmp.eq.s32.totalorder %s16, 1
    %p34 = por %p32, %p33
    %p35 = scmp.ne.s32.totalorder %s24, %s25
    %p36 = scmp.eq.s32.totalorder %s16, 0
    %p37 = por %p35, %p36
    %p38 = scmp.ne.s32.totalorder %s24, %s25
    %p39 = scmp.eq.s32.totalorder %s17, 1
    %p40 = por %p38, %p39
    %p42 = scmp.ne.s32.totalorder %s25, %s41
    %p43 = scmp.eq.s32.totalorder %s17, 0
    %p44 = por %p42, %p43
    %s46 = sadd.s32 %s45, 1
    %p49 = scmp.eq.s32.totalorder %s11, 1
    %p50 = scmp.ne.s32.totalorder %s45, %s47
    %p51 = scmp.eq.s32.totalorder %s11, 0
    %p52 = por %p50, %p51
    %p53 = scmp.ne.s32.totalorder %s45, %s47
    %p54 = scmp.eq.s32.totalorder %s16, 1
    %p55 = por %p53, %p54
    %p56 = scmp.ne.s32.totalorder %s47, %s48
    %p57 = scmp.eq.s32.totalorder %s16, 0
    %p58 = por %p56, %p57
    %p59 = scmp.ne.s32.totalorder %s47, %s48
    %p60 = scmp.eq.s32.totalorder %s17, 1
    %p61 = por %p59, %p60
    %p63 = scmp.ne.s32.totalorder %s48, %s62
    %p64 = scmp.eq.s32.totalorder %s17, 0
    %p65 = por %p63, %p64
    %s67 = sadd.s32 %s66, 1
    %p70 = scmp.eq.s32.totalorder %s11, 1
    %p71 = scmp.ne.s32.totalorder %s66, %s68
    %p72 = scmp.eq.s32.totalorder %s11, 0
    %p73 = por %p71, %p72
    %p74 = scmp.ne.s32.totalorder %s66, %s68
    %p75 = scmp.eq.s32.totalorder %s16, 1
    %p76 = por %p74, %p75
    %p77 = scmp.ne.s32.totalorder %s68, %s69
    %p78 = scmp.eq.s32.totalorder %s16, 0
    %p79 = por %p77, %p78
    %p80 = scmp.ne.s32.totalorder %s68, %s69
    %p81 = scmp.eq.s32.totalorder %s17, 1
    %p82 = por %p80, %p81
    %p84 = scmp.ne.s32.totalorder %s69, %s83
    %p85 = scmp.eq.s32.totalorder %s17, 0
    %p86 = por %p84, %p85
    %s88 = sadd.s32 %s87, 1
    %p91 = scmp.eq.s32.totalorder %s11, 1
    %p92 = scmp.ne.s32.totalorder %s87, %s89
    %p93 = scmp.eq.s32.totalorder %s11, 0
    %p94 = por %p92, %p93
    %p95 = scmp.ne.s32.totalorder %s87, %s89
    %p96 = scmp.eq.s32.totalorder %s16, 1
    %p97 = por %p95, %p96
    %p98 = scmp.ne.s32.totalorder %s89, %s90
    %p99 = scmp.eq.s32.totalorder %s16, 0
    %p100 = por %p98, %p99
    %p101 = scmp.ne.s32.totalorder %s89, %s90
    %p102 = scmp.eq.s32.totalorder %s17, 1
    %p103 = por %p101, %p102
    %p105 = scmp.ne.s32.totalorder %s90, %s104
    %p106 = scmp.eq.s32.totalorder %s17, 0
    %p107 = por %p105, %p106
    %s109 = sadd.s32 %s108, 1
    %p112 = scmp.eq.s32.totalorder %s11, 1
    %p113 = scmp.ne.s32.totalorder %s108, %s110
    %p114 = scmp.eq.s32.totalorder %s11, 0
    %p115 = por %p113, %p114
    %p116 = scmp.ne.s32.totalorder %s108, %s110
    %p117 = scmp.eq.s32.totalorder %s16, 1
    %p118 = por %p116, %p117
    %p119 = scmp.ne.s32.totalorder %s110, %s111
    %p120 = scmp.eq.s32.totalorder %s16, 0
    %p121 = por %p119, %p120
    %p122 = scmp.ne.s32.totalorder %s110, %s111
    %p123 = scmp.eq.s32.totalorder %s17, 1
    %p124 = por %p122, %p123
    %p126 = scmp.ne.s32.totalorder %s111, %s125
    %p127 = scmp.eq.s32.totalorder %s17, 0
    %p128 = por %p126, %p127
    %s129 = ssub.s32 %s11, %s18
    %p130 = scmp.eq.s32.totalorder %s129, 0
    %s132 = sadd.s32 %s131, 1
    %s133 = scalar_select %p130, %s131, %s132
    %p136 = pneg %p130
    %p137 = scmp.eq.s32.totalorder %s11, 1
    %p138 = por %p136, %p137
    %p139 = scmp.ne.s32.totalorder %s131, %s134
    %p140 = scmp.eq.s32.totalorder %s11, 0
    %p141 = por %p139, %p140
    %p142 = scmp.ne.s32.totalorder %s131, %s134
    %p143 = scmp.eq.s32.totalorder %s16, 1
    %p144 = por %p142, %p143
    %p145 = scmp.ne.s32.totalorder %s134, %s135
    %p146 = scmp.eq.s32.totalorder %s16, 0
    %p147 = por %p145, %p146
    %p148 = scmp.ne.s32.totalorder %s134, %s135
    %p149 = scmp.eq.s32.totalorder %s17, 1
    %p150 = por %p148, %p149
    %p152 = scmp.ne.s32.totalorder %s135, %s151
    %p153 = scmp.eq.s32.totalorder %s17, 0
    %p154 = por %p152, %p153
    %p155 = scmp.le.s32.totalorder 1, %s11
    %p156 = scmp.lt.s32.totalorder %s11, 3
    %p157 = pnand %p155, %p156
    %p158 = pneg %p157
    // Predicated region
    $region9: #{vilt_vqa_forward.20} parent=5 // pred_check
      _
    $region10: #{vilt_vqa_forward.20} parent=5 // pred_check_branch
      %160 = sbr.rel (%p157) target = $region12
    $region11: #{vilt_vqa_forward.20} parent=5 // pred_region
      %s161 = ssub.s32 %s11, 1
      // Predicated region
      $region13: #{vilt_vqa_forward.20} parent=11 // pred_check
        %p162 = pneg %p58
      $region14: #{vilt_vqa_forward.20} parent=11 // pred_check_branch
        %164 = sbr.rel (%p162) target = $region16
      $region15: #{vilt_vqa_forward.20} parent=11 // pred_region
        _
      $region16: #{vilt_vqa_forward.20} parent=11 // pred_fallthru
        _
      // Predicated region
      $region17: #{vilt_vqa_forward.20} parent=11 // pred_check
        %p165 = pneg %p79
      $region18: #{vilt_vqa_forward.20} parent=11 // pred_check_branch
        %167 = sbr.rel (%p165) target = $region20
      $region19: #{vilt_vqa_forward.20} parent=11 // pred_region
        _
      $region20: #{vilt_vqa_forward.20} parent=11 // pred_fallthru
        _
      // Predicated region
      $region21: #{vilt_vqa_forward.20} parent=11 // pred_check
        %p168 = pneg %p100
      $region22: #{vilt_vqa_forward.20} parent=11 // pred_check_branch
        %170 = sbr.rel (%p168) target = $region24
      $region23: #{vilt_vqa_forward.20} parent=11 // pred_region
        _
      $region24: #{vilt_vqa_forward.20} parent=11 // pred_fallthru
        _
      // Predicated region
      $region25: #{vilt_vqa_forward.20} parent=11 // pred_check
        %p171 = pneg %p121
      $region26: #{vilt_vqa_forward.20} parent=11 // pred_check_branch
        %173 = sbr.rel (%p171) target = $region28
      $region27: #{vilt_vqa_forward.20} parent=11 // pred_region
        _
      $region28: #{vilt_vqa_forward.20} parent=11 // pred_fallthru
        _
    $region12: #{vilt_vqa_forward.20} parent=5 // pred_fallthru
      _
    %p174 = scmp.lt.s32.totalorder %s11, 2
    // Predicated region
    $region29: #{vilt_vqa_forward.20} parent=5 // pred_check
      %p175 = pneg %p174
    $region30: #{vilt_vqa_forward.20} parent=5 // pred_check_branch
      %177 = sbr.rel (%p175) target = $region32
    $region31: #{vilt_vqa_forward.20} parent=5 // pred_region
      // Predicated region
      $region33: #{vilt_vqa_forward.20} parent=31 // pred_check
        %p178 = pneg %p31
      $region34: #{vilt_vqa_forward.20} parent=31 // pred_check_branch
        %180 = sbr.rel (%p178) target = $region36
      $region35: #{vilt_vqa_forward.20} parent=31 // pred_region
        %s181 = smul.u32 2, %s11
        %p182 = scmp.lt.s32.totalorder %s181, 3
        %s183 = scalar_select %p182, %s181, 3
        %s184 = smul.addr %s183, 8
        %s185 = scalar_lea.vmem %s0, %s184
        %s186 = smul.u32 2, %s11
      $region36: #{vilt_vqa_forward.20} parent=31 // pred_fallthru
        _
    $region32: #{vilt_vqa_forward.20} parent=5 // pred_fallthru
      _
    %p187 = scmp.le.s32.totalorder 1, %s11
    %p188 = scmp.lt.s32.totalorder %s11, 3
    %p189 = pnand %p187, %p188
    %p190 = pneg %p189
    // Predicated region
    $region37: #{vilt_vqa_forward.20} parent=5 // pred_check
      _
    $region38: #{vilt_vqa_forward.20} parent=5 // pred_check_branch
      %192 = sbr.rel (%p189) target = $region40
    $region39: #{vilt_vqa_forward.20} parent=5 // pred_region
      %s193 = ssub.s32 %s11, 1
      %s194 = smul.u32 2, %s16
      %p195 = scmp.lt.s32.totalorder %s194, 3
      %s196 = scalar_select %p195, %s194, 3
      %s197 = smul.addr %s196, 8
      %s198 = scalar_lea.vmem %s0, %s197
      %p199 = pneg %p37
      %p200 = pneg %p34
      %p201 = pneg %p58
      %p202 = pneg %p55
      %p203 = pneg %p79
      %p204 = pneg %p76
      %p205 = pneg %p100
      %p206 = pneg %p97
      %p207 = pneg %p121
      %p208 = pneg %p118
      %p209 = pneg %p147
      %p210 = pneg %p144
      %s211 = smul.u32 2, %s16
      %p212 = scmp.lt.s32.totalorder %s211, 3
      %s213 = scalar_select %p212, %s211, 3
      %s214 = smul.addr %s213, 4
      %s215 = scalar_lea.vmem %s5, %s214
      %s216 = smul.u32 2, %s16
      %p217 = scmp.lt.s32.totalorder %s216, 3
      %s218 = scalar_select %p217, %s216, 3
      %s219 = smul.addr %s218, 8
      %s220 = scalar_lea.vmem %s0, %s219
      %s221 = smul.u32 2, %s16
      %s222 = smul.u32 2, %s16
      %p223 = scmp.lt.s32.totalorder %s222, 3
      %s224 = scalar_select %p223, %s222, 3
      %s225 = smul.addr %s224, 4
      %s226 = scalar_lea.vmem %s5, %s225
      %s227 = smul.u32 2, %s16
      %v229 = vld [vmem:[%s220] sm:$0xff]
      %v230 = vld [vmem:[%s220 + $0x8] sm:$0xff]
      %vm231 = vcmask 261120
      %v232 = vsel %vm231, %v229, 0.0
      %233 = vadd.xlane.f32.xlu0 %v232
      %v234 = vpop.xlane.xlu0 %233
      %v235 = vsel %vm231, %v230, 0.0
      %236 = vadd.xlane.f32.xlu0 %v235
      %v237 = vpop.xlane.xlu0 %236
      %v238 = vrcp.pop 32.0
      %v239 = vmul.f32 %v234, %v238
      %v240 = vmul.f32 %v237, %v238
      %v241 = vsub.f32 %v229, %v239
      %v242 = vsub.f32 %v230, %v240
      %v243 = vmul.f32 %v241, %v241
      %v244 = vmul.f32 %v242, %v242
      %v245 = vsel %vm231, %v243, 0.0
      %246 = vadd.xlane.f32.xlu0 %v245
      %v247 = vpop.xlane.xlu0 %246
      %v248 = vsel %vm231, %v244, 0.0
      %249 = vadd.xlane.f32.xlu0 %v248
      %v250 = vpop.xlane.xlu0 %249
      %v251 = vmul.f32 %v247, %v238
      %v252 = vmul.f32 %v250, %v238
      %v253 = vadd.f32 %v251, 1e-12
      %v254 = vadd.f32 %v252, 1e-12
      %v255 = vrsqrt.pop %v253
      %v256 = vrsqrt.pop %v254
      %v257 = vmul.f32 %v241, %v255
      %v258 = vmul.f32 %v242, %v256
      %v259 = vld [vmem:[%s1] sm:$0x1]
      %v261 = vlaneseq
      %v262 = vshrl.u32 %v261, 7
      %v263 = vsub.s32 0, %v262
      %v264 = vrot.slane %v259, %v263
      %v266 = vmul.f32 %v257, %v264
      %v267 = vmul.f32 %v258, %v264
      %v268 = vld [vmem:[%s2] sm:$0x1]
      %v270 = vlaneseq
      %v271 = vshrl.u32 %v270, 7
      %v272 = vsub.s32 0, %v271
      %v273 = vrot.slane %v268, %v272
      %v275 = vadd.f32 %v266, %v273
      %v276 = vadd.f32 %v267, %v273
      %v277 = vpack.c.bf16 %v276, %v275
      %v278 = vld [vmem:[%s3] sm:$0xf]
      %v279 = vld [vmem:[%s3 + $0x4] sm:$0xf]
      %v280 = vld [vmem:[%s3 + $0x8] sm:$0xf]
      %v281 = vld [vmem:[%s3 + $0xc] sm:$0xf]
      %v282 = vld [vmem:[%s4] sm:$0x1]
      %v284 = vlaneseq
      %v285 = vshrl.u32 %v284, 7
      %v286 = vsub.s32 0, %v285
      %v287 = vrot.slane %v282, %v286
      %v293 = vunpack.c.l.b16 %v278
      %v294 = vunpack.c.l.b16 %v279
      %v295 = vunpack.c.l.b16 %v280
      %v296 = vunpack.c.l.b16 %v281
      %v297 = vpack.c.b16 %v294, %v293
      %v298 = vpack.c.b16 %v296, %v295
      %v302 = vsel %vm231, %v277, 0
      %304 = vmatprep.subr.bf16.mxu0 0
      %305 = vmatpush1.bf16.msra.mxu0 %v297
      %306 = vmatprep.subr.bf16.mxu0 0
      %307 = vmatpush1.bf16.msra.mxu0 %v298
      %308 = vmatprep.subr.bf16.mxu0 0
      %309 = vmatpush1.bf16.msra.mxu0 0
      %310 = vmatprep.subr.bf16.mxu0 0
      %311 = vmatpush1.bf16.msra.mxu0 0
      %312 = vmatprep.subr.bf16.mxu0 0
      %313 = vmatpush1.bf16.msra.mxu0 0
      %314 = vmatprep.subr.bf16.mxu0 0
      %315 = vmatpush1.bf16.msra.mxu0 0
      %316 = vmatprep.subr.bf16.mxu0 0
      %317 = vmatpush1.bf16.msra.mxu0 0
      %318 = vmatprep.subr.bf16.mxu0 0
      %319 = vmatpush1.bf16.msra.mxu0 0
      %320 = vmatprep.subr.bf16.mxu0 0
      %321 = vmatpush1.bf16.msra.mxu0 0
      %322 = vmatprep.subr.bf16.mxu0 0
      %323 = vmatpush1.bf16.msra.mxu0 0
      %324 = vmatprep.subr.bf16.mxu0 0
      %325 = vmatpush1.bf16.msra.mxu0 0
      %326 = vmatprep.subr.bf16.mxu0 0
      %327 = vmatpush1.bf16.msra.mxu0 0
      %328 = vmatprep.subr.bf16.mxu0 0
      %329 = vmatpush1.bf16.msra.mxu0 0
      %330 = vmatprep.subr.bf16.mxu0 0
      %331 = vmatpush1.bf16.msra.mxu0 0
      %332 = vmatprep.subr.bf16.mxu0 0
      %333 = vmatpush1.bf16.msra.mxu0 0
      %334 = vmatprep.subr.bf16.mxu0 0
      %335 = vmatpush1.bf16.msra.mxu0 0
      %336 = vmatprep.mubr.bf16.mxu0 0
      %337 = vmatmul.mubr.bf16.gmra.mrb[0].mxu0 %v302
      %v338 = vpop.f32.mrb[0].mxu0
      %v339 = vadd.f32 %v287, %v338
      %v340 = vpop.f32.mrb[0].mxu0
      %v341 = vpop.f32.mrb[0].mxu0
      %v342 = vadd.f32 %v287, %v341
      %v343 = vpop.f32.mrb[0].mxu0
      %344 = vdwg.mxu0
      %v345 = vmul.f32 %v339, 0.5
      %v346 = vmul.f32 %v342, 0.5
      %v347 = vmul.f32 %v339, 0.044715
      %v348 = vmul.f32 %v342, 0.044715
      %v349 = vmul.f32 %v347, %v339
      %v350 = vmul.f32 %v348, %v342
      %v351 = vmul.f32 %v349, %v339
      %v352 = vmul.f32 %v350, %v342
      %v353 = vadd.f32 %v339, %v351
      %v354 = vadd.f32 %v342, %v352
      %v355 = vmul.f32 %v353, 0.7978846
      %v356 = vmul.f32 %v354, 0.7978846
      %v357 = vtanh.pop %v355
      %v358 = vtanh.pop %v356
      %v359 = vadd.f32 %v357, 1.0
      %v360 = vadd.f32 %v358, 1.0
      %v361 = vmul.f32 %v345, %v359
      %v362 = vmul.f32 %v346, %v360
      %v363 = vpack.c.bf16 %v362, %v361
      %v365 = vunpack.c.l.b16 %v363
      %v366 = vunpack.c.h.b16 %v363
      %v367 = vpack.c.b16 %v365, %v365
      %v368 = vpack.c.b16 %v366, %v366
      %371 = vst [vmem:[%s226] sm:$0xf] %v367
      %372 = vst [vmem:[%s226 + $0x4] sm:$0xf] %v368
      %s373 = smul.u32 2, %s16
      %p374 = scmp.lt.s32.totalorder %s373, 3
      %s375 = scalar_select %p374, %s373, 3
      %s376 = smul.addr %s375, 4
      %s377 = scalar_lea.vmem %s5, %s376
      // Predicated region
      $region41: #{vilt_vqa_forward.20} parent=39 // pred_check
        %p378 = pneg %p144
      $region42: #{vilt_vqa_forward.20} parent=39 // pred_check_branch
        %380 = sbr.rel (%p378) target = $region44
      $region43: #{vilt_vqa_forward.20} parent=39 // pred_region
        %s381 = smul.u32 2, %s16
      $region44: #{vilt_vqa_forward.20} parent=39 // pred_fallthru
        _
    $region40: #{vilt_vqa_forward.20} parent=5 // pred_fallthru
      _
    %p382 = scmp.le.s32.totalorder 2, %s11
    // Predicated region
    $region45: #{vilt_vqa_forward.20} parent=5 // pred_check
      %p383 = pneg %p382
    $region46: #{vilt_vqa_forward.20} parent=5 // pred_check_branch
      %385 = sbr.rel (%p383) target = $region48
    $region47: #{vilt_vqa_forward.20} parent=5 // pred_region
      %s386 = ssub.s32 %s11, 2
      // Predicated region
      $region49: #{vilt_vqa_forward.20} parent=47 // pred_check
        %p387 = pneg %p150
      $region50: #{vilt_vqa_forward.20} parent=47 // pred_check_branch
        %389 = sbr.rel (%p387) target = $region52
      $region51: #{vilt_vqa_forward.20} parent=47 // pred_region
        %s390 = smul.u32 2, %s17
        %p391 = scmp.lt.s32.totalorder %s390, 3
        %s392 = scalar_select %p391, %s390, 3
        %s393 = smul.addr %s392, 4
        %s394 = scalar_lea.vmem %s5, %s393
      $region52: #{vilt_vqa_forward.20} parent=47 // pred_fallthru
        _
    $region48: #{vilt_vqa_forward.20} parent=5 // pred_fallthru
      _
  $region6: #{vilt_vqa_forward.20} parent=0 // loop_footer
    %s15 = sadd.s32 1, %s11
  $region7: #{vilt_vqa_forward.20} parent=0 // loop_footer_branch
    %10 = sbr.rel target = $region3
  $region8: #{vilt_vqa_forward.20} parent=0 // loop_exit
    _

// kernel: vilt_vqa_forward.21
$region0: #{vilt_vqa_forward.21}
  #allocation0 [shape = 'u32[]', space=smem, size = 0x4, offset = 0x4, fixed_abs, tag = 'smem constant byte address 0x4 - core index']
  #allocation1 [shape = 'u32[144,128]{1,0:T(1,128)}', space=vmem, size = 0x12000, scoped, tag = 'internal scratch']
  %s0 = inlined_call_operand.vmem [shape: bf16[32,64], index: 0, kind: input, shape index: {}]
  %s1 = inlined_call_operand.vmem [shape: bf16[64,32], index: 1, kind: input, shape index: {}]
  %s2 = inlined_call_operand.vmem [shape: f32[1,32], index: 2, kind: input, shape index: {}]
  %s3 = inlined_call_operand.vmem [shape: f32[32,32], index: 3, kind: input, shape index: {}]
  %s4 = inlined_call_operand.vmem [shape: f32[32,32], index: 4, kind: output, shape index: {}]
  %s5 = sld [smem:[#allocation0]]
  $region49: #{vilt_vqa_forward.21} parent=0
    _
  %s7 = ssub.s32 1, %s5
  %s8 = scalar_select 0, %s7, %s5
  loop: start=0, step=1, limit=4
  $region2: #{vilt_vqa_forward.21} parent=0 // loop_pre_header
    _
  $region3: #{vilt_vqa_forward.21} parent=0 // loop_header
    %s10 = sphi 0, %s14
    %p11 = scmp.ge.s32.totalorder %s10, 4
    %s20 = sphi 0, %s22
    %s23 = sphi 0, %s20
    %s24 = sphi 0, %s23
    %s40 = sphi 0, %s24
    %s44 = sphi 0, %s44
    %s46 = sphi 0, %s44
    %s47 = sphi 0, %s46
    %s61 = sphi 0, %s47
    %s65 = sphi 0, %s65
    %s67 = sphi 0, %s65
    %s68 = sphi 0, %s67
    %s82 = sphi 0, %s68
    %s88 = sphi 0, %s90
    %s91 = sphi 0, %s88
    %s92 = sphi 0, %s91
    %s108 = sphi 0, %s92
    %s114 = sphi 0, %s116
    %s117 = sphi 0, %s114
    %s118 = sphi 0, %s117
    %s134 = sphi 0, %s118
  $region4: #{vilt_vqa_forward.21} parent=0 // loop_header_branch
    %13 = sbr.rel (%p11) target = $region8
  $region5: #{vilt_vqa_forward.21} parent=0 // loop_body
    %s15 = ssub.s32 %s10, 1
    %s16 = ssub.s32 %s10, 2
    %s17 = sadd.s32 %s10, 1
    %s18 = ssub.s32 %s10, %s17
    %p19 = scmp.eq.s32.totalorder %s18, 0
    %s21 = sadd.s32 %s20, 1
    %s22 = scalar_select %p19, %s20, %s21
    %p25 = pneg %p19
    %p26 = scmp.eq.s32.totalorder %s10, 1
    %p27 = por %p25, %p26
    %p28 = scmp.ne.s32.totalorder %s20, %s23
    %p29 = scmp.eq.s32.totalorder %s10, 0
    %p30 = por %p28, %p29
    %p31 = scmp.ne.s32.totalorder %s20, %s23
    %p32 = scmp.eq.s32.totalorder %s15, 1
    %p33 = por %p31, %p32
    %p34 = scmp.ne.s32.totalorder %s23, %s24
    %p35 = scmp.eq.s32.totalorder %s15, 0
    %p36 = por %p34, %p35
    %p37 = scmp.ne.s32.totalorder %s23, %s24
    %p38 = scmp.eq.s32.totalorder %s16, 1
    %p39 = por %p37, %p38
    %p41 = scmp.ne.s32.totalorder %s24, %s40
    %p42 = scmp.eq.s32.totalorder %s16, 0
    %p43 = por %p41, %p42
    %s45 = sadd.s32 %s44, 1
    %p48 = scmp.eq.s32.totalorder %s10, 1
    %p49 = scmp.ne.s32.totalorder %s44, %s46
    %p50 = scmp.eq.s32.totalorder %s10, 0
    %p51 = por %p49, %p50
    %p52 = scmp.ne.s32.totalorder %s44, %s46
    %p53 = scmp.eq.s32.totalorder %s15, 1
    %p54 = por %p52, %p53
    %p55 = scmp.ne.s32.totalorder %s46, %s47
    %p56 = scmp.eq.s32.totalorder %s15, 0
    %p57 = por %p55, %p56
    %p58 = scmp.ne.s32.totalorder %s46, %s47
    %p59 = scmp.eq.s32.totalorder %s16, 1
    %p60 = por %p58, %p59
    %p62 = scmp.ne.s32.totalorder %s47, %s61
    %p63 = scmp.eq.s32.totalorder %s16, 0
    %p64 = por %p62, %p63
    %s66 = sadd.s32 %s65, 1
    %p69 = scmp.eq.s32.totalorder %s10, 1
    %p70 = scmp.ne.s32.totalorder %s65, %s67
    %p71 = scmp.eq.s32.totalorder %s10, 0
    %p72 = por %p70, %p71
    %p73 = scmp.ne.s32.totalorder %s65, %s67
    %p74 = scmp.eq.s32.totalorder %s15, 1
    %p75 = por %p73, %p74
    %p76 = scmp.ne.s32.totalorder %s67, %s68
    %p77 = scmp.eq.s32.totalorder %s15, 0
    %p78 = por %p76, %p77
    %p79 = scmp.ne.s32.totalorder %s67, %s68
    %p80 = scmp.eq.s32.totalorder %s16, 1
    %p81 = por %p79, %p80
    %p83 = scmp.ne.s32.totalorder %s68, %s82
    %p84 = scmp.eq.s32.totalorder %s16, 0
    %p85 = por %p83, %p84
    %s86 = ssub.s32 %s10, %s17
    %p87 = scmp.eq.s32.totalorder %s86, 0
    %s89 = sadd.s32 %s88, 1
    %s90 = scalar_select %p87, %s88, %s89
    %p93 = pneg %p87
    %p94 = scmp.eq.s32.totalorder %s10, 1
    %p95 = por %p93, %p94
    %p96 = scmp.ne.s32.totalorder %s88, %s91
    %p97 = scmp.eq.s32.totalorder %s10, 0
    %p98 = por %p96, %p97
    %p99 = scmp.ne.s32.totalorder %s88, %s91
    %p100 = scmp.eq.s32.totalorder %s15, 1
    %p101 = por %p99, %p100
    %p102 = scmp.ne.s32.totalorder %s91, %s92
    %p103 = scmp.eq.s32.totalorder %s15, 0
    %p104 = por %p102, %p103
    %p105 = scmp.ne.s32.totalorder %s91, %s92
    %p106 = scmp.eq.s32.totalorder %s16, 1
    %p107 = por %p105, %p106
    %p109 = scmp.ne.s32.totalorder %s92, %s108
    %p110 = scmp.eq.s32.totalorder %s16, 0
    %p111 = por %p109, %p110
    %s112 = ssub.s32 %s10, %s17
    %p113 = scmp.eq.s32.totalorder %s112, 0
    %s115 = sadd.s32 %s114, 1
    %s116 = scalar_select %p113, %s114, %s115
    %p119 = pneg %p113
    %p120 = scmp.eq.s32.totalorder %s10, 1
    %p121 = por %p119, %p120
    %p122 = scmp.ne.s32.totalorder %s114, %s117
    %p123 = scmp.eq.s32.totalorder %s10, 0
    %p124 = por %p122, %p123
    %p125 = scmp.ne.s32.totalorder %s114, %s117
    %p126 = scmp.eq.s32.totalorder %s15, 1
    %p127 = por %p125, %p126
    %p128 = scmp.ne.s32.totalorder %s117, %s118
    %p129 = scmp.eq.s32.totalorder %s15, 0
    %p130 = por %p128, %p129
    %p131 = scmp.ne.s32.totalorder %s117, %s118
    %p132 = scmp.eq.s32.totalorder %s16, 1
    %p133 = por %p131, %p132
    %p135 = scmp.ne.s32.totalorder %s118, %s134
    %p136 = scmp.eq.s32.totalorder %s16, 0
    %p137 = por %p135, %p136
    %p138 = scmp.le.s32.totalorder 1, %s10
    %p139 = scmp.lt.s32.totalorder %s10, 3
    %p140 = pnand %p138, %p139
    %p141 = pneg %p140
    // Predicated region
    $region9: #{vilt_vqa_forward.21} parent=5 // pred_check
      _
    $region10: #{vilt_vqa_forward.21} parent=5 // pred_check_branch
      %143 = sbr.rel (%p140) target = $region12
    $region11: #{vilt_vqa_forward.21} parent=5 // pred_region
      %s144 = ssub.s32 %s10, 1
      // Predicated region
      $region13: #{vilt_vqa_forward.21} parent=11 // pred_check
        %p145 = pneg %p57
      $region14: #{vilt_vqa_forward.21} parent=11 // pred_check_branch
        %147 = sbr.rel (%p145) target = $region16
      $region15: #{vilt_vqa_forward.21} parent=11 // pred_region
        _
      $region16: #{vilt_vqa_forward.21} parent=11 // pred_fallthru
        _
      // Predicated region
      $region17: #{vilt_vqa_forward.21} parent=11 // pred_check
        %p148 = pneg %p78
      $region18: #{vilt_vqa_forward.21} parent=11 // pred_check_branch
        %150 = sbr.rel (%p148) target = $region20
      $region19: #{vilt_vqa_forward.21} parent=11 // pred_region
        _
      $region20: #{vilt_vqa_forward.21} parent=11 // pred_fallthru
        _
    $region12: #{vilt_vqa_forward.21} parent=5 // pred_fallthru
      _
    %p151 = scmp.lt.s32.totalorder %s10, 2
    // Predicated region
    $region21: #{vilt_vqa_forward.21} parent=5 // pred_check
      %p152 = pneg %p151
    $region22: #{vilt_vqa_forward.21} parent=5 // pred_check_branch
      %154 = sbr.rel (%p152) target = $region24
    $region23: #{vilt_vqa_forward.21} parent=5 // pred_region
      // Predicated region
      $region25: #{vilt_vqa_forward.21} parent=23 // pred_check
        %p155 = pneg %p30
      $region26: #{vilt_vqa_forward.21} parent=23 // pred_check_branch
        %157 = sbr.rel (%p155) target = $region28
      $region27: #{vilt_vqa_forward.21} parent=23 // pred_region
        %s158 = smul.u32 2, %s10
        %p159 = scmp.lt.s32.totalorder %s158, 3
        %s160 = scalar_select %p159, %s158, 3
        %s161 = smul.addr %s160, 4
        %s162 = scalar_lea.vmem %s0, %s161
        %s163 = smul.u32 2, %s10
      $region28: #{vilt_vqa_forward.21} parent=23 // pred_fallthru
        _
      // Predicated region
      $region29: #{vilt_vqa_forward.21} parent=23 // pred_check
        %p164 = pneg %p98
      $region30: #{vilt_vqa_forward.21} parent=23 // pred_check_branch
        %166 = sbr.rel (%p164) target = $region32
      $region31: #{vilt_vqa_forward.21} parent=23 // pred_region
        %s167 = smul.u32 2, %s10
        %p168 = scmp.lt.s32.totalorder %s167, 3
        %s169 = scalar_select %p168, %s167, 3
        %s170 = smul.addr %s169, 8
        %s171 = scalar_lea.vmem %s3, %s170
        %s172 = smul.u32 2, %s10
      $region32: #{vilt_vqa_forward.21} parent=23 // pred_fallthru
        _
    $region24: #{vilt_vqa_forward.21} parent=5 // pred_fallthru
      _
    %p173 = scmp.le.s32.totalorder 1, %s10
    %p174 = scmp.lt.s32.totalorder %s10, 3
    %p175 = pnand %p173, %p174
    %p176 = pneg %p175
    // Predicated region
    $region33: #{vilt_vqa_forward.21} parent=5 // pred_check
      _
    $region34: #{vilt_vqa_forward.21} parent=5 // pred_check_branch
      %178 = sbr.rel (%p175) target = $region36
    $region35: #{vilt_vqa_forward.21} parent=5 // pred_region
      %s179 = ssub.s32 %s10, 1
      %s180 = smul.u32 2, %s15
      %p181 = scmp.lt.s32.totalorder %s180, 3
      %s182 = scalar_select %p181, %s180, 3
      %s183 = smul.addr %s182, 4
      %s184 = scalar_lea.vmem %s0, %s183
      %p185 = pneg %p36
      %p186 = pneg %p33
      %p187 = pneg %p57
      %p188 = pneg %p54
      %p189 = pneg %p78
      %p190 = pneg %p75
      %s191 = smul.u32 2, %s15
      %p192 = scmp.lt.s32.totalorder %s191, 3
      %s193 = scalar_select %p192, %s191, 3
      %s194 = smul.addr %s193, 8
      %s195 = scalar_lea.vmem %s3, %s194
      %p196 = pneg %p104
      %p197 = pneg %p101
      %p198 = pneg %p130
      %p199 = pneg %p127
      %s200 = smul.u32 2, %s15
      %p201 = scmp.lt.s32.totalorder %s200, 3
      %s202 = scalar_select %p201, %s200, 3
      %s203 = smul.addr %s202, 8
      %s204 = scalar_lea.vmem %s4, %s203
      %s205 = smul.u32 2, %s15
      %p206 = scmp.lt.s32.totalorder %s205, 3
      %s207 = scalar_select %p206, %s205, 3
      %s208 = smul.addr %s207, 4
      %s209 = scalar_lea.vmem %s0, %s208
      %s210 = smul.u32 2, %s15
      %s211 = smul.u32 2, %s15
      %p212 = scmp.lt.s32.totalorder %s211, 3
      %s213 = scalar_select %p212, %s211, 3
      %s214 = smul.addr %s213, 8
      %s215 = scalar_lea.vmem %s3, %s214
      %s216 = smul.u32 2, %s15
      %s217 = smul.u32 2, %s15
      %p218 = scmp.lt.s32.totalorder %s217, 3
      %s219 = scalar_select %p218, %s217, 3
      %s220 = smul.addr %s219, 8
      %s221 = scalar_lea.vmem %s4, %s220
      %s222 = smul.u32 2, %s15
      %v224 = vld [vmem:[%s209] sm:$0xf]
      %v225 = vld [vmem:[%s209 + $0x4] sm:$0xf]
      %v226 = vld [vmem:[%s1] sm:$0xf]
      %v227 = vld [vmem:[%s1 + $0x4] sm:$0xf]
      %v228 = vld [vmem:[%s1 + $0x8] sm:$0xf]
      %v229 = vld [vmem:[%s1 + $0xc] sm:$0xf]
      %v230 = vld [vmem:[%s1 + $0x10] sm:$0xf]
      %v231 = vld [vmem:[%s1 + $0x14] sm:$0xf]
      %v232 = vld [vmem:[%s1 + $0x18] sm:$0xf]
      %v233 = vld [vmem:[%s1 + $0x1c] sm:$0xf]
      %v234 = vld [vmem:[%s2] sm:$0x1]
      %v236 = vlaneseq
      %v237 = vshrl.u32 %v236, 7
      %v238 = vsub.s32 0, %v237
      %v239 = vrot.slane %v234, %v238
      %v243 = vunpack.c.l.b16 %v224
      %v244 = vunpack.c.l.b16 %v225
      %v245 = vpack.c.b16 %v244, %v243
      %v254 = vunpack.c.l.b16 %v226
      %v255 = vunpack.c.l.b16 %v227
      %v256 = vunpack.c.l.b16 %v228
      %v257 = vunpack.c.l.b16 %v229
      %v258 = vunpack.c.l.b16 %v230
      %v259 = vunpack.c.l.b16 %v231
      %v260 = vunpack.c.l.b16 %v232
      %v261 = vunpack.c.l.b16 %v233
      %v262 = vpack.c.b16 %v255, %v254
      %v263 = vpack.c.b16 %v257, %v256
      %v264 = vpack.c.b16 %v259, %v258
      %v265 = vpack.c.b16 %v261, %v260
      %vm270 = vcmask 523264
      %v272 = vsel %vm270, %v245, 0
      %274 = vmatprep.subr.bf16.mxu0 0
      %275 = vmatpush1.bf16.msra.mxu0 %v262
      %276 = vmatprep.subr.bf16.mxu0 0
      %277 = vmatpush1.bf16.msra.mxu0 %v263
      %278 = vmatprep.subr.bf16.mxu0 0
      %279 = vmatpush1.bf16.msra.mxu0 %v264
      %280 = vmatprep.subr.bf16.mxu0 0
      %281 = vmatpush1.bf16.msra.mxu0 %v265
      %282 = vmatprep.subr.bf16.mxu0 0
      %283 = vmatpush1.bf16.msra.mxu0 0
      %284 = vmatprep.subr.bf16.mxu0 0
      %285 = vmatpush1.bf16.msra.mxu0 0
      %286 = vmatprep.subr.bf16.mxu0 0
      %287 = vmatpush1.bf16.msra.mxu0 0
      %288 = vmatprep.subr.bf16.mxu0 0
      %289 = vmatpush1.bf16.msra.mxu0 0
      %290 = vmatprep.subr.bf16.mxu0 0
      %291 = vmatpush1.bf16.msra.mxu0 0
      %292 = vmatprep.subr.bf16.mxu0 0
      %293 = vmatpush1.bf16.msra.mxu0 0
      %294 = vmatprep.subr.bf16.mxu0 0
      %295 = vmatpush1.bf16.msra.mxu0 0
      %296 = vmatprep.subr.bf16.mxu0 0
      %297 = vmatpush1.bf16.msra.mxu0 0
      %298 = vmatprep.subr.bf16.mxu0 0
      %299 = vmatpush1.bf16.msra.mxu0 0
      %300 = vmatprep.subr.bf16.mxu0 0
      %301 = vmatpush1.bf16.msra.mxu0 0
      %302 = vmatprep.subr.bf16.mxu0 0
      %303 = vmatpush1.bf16.msra.mxu0 0
      %304 = vmatprep.subr.bf16.mxu0 0
      %305 = vmatpush1.bf16.msra.mxu0 0
      %306 = vmatprep.mubr.bf16.mxu0 0
      %307 = vmatmul.mubr.bf16.gmra.mrb[0].mxu0 %v272
      %v308 = vpop.f32.mrb[0].mxu0
      %v309 = vadd.f32 %v239, %v308
      %v310 = vpop.f32.mrb[0].mxu0
      %v311 = vpop.f32.mrb[0].mxu0
      %v312 = vadd.f32 %v239, %v311
      %v313 = vpop.f32.mrb[0].mxu0
      %314 = vdwg.mxu0
      %v315 = vld [vmem:[%s215] sm:$0xff]
      %v316 = vld [vmem:[%s215 + $0x8] sm:$0xff]
      %v317 = vadd.f32 %v309, %v315
      %v318 = vadd.f32 %v312, %v316
      %vm319 = vcmask 261120
      %320 = vst.msk [vmem:[%s221] sm:$0xff] %vm319, %v317
      %321 = vst.msk [vmem:[%s221 + $0x8] sm:$0xff] %vm319, %v318
      %s322 = smul.u32 2, %s15
      %p323 = scmp.lt.s32.totalorder %s322, 3
      %s324 = scalar_select %p323, %s322, 3
      %s325 = smul.addr %s324, 8
      %s326 = scalar_lea.vmem %s4, %s325
      // Predicated region
      $region37: #{vilt_vqa_forward.21} parent=35 // pred_check
        %p327 = pneg %p127
      $region38: #{vilt_vqa_forward.21} parent=35 // pred_check_branch
        %329 = sbr.rel (%p327) target = $region40
      $region39: #{vilt_vqa_forward.21} parent=35 // pred_region
        %s330 = smul.u32 2, %s15
      $region40: #{vilt_vqa_forward.21} parent=35 // pred_fallthru
        _
    $region36: #{vilt_vqa_forward.21} parent=5 // pred_fallthru
      _
    %p331 = scmp.le.s32.totalorder 2, %s10
    // Predicated region
    $region41: #{vilt_vqa_forward.21} parent=5 // pred_check
      %p332 = pneg %p331
    $region42: #{vilt_vqa_forward.21} parent=5 // pred_check_branch
      %334 = sbr.rel (%p332) target = $region44
    $region43: #{vilt_vqa_forward.21} parent=5 // pred_region
      %s335 = ssub.s32 %s10, 2
      // Predicated region
      $region45: #{vilt_vqa_forward.21} parent=43 // pred_check
        %p336 = pneg %p133
      $region46: #{vilt_vqa_forward.21} parent=43 // pred_check_branch
        %338 = sbr.rel (%p336) target = $region48
      $region47: #{vilt_vqa_forward.21} parent=43 // pred_region
        %s339 = smul.u32 2, %s16
        %p340 = scmp.lt.s32.totalorder %s339, 3
        %s341 = scalar_select %p340, %s339, 3
        %s342 = smul.addr %s341, 8
        %s343 = scalar_lea.vmem %s4, %s342
      $region48: #{vilt_vqa_forward.21} parent=43 // pred_fallthru
        _
    $region44: #{vilt_vqa_forward.21} parent=5 // pred_fallthru
      _
  $region6: #{vilt_vqa_forward.21} parent=0 // loop_footer
    %s14 = sadd.s32 1, %s10
  $region7: #{vilt_vqa_forward.21} parent=0 // loop_footer_branch
    %9 = sbr.rel target = $region3
  $region8: #{vilt_vqa_forward.21} parent=0 // loop_exit
    _

// kernel: vilt_vqa_forward.27
$region0: #{vilt_vqa_forward.27}
  #allocation0 [shape = 'u32[]', space=smem, size = 0x4, offset = 0x4, fixed_abs, tag = 'smem constant byte address 0x4 - core index']
  #allocation1 [shape = 'u32[144,128]{1,0:T(1,128)}', space=vmem, size = 0x12000, scoped, tag = 'internal scratch']
  %s0 = inlined_call_operand.vmem [shape: f32[2,32], index: 0, kind: input, shape index: {}]
  %s1 = inlined_call_operand.vmem [shape: f32[1,32], index: 1, kind: input, shape index: {}]
  %s2 = inlined_call_operand.vmem [shape: f32[1,32], index: 2, kind: input, shape index: {}]
  %s3 = inlined_call_operand.vmem [shape: bf16[32,128], index: 3, kind: input, shape index: {}]
  %s4 = inlined_call_operand.vmem [shape: f32[1,128], index: 4, kind: input, shape index: {}]
  %s5 = inlined_call_operand.vmem [shape: f32[2,128], index: 5, kind: output, shape index: {}]
  %s6 = sld [smem:[#allocation0]]
  $region30: #{vilt_vqa_forward.27} parent=0
    _
  %s8 = ssub.s32 1, %s6
  %s9 = scalar_select 0, %s8, %s6
  // Predicated region
  $region2: #{vilt_vqa_forward.27} parent=0 // pred_check
    _
  $region3: #{vilt_vqa_forward.27} parent=0 // pred_check_branch
    %11 = sbr.rel (0) target = $region5
  $region4: #{vilt_vqa_forward.27} parent=0 // pred_region
    _
  $region5: #{vilt_vqa_forward.27} parent=0 // pred_fallthru
    _
  // Predicated region
  $region6: #{vilt_vqa_forward.27} parent=0 // pred_check
    _
  $region7: #{vilt_vqa_forward.27} parent=0 // pred_check_branch
    %13 = sbr.rel (0) target = $region9
  $region8: #{vilt_vqa_forward.27} parent=0 // pred_region
    _
  $region9: #{vilt_vqa_forward.27} parent=0 // pred_fallthru
    _
  // Predicated region
  $region10: #{vilt_vqa_forward.27} parent=0 // pred_check
    _
  $region11: #{vilt_vqa_forward.27} parent=0 // pred_check_branch
    %15 = sbr.rel (0) target = $region13
  $region12: #{vilt_vqa_forward.27} parent=0 // pred_region
    _
  $region13: #{vilt_vqa_forward.27} parent=0 // pred_fallthru
    _
  // Predicated region
  $region14: #{vilt_vqa_forward.27} parent=0 // pred_check
    _
  $region15: #{vilt_vqa_forward.27} parent=0 // pred_check_branch
    %17 = sbr.rel (0) target = $region17
  $region16: #{vilt_vqa_forward.27} parent=0 // pred_region
    _
  $region17: #{vilt_vqa_forward.27} parent=0 // pred_fallthru
    _
  // Predicated region
  $region18: #{vilt_vqa_forward.27} parent=0 // pred_check
    _
  $region19: #{vilt_vqa_forward.27} parent=0 // pred_check_branch
    %19 = sbr.rel (0) target = $region21
  $region20: #{vilt_vqa_forward.27} parent=0 // pred_region
    _
  $region21: #{vilt_vqa_forward.27} parent=0 // pred_fallthru
    _
  %v21 = vld [vmem:[%s0] sm:$0x3]
  %vm22 = vcmask 254976
  %v23 = vsel %vm22, %v21, 0.0
  %24 = vadd.xlane.f32.xlu0 %v23
  %v25 = vpop.xlane.xlu0 %24
  %v26 = vrcp.pop 32.0
  %v27 = vmul.f32 %v25, %v26
  %v28 = vsub.f32 %v21, %v27
  %v29 = vmul.f32 %v28, %v28
  %v30 = vsel %vm22, %v29, 0.0
  %31 = vadd.xlane.f32.xlu0 %v30
  %v32 = vpop.xlane.xlu0 %31
  %v33 = vmul.f32 %v32, %v26
  %v34 = vadd.f32 %v33, 1e-12
  %v35 = vrsqrt.pop %v34
  %v36 = vmul.f32 %v28, %v35
  %v37 = vld [vmem:[%s1] sm:$0x1]
  %v39 = vlaneseq
  %v40 = vshrl.u32 %v39, 7
  %v41 = vsub.s32 0, %v40
  %v42 = vrot.slane %v37, %v41
  %v44 = vmul.f32 %v36, %v42
  %v45 = vld [vmem:[%s2] sm:$0x1]
  %v47 = vlaneseq
  %v48 = vshrl.u32 %v47, 7
  %v49 = vsub.s32 0, %v48
  %v50 = vrot.slane %v45, %v49
  %v52 = vadd.f32 %v44, %v50
  %v53 = vpack.c.bf16 %v52, %v52
  %v54 = vld [vmem:[%s3] sm:$0xf]
  %v55 = vld [vmem:[%s3 + $0x4] sm:$0xf]
  %v56 = vld [vmem:[%s3 + $0x8] sm:$0xf]
  %v57 = vld [vmem:[%s3 + $0xc] sm:$0xf]
  %v58 = vld [vmem:[%s4] sm:$0x1]
  %v60 = vlaneseq
  %v61 = vshrl.u32 %v60, 7
  %v62 = vsub.s32 0, %v61
  %v63 = vrot.slane %v58, %v62
  %v69 = vunpack.c.l.b16 %v54
  %v70 = vunpack.c.l.b16 %v55
  %v71 = vunpack.c.l.b16 %v56
  %v72 = vunpack.c.l.b16 %v57
  %v73 = vpack.c.b16 %v70, %v69
  %v74 = vpack.c.b16 %v72, %v71
  %vm77 = vcmask 261120
  %v79 = vsel %vm77, %v53, 0
  %81 = vmatprep.subr.bf16.mxu0 0
  %82 = vmatpush1.bf16.msra.mxu0 %v73
  %83 = vmatprep.subr.bf16.mxu0 0
  %84 = vmatpush1.bf16.msra.mxu0 %v74
  %85 = vmatprep.subr.bf16.mxu0 0
  %86 = vmatpush1.bf16.msra.mxu0 0
  %87 = vmatprep.subr.bf16.mxu0 0
  %88 = vmatpush1.bf16.msra.mxu0 0
  %89 = vmatprep.subr.bf16.mxu0 0
  %90 = vmatpush1.bf16.msra.mxu0 0
  %91 = vmatprep.subr.bf16.mxu0 0
  %92 = vmatpush1.bf16.msra.mxu0 0
  %93 = vmatprep.subr.bf16.mxu0 0
  %94 = vmatpush1.bf16.msra.mxu0 0
  %95 = vmatprep.subr.bf16.mxu0 0
  %96 = vmatpush1.bf16.msra.mxu0 0
  %97 = vmatprep.subr.bf16.mxu0 0
  %98 = vmatpush1.bf16.msra.mxu0 0
  %99 = vmatprep.subr.bf16.mxu0 0
  %100 = vmatpush1.bf16.msra.mxu0 0
  %101 = vmatprep.subr.bf16.mxu0 0
  %102 = vmatpush1.bf16.msra.mxu0 0
  %103 = vmatprep.subr.bf16.mxu0 0
  %104 = vmatpush1.bf16.msra.mxu0 0
  %105 = vmatprep.subr.bf16.mxu0 0
  %106 = vmatpush1.bf16.msra.mxu0 0
  %107 = vmatprep.subr.bf16.mxu0 0
  %108 = vmatpush1.bf16.msra.mxu0 0
  %109 = vmatprep.subr.bf16.mxu0 0
  %110 = vmatpush1.bf16.msra.mxu0 0
  %111 = vmatprep.subr.bf16.mxu0 0
  %112 = vmatpush1.bf16.msra.mxu0 0
  %113 = vmatprep.mubr.bf16.mxu0 0
  %114 = vmatmul.mubr.bf16.gmra.mrb[0].mxu0 %v79
  %v115 = vpop.f32.mrb[0].mxu0
  %v116 = vadd.f32 %v63, %v115
  %v117 = vpop.f32.mrb[0].mxu0
  %v118 = vpop.f32.mrb[0].mxu0
  %v119 = vpop.f32.mrb[0].mxu0
  %120 = vdwg.mxu0
  %v121 = vtanh.pop %v116
  %122 = vst [vmem:[%s5] sm:$0x3] %v121
  // Predicated region
  $region22: #{vilt_vqa_forward.27} parent=0 // pred_check
    _
  $region23: #{vilt_vqa_forward.27} parent=0 // pred_check_branch
    %124 = sbr.rel (0) target = $region25
  $region24: #{vilt_vqa_forward.27} parent=0 // pred_region
    _
  $region25: #{vilt_vqa_forward.27} parent=0 // pred_fallthru
    _
  // Predicated region
  $region26: #{vilt_vqa_forward.27} parent=0 // pred_check
    _
  $region27: #{vilt_vqa_forward.27} parent=0 // pred_check_branch
    %126 = sbr.rel (0) target = $region29
  $region28: #{vilt_vqa_forward.27} parent=0 // pred_region
    _
  $region29: #{vilt_vqa_forward.27} parent=0 // pred_fallthru
    _

// kernel: vilt_vqa_forward.28
$region0: #{vilt_vqa_forward.28}
  #allocation0 [shape = 'u32[]', space=smem, size = 0x4, offset = 0x4, fixed_abs, tag = 'smem constant byte address 0x4 - core index']
  #allocation1 [shape = 'u32[144,128]{1,0:T(1,128)}', space=vmem, size = 0x12000, scoped, tag = 'internal scratch']
  %s0 = inlined_call_operand.vmem [shape: f32[2,32], index: 0, kind: input, shape index: {}]
  %s1 = inlined_call_operand.vmem [shape: bf16[32,128], index: 1, kind: input, shape index: {}]
  %s2 = inlined_call_operand.vmem [shape: f32[1,128], index: 2, kind: input, shape index: {}]
  %s3 = inlined_call_operand.vmem [shape: f32[2,128], index: 3, kind: output, shape index: {}]
  %s4 = sld [smem:[#allocation0]]
  $region22: #{vilt_vqa_forward.28} parent=0
    _
  %s6 = ssub.s32 1, %s4
  %s7 = scalar_select 0, %s6, %s4
  // Predicated region
  $region2: #{vilt_vqa_forward.28} parent=0 // pred_check
    _
  $region3: #{vilt_vqa_forward.28} parent=0 // pred_check_branch
    %9 = sbr.rel (0) target = $region5
  $region4: #{vilt_vqa_forward.28} parent=0 // pred_region
    _
  $region5: #{vilt_vqa_forward.28} parent=0 // pred_fallthru
    _
  // Predicated region
  $region6: #{vilt_vqa_forward.28} parent=0 // pred_check
    _
  $region7: #{vilt_vqa_forward.28} parent=0 // pred_check_branch
    %11 = sbr.rel (0) target = $region9
  $region8: #{vilt_vqa_forward.28} parent=0 // pred_region
    _
  $region9: #{vilt_vqa_forward.28} parent=0 // pred_fallthru
    _
  // Predicated region
  $region10: #{vilt_vqa_forward.28} parent=0 // pred_check
    _
  $region11: #{vilt_vqa_forward.28} parent=0 // pred_check_branch
    %13 = sbr.rel (0) target = $region13
  $region12: #{vilt_vqa_forward.28} parent=0 // pred_region
    _
  $region13: #{vilt_vqa_forward.28} parent=0 // pred_fallthru
    _
  %v15 = vld [vmem:[%s0] sm:$0x3]
  %v16 = vpack.c.bf16 %v15, %v15
  %v17 = vld [vmem:[%s1] sm:$0xf]
  %v18 = vld [vmem:[%s1 + $0x4] sm:$0xf]
  %v19 = vld [vmem:[%s1 + $0x8] sm:$0xf]
  %v20 = vld [vmem:[%s1 + $0xc] sm:$0xf]
  %v21 = vld [vmem:[%s2] sm:$0x1]
  %v23 = vlaneseq
  %v24 = vshrl.u32 %v23, 7
  %v25 = vsub.s32 0, %v24
  %v26 = vrot.slane %v21, %v25
  %v32 = vunpack.c.l.b16 %v17
  %v33 = vunpack.c.l.b16 %v18
  %v34 = vunpack.c.l.b16 %v19
  %v35 = vunpack.c.l.b16 %v20
  %v36 = vpack.c.b16 %v33, %v32
  %v37 = vpack.c.b16 %v35, %v34
  %vm40 = vcmask 261120
  %v42 = vsel %vm40, %v16, 0
  %44 = vmatprep.subr.bf16.mxu0 0
  %45 = vmatpush1.bf16.msra.mxu0 %v36
  %46 = vmatprep.subr.bf16.mxu0 0
  %47 = vmatpush1.bf16.msra.mxu0 %v37
  %48 = vmatprep.subr.bf16.mxu0 0
  %49 = vmatpush1.bf16.msra.mxu0 0
  %50 = vmatprep.subr.bf16.mxu0 0
  %51 = vmatpush1.bf16.msra.mxu0 0
  %52 = vmatprep.subr.bf16.mxu0 0
  %53 = vmatpush1.bf16.msra.mxu0 0
  %54 = vmatprep.subr.bf16.mxu0 0
  %55 = vmatpush1.bf16.msra.mxu0 0
  %56 = vmatprep.subr.bf16.mxu0 0
  %57 = vmatpush1.bf16.msra.mxu0 0
  %58 = vmatprep.subr.bf16.mxu0 0
  %59 = vmatpush1.bf16.msra.mxu0 0
  %60 = vmatprep.subr.bf16.mxu0 0
  %61 = vmatpush1.bf16.msra.mxu0 0
  %62 = vmatprep.subr.bf16.mxu0 0
  %63 = vmatpush1.bf16.msra.mxu0 0
  %64 = vmatprep.subr.bf16.mxu0 0
  %65 = vmatpush1.bf16.msra.mxu0 0
  %66 = vmatprep.subr.bf16.mxu0 0
  %67 = vmatpush1.bf16.msra.mxu0 0
  %68 = vmatprep.subr.bf16.mxu0 0
  %69 = vmatpush1.bf16.msra.mxu0 0
  %70 = vmatprep.subr.bf16.mxu0 0
  %71 = vmatpush1.bf16.msra.mxu0 0
  %72 = vmatprep.subr.bf16.mxu0 0
  %73 = vmatpush1.bf16.msra.mxu0 0
  %74 = vmatprep.subr.bf16.mxu0 0
  %75 = vmatpush1.bf16.msra.mxu0 0
  %76 = vmatprep.mubr.bf16.mxu0 0
  %77 = vmatmul.mubr.bf16.gmra.mrb[0].mxu0 %v42
  %v78 = vpop.f32.mrb[0].mxu0
  %v79 = vadd.f32 %v26, %v78
  %v80 = vpop.f32.mrb[0].mxu0
  %v81 = vpop.f32.mrb[0].mxu0
  %v82 = vpop.f32.mrb[0].mxu0
  %83 = vdwg.mxu0
  %84 = vst [vmem:[%s3] sm:$0x3] %v79
  // Predicated region
  $region14: #{vilt_vqa_forward.28} parent=0 // pred_check
    _
  $region15: #{vilt_vqa_forward.28} parent=0 // pred_check_branch
    %86 = sbr.rel (0) target = $region17
  $region16: #{vilt_vqa_forward.28} parent=0 // pred_region
    _
  $region17: #{vilt_vqa_forward.28} parent=0 // pred_fallthru
    _
  // Predicated region
  $region18: #{vilt_vqa_forward.28} parent=0 // pred_check
    _
  $region19: #{vilt_vqa_forward.28} parent=0 // pred_check_branch
    %88 = sbr.rel (0) target = $region21
  $region20: #{vilt_vqa_forward.28} parent=0 // pred_region
    _
  $region21: #{vilt_vqa_forward.28} parent=0 // pred_fallthru
    _

// kernel: vilt_vqa_forward.29
$region0: #{vilt_vqa_forward.29}
  #allocation0 [shape = 'u32[]', space=smem, size = 0x4, offset = 0x4, fixed_abs, tag = 'smem constant byte address 0x4 - core index']
  #allocation1 [shape = 'u32[144,128]{1,0:T(1,128)}', space=vmem, size = 0x12000, scoped, tag = 'internal scratch']
  %s0 = inlined_call_operand.vmem [shape: f32[2,64], index: 0, kind: input, shape index: {}]
  %s1 = inlined_call_operand.vmem [shape: f32[1,64], index: 1, kind: input, shape index: {}]
  %s2 = inlined_call_operand.vmem [shape: f32[1,64], index: 2, kind: input, shape index: {}]
  %s3 = inlined_call_operand.vmem [shape: bf16[64,128], index: 3, kind: input, shape index: {}]
  %s4 = inlined_call_operand.vmem [shape: f32[1,128], index: 4, kind: input, shape index: {}]
  %s5 = inlined_call_operand.hbm [shape: f32[2,128], index: 5, kind: output, shape index: {}]
  %s6 = sld [smem:[#allocation0]]
  $region30: #{vilt_vqa_forward.29} parent=0
    _
  %s8 = ssub.s32 1, %s6
  %s9 = scalar_select 0, %s8, %s6
  $region1: #{vilt_vqa_forward.29} parent=0
    #allocation2 [shape = 'u8[1024]{0}', space=vmem, size = 0x400, scoped, tag = 'output window, operand 0, single buffered']
    #allocation3 [shape = 's32[1]{0}', space=sflag, size = 0x4, scoped, tag = 'scoped memory for vilt_vqa_forward.29']
    %10 = vsyncpa [#allocation3], 0
    // Predicated region
    $region2: #{vilt_vqa_forward.29} parent=1 // pred_check
      _
    $region3: #{vilt_vqa_forward.29} parent=1 // pred_check_branch
      %12 = sbr.rel (0) target = $region5
    $region4: #{vilt_vqa_forward.29} parent=1 // pred_region
      _
    $region5: #{vilt_vqa_forward.29} parent=1 // pred_fallthru
      _
    // Predicated region
    $region6: #{vilt_vqa_forward.29} parent=1 // pred_check
      _
    $region7: #{vilt_vqa_forward.29} parent=1 // pred_check_branch
      %14 = sbr.rel (0) target = $region9
    $region8: #{vilt_vqa_forward.29} parent=1 // pred_region
      _
    $region9: #{vilt_vqa_forward.29} parent=1 // pred_fallthru
      _
    // Predicated region
    $region10: #{vilt_vqa_forward.29} parent=1 // pred_check
      _
    $region11: #{vilt_vqa_forward.29} parent=1 // pred_check_branch
      %16 = sbr.rel (0) target = $region13
    $region12: #{vilt_vqa_forward.29} parent=1 // pred_region
      _
    $region13: #{vilt_vqa_forward.29} parent=1 // pred_fallthru
      _
    // Predicated region
    $region14: #{vilt_vqa_forward.29} parent=1 // pred_check
      _
    $region15: #{vilt_vqa_forward.29} parent=1 // pred_check_branch
      %18 = sbr.rel (0) target = $region17
    $region16: #{vilt_vqa_forward.29} parent=1 // pred_region
      _
    $region17: #{vilt_vqa_forward.29} parent=1 // pred_fallthru
      _
    // Predicated region
    $region18: #{vilt_vqa_forward.29} parent=1 // pred_check
      _
    $region19: #{vilt_vqa_forward.29} parent=1 // pred_check_branch
      %20 = sbr.rel (0) target = $region21
    $region20: #{vilt_vqa_forward.29} parent=1 // pred_region
      _
    $region21: #{vilt_vqa_forward.29} parent=1 // pred_fallthru
      _
    %v22 = vld [vmem:[%s0] sm:$0x3]
    %vm23 = vcmask 517120
    %v24 = vsel %vm23, %v22, 0.0
    %25 = vadd.xlane.f32.xlu0 %v24
    %v26 = vpop.xlane.xlu0 %25
    %v27 = vrcp.pop 64.0
    %v28 = vmul.f32 %v26, %v27
    %v29 = vsub.f32 %v22, %v28
    %v30 = vmul.f32 %v29, %v29
    %v31 = vsel %vm23, %v30, 0.0
    %32 = vadd.xlane.f32.xlu0 %v31
    %v33 = vpop.xlane.xlu0 %32
    %v34 = vmul.f32 %v33, %v27
    %v35 = vadd.f32 %v34, 1e-05
    %v36 = vrsqrt.pop %v35
    %v37 = vmul.f32 %v29, %v36
    %v38 = vld [vmem:[%s1] sm:$0x1]
    %v40 = vlaneseq
    %v41 = vshrl.u32 %v40, 7
    %v42 = vsub.s32 0, %v41
    %v43 = vrot.slane %v38, %v42
    %v45 = vmul.f32 %v37, %v43
    %v46 = vld [vmem:[%s2] sm:$0x1]
    %v48 = vlaneseq
    %v49 = vshrl.u32 %v48, 7
    %v50 = vsub.s32 0, %v49
    %v51 = vrot.slane %v46, %v50
    %v53 = vadd.f32 %v45, %v51
    %v54 = vmul.f32 %v53, 0.5
    %v55 = vmul.f32 %v53, 0.044715
    %v56 = vmul.f32 %v55, %v53
    %v57 = vmul.f32 %v56, %v53
    %v58 = vadd.f32 %v53, %v57
    %v59 = vmul.f32 %v58, 0.7978846
    %v60 = vtanh.pop %v59
    %v61 = vadd.f32 %v60, 1.0
    %v62 = vmul.f32 %v54, %v61
    %v63 = vpack.c.bf16 %v62, %v62
    %v64 = vld [vmem:[%s3] sm:$0xf]
    %v65 = vld [vmem:[%s3 + $0x4] sm:$0xf]
    %v66 = vld [vmem:[%s3 + $0x8] sm:$0xf]
    %v67 = vld [vmem:[%s3 + $0xc] sm:$0xf]
    %v68 = vld [vmem:[%s3 + $0x10] sm:$0xf]
    %v69 = vld [vmem:[%s3 + $0x14] sm:$0xf]
    %v70 = vld [vmem:[%s3 + $0x18] sm:$0xf]
    %v71 = vld [vmem:[%s3 + $0x1c] sm:$0xf]
    %v72 = vld [vmem:[%s4] sm:$0x1]
    %v74 = vlaneseq
    %v75 = vshrl.u32 %v74, 7
    %v76 = vsub.s32 0, %v75
    %v77 = vrot.slane %v72, %v76
    %v87 = vunpack.c.l.b16 %v64
    %v88 = vunpack.c.l.b16 %v65
    %v89 = vunpack.c.l.b16 %v66
    %v90 = vunpack.c.l.b16 %v67
    %v91 = vunpack.c.l.b16 %v68
    %v92 = vunpack.c.l.b16 %v69
    %v93 = vunpack.c.l.b16 %v70
    %v94 = vunpack.c.l.b16 %v71
    %v95 = vpack.c.b16 %v88, %v87
    %v96 = vpack.c.b16 %v90, %v89
    %v97 = vpack.c.b16 %v92, %v91
    %v98 = vpack.c.b16 %v94, %v93
    %vm103 = vcmask 523264
    %v105 = vsel %vm103, %v63, 0
    %107 = vmatprep.subr.bf16.mxu0 0
    %108 = vmatpush1.bf16.msra.mxu0 %v95
    %109 = vmatprep.subr.bf16.mxu0 0
    %110 = vmatpush1.bf16.msra.mxu0 %v96
    %111 = vmatprep.subr.bf16.mxu0 0
    %112 = vmatpush1.bf16.msra.mxu0 %v97
    %113 = vmatprep.subr.bf16.mxu0 0
    %114 = vmatpush1.bf16.msra.mxu0 %v98
    %115 = vmatprep.subr.bf16.mxu0 0
    %116 = vmatpush1.bf16.msra.mxu0 0
    %117 = vmatprep.subr.bf16.mxu0 0
    %118 = vmatpush1.bf16.msra.mxu0 0
    %119 = vmatprep.subr.bf16.mxu0 0
    %120 = vmatpush1.bf16.msra.mxu0 0
    %121 = vmatprep.subr.bf16.mxu0 0
    %122 = vmatpush1.bf16.msra.mxu0 0
    %123 = vmatprep.subr.bf16.mxu0 0
    %124 = vmatpush1.bf16.msra.mxu0 0
    %125 = vmatprep.subr.bf16.mxu0 0
    %126 = vmatpush1.bf16.msra.mxu0 0
    %127 = vmatprep.subr.bf16.mxu0 0
    %128 = vmatpush1.bf16.msra.mxu0 0
    %129 = vmatprep.subr.bf16.mxu0 0
    %130 = vmatpush1.bf16.msra.mxu0 0
    %131 = vmatprep.subr.bf16.mxu0 0
    %132 = vmatpush1.bf16.msra.mxu0 0
    %133 = vmatprep.subr.bf16.mxu0 0
    %134 = vmatpush1.bf16.msra.mxu0 0
    %135 = vmatprep.subr.bf16.mxu0 0
    %136 = vmatpush1.bf16.msra.mxu0 0
    %137 = vmatprep.subr.bf16.mxu0 0
    %138 = vmatpush1.bf16.msra.mxu0 0
    %139 = vmatprep.mubr.bf16.mxu0 0
    %140 = vmatmul.mubr.bf16.gmra.mrb[0].mxu0 %v105
    %v141 = vpop.f32.mrb[0].mxu0
    %v142 = vadd.f32 %v77, %v141
    %v143 = vpop.f32.mrb[0].mxu0
    %v144 = vpop.f32.mrb[0].mxu0
    %v145 = vpop.f32.mrb[0].mxu0
    %146 = vdwg.mxu0
    %147 = vst [vmem:[#allocation2] sm:$0x3] %v142
    // Predicated region
    $region22: #{vilt_vqa_forward.29} parent=1 // pred_check
      _
    $region23: #{vilt_vqa_forward.29} parent=1 // pred_check_branch
      %149 = sbr.rel (0) target = $region25
    $region24: #{vilt_vqa_forward.29} parent=1 // pred_region
      %s151 = ssub.s32 32, 32
      %152 = vsyncadd [#allocation3], %s151
      %s154 = sshll.u32 [#allocation2], 4
      %s155 = int_to_ptr.vmem [resolvable:$true] %s154
      %157 = dma.vmem_to_hbm [thread:$0]  %s155, 32, %s5, [#allocation3]
    $region25: #{vilt_vqa_forward.29} parent=1 // pred_fallthru
      _
    // Predicated region
    $region26: #{vilt_vqa_forward.29} parent=1 // pred_check
      _
    $region27: #{vilt_vqa_forward.29} parent=1 // pred_check_branch
      %159 = sbr.rel (0) target = $region29
    $region28: #{vilt_vqa_forward.29} parent=1 // pred_region
      %160 = dma.done [#allocation3], 32
    $region29: #{vilt_vqa_forward.29} parent=1 // pred_fallthru
      _
    %161 = vsyncpa [#allocation3], 1

</llo_original>
